<compile_context>
chip_gen: v7x
topology: tpu7x:2x2x1
jax: 0.10.0
libtpu: 0.0.40
codegen_flags: <defaults>
</compile_context>

<pallas_src>
import functools

import jax
import jax.numpy as jnp
from jax.experimental import pallas as pl
from jax.experimental.pallas import tpu as pltpu


def critic_mlp_kernel(x_ref, w1_ref, b1_ref, w2_ref, b2_ref, w3_ref, b3_ref,
                      out_ref, *, chunk):
    # x_ref:  (state_dim, block_b)  batch on lanes, dtype = transfer/matmul dtype
    # w1_ref: (64, state_dim) f32   (PyTorch [out, in] layout)
    # b1_ref: (64, 1) f32
    # w2_ref: (32, 64)              matmul dtype (bf16 or f32)
    # b2_ref: (32, 1) f32
    # w3_ref: (32, 1) f32           last layer's weight as a column
    # b3_ref: (1, 1) f32
    # out_ref:(1, block_b) f32      lane-dense row of values
    state_dim = w1_ref.shape[1]
    block_b = out_ref.shape[1]
    n_chunks = block_b // chunk

    # Weights are tiny and VMEM-resident; load once per grid step.
    w1 = w1_ref[...]
    b1 = b1_ref[...]
    w2 = w2_ref[...]
    b2 = b2_ref[...]
    w3 = w3_ref[...]
    b3 = b3_ref[...]

    # Statically-unrolled loop over lane chunks: DMA tile (block_b) stays large,
    # compute working set (h1/h2) stays near the vreg file.
    for c in range(n_chunks):
        s = c * chunk
        xt = x_ref[:, pl.ds(s, chunk)].astype(jnp.float32)     # (state_dim, chunk)

        # ---- Layer 1 on the VPU: h1 = relu(W1 @ x + b1), K = state_dim is tiny ----
        acc = w1[:, 0:1] * xt[0:1, :]                           # (64, chunk)
        for d in range(1, state_dim):
            acc = acc + w1[:, d:d + 1] * xt[d:d + 1, :]
        h1 = jnp.maximum(acc + b1, 0.0)                         # (64, chunk) f32

        # ---- Layer 2 on the MXU (operands in matmul dtype, f32 accumulation) ----
        h2 = jnp.dot(w2, h1.astype(w2.dtype),
                     preferred_element_type=jnp.float32)        # (32, chunk)
        h2 = jnp.maximum(h2 + b2, 0.0)

        # ---- Layer 3 (out_features == 1): VPU multiply + sublane reduction ----
        v = jnp.sum(h2 * w3, axis=0, keepdims=True) + b3        # (1, chunk)
        out_ref[:, pl.ds(s, chunk)] = v.astype(out_ref.dtype)


def critic_forward(x, params, *, block_b=4096, chunk=512,
                   matmul_dtype=jnp.bfloat16):
    """x: [B, state_dim] float32. Returns [B, 1] float32.

    matmul_dtype: dtype used for the x HBM transfer and the layer-2 MXU
    operands (accumulation is always f32). Use jnp.float32 for exact match.
    """
    w1, b1, w2, b2, w3, b3 = params
    B, state_dim = x.shape

    assert block_b % 128 == 0, block_b
    chunk = min(chunk, block_b)
    assert chunk % 128 == 0 and block_b % chunk == 0, (block_b, chunk)

    nb = pl.cdiv(B, block_b)
    b_pad = nb * block_b

    # One fused XLA copy: transpose so batch is the (lane) minor dim, cast for
    # the HBM transfer, and pad the ragged tail (no separate full-pass jnp.pad).
    x_t = jnp.pad(x.T.astype(matmul_dtype), ((0, 0), (0, b_pad - B)))
    w2_c = w2.astype(matmul_dtype)

    const = lambda a: pl.BlockSpec(a.shape, lambda i: (0, 0))   # VMEM-resident

    grid_spec = pltpu.PrefetchScalarGridSpec(
        num_scalar_prefetch=0,
        grid=(nb,),
        in_specs=[
            pl.BlockSpec((state_dim, block_b), lambda i: (0, i)),  # lane-dense x tile
            const(w1), const(b1), const(w2_c), const(b2), const(w3), const(b3),
        ],
        out_specs=pl.BlockSpec((1, block_b), lambda i: (0, i)),    # lane-dense out
    )

    # Explicit VMEM budget: 2x double-buffered x/out tiles + weights + temporaries.
    itemsize = jnp.dtype(matmul_dtype).itemsize
    sub = 32 // itemsize                                   # sublane tile for dtype
    pad_to = lambda n, m: ((n + m - 1) // m) * m
    x_tile = pad_to(state_dim, sub) * block_b * itemsize
    out_tile = 8 * block_b * 4
    temps = 176 * chunk * 4 * 2
    vmem_limit = min(max(2 * (2 * (x_tile + out_tile) + temps) + (1 << 20), 8 << 20),
                     32 << 20)

    out = pl.pallas_call(
        functools.partial(critic_mlp_kernel, chunk=chunk),
        out_shape=jax.ShapeDtypeStruct((1, b_pad), jnp.float32),
        grid_spec=grid_spec,
        compiler_params=pltpu.CompilerParams(
            dimension_semantics=("parallel",),
            vmem_limit_bytes=vmem_limit,
        ),
    )(x_t, w1, b1, w2_c, b2, w3, b3)

    return out[0, :B].reshape(B, 1)


def init_params(state_dim, key):
    """Deterministic init mimicking nn.Linear defaults (uniform +-1/sqrt(fan_in)).

    Weights in PyTorch [out_features, in_features] layout; biases as columns;
    the final layer's weight stored as a (32, 1) column for the in-kernel reduce.
    """
    dims = [(state_dim, 64), (64, 32), (32, 1)]
    params = []
    for fan_in, fan_out in dims:
        kw, kb, key = jax.random.split(key, 3)
        bound = 1.0 / jnp.sqrt(fan_in)
        w = jax.random.uniform(kw, (fan_out, fan_in), jnp.float32, -bound, bound)
        b = jax.random.uniform(kb, (fan_out, 1), jnp.float32, -bound, bound)
        params.extend([w, b])
    w1, b1, w2, b2, w3, b3 = params
    w3 = w3.T                    # (1, 32) -> (32, 1) column
    b3 = b3.reshape(1, 1)
    return (w1, b1, w2, b2, w3, b3)


def critic_ref(x, params):
    """Plain-JAX reference for correctness check (true module semantics)."""
    w1, b1, w2, b2, w3, b3 = params
    h = jnp.maximum(x @ w1.T + b1[:, 0], 0.0)
    h = jnp.maximum(h @ w2.T + b2[:, 0], 0.0)
    return h @ w3 + b3[0]


if __name__ == "__main__":
    key = jax.random.PRNGKey(0)
    kx, kp, kx2 = jax.random.split(key, 3)

    state_dim = 4  # CartPole-like state
    params = init_params(state_dim, kp)

    # Case 1: small batch, exact f32 path (tight tolerance).
    x_small = jax.random.normal(kx, (8, state_dim), jnp.float32)
    out = jax.block_until_ready(
        critic_forward(x_small, params, matmul_dtype=jnp.float32))
    ref = critic_ref(x_small, params)
    assert out.shape == (8, 1), out.shape
    assert jnp.allclose(out, ref, atol=1e-3, rtol=1e-3), (out, ref)

    # Case 2: multi-tile grid + ragged tail, default bf16 transfer/MXU path.
    x_big = jax.random.normal(kx2, (700, state_dim), jnp.float32)
    out2 = jax.block_until_ready(
        critic_forward(x_big, params, block_b=256, chunk=128))
    ref2 = critic_ref(x_big, params)
    assert out2.shape == (700, 1), out2.shape
    assert jnp.allclose(out2, ref2, atol=5e-2, rtol=5e-2), (
        jnp.max(jnp.abs(out2 - ref2)))

    print("KERNEL_OK")
</pallas_src>

<mosaic_0001>
module attributes {stable_mosaic.version = 11 : i64} {
  func.func @critic_mlp_kernel(%arg0: i32, %arg1: memref<4x4096xf32, #tpu.memory_space<vmem>>, %arg2: memref<64x4xf32, #tpu.memory_space<vmem>>, %arg3: memref<64x1xf32, #tpu.memory_space<vmem>>, %arg4: memref<32x64xf32, #tpu.memory_space<vmem>>, %arg5: memref<32x1xf32, #tpu.memory_space<vmem>>, %arg6: memref<32x1xf32, #tpu.memory_space<vmem>>, %arg7: memref<1x1xf32, #tpu.memory_space<vmem>>, %arg8: memref<1x4096xf32, #tpu.memory_space<vmem>>) attributes {dimension_semantics = [#tpu.dimension_semantics<parallel>], iteration_bounds = array<i64: 1>, scalar_prefetch = 0 : i64, scratch_operands = 0 : i64, tpu.core_type = #tpu.core_type<tc>, window_params = [{transform_indices = @transform_0, window_bounds = array<i64: 4, 4096>}, {pipeline_mode = #tpu.pipeline_mode<synchronous>, transform_indices = @transform_1, window_bounds = array<i64: 64, 4>}, {pipeline_mode = #tpu.pipeline_mode<synchronous>, transform_indices = @transform_2, window_bounds = array<i64: 64, 1>}, {pipeline_mode = #tpu.pipeline_mode<synchronous>, transform_indices = @transform_3, window_bounds = array<i64: 32, 64>}, {pipeline_mode = #tpu.pipeline_mode<synchronous>, transform_indices = @transform_4, window_bounds = array<i64: 32, 1>}, {pipeline_mode = #tpu.pipeline_mode<synchronous>, transform_indices = @transform_5, window_bounds = array<i64: 32, 1>}, {pipeline_mode = #tpu.pipeline_mode<synchronous>, transform_indices = @transform_6, window_bounds = array<i64: 1, 1>}, {transform_indices = @transform_7, window_bounds = array<i64: 1, 4096>}]} {
    %c0 = arith.constant 0 : index
    %c0_0 = arith.constant 0 : index
    %0 = vector.load %arg2[%c0, %c0_0] : memref<64x4xf32, #tpu.memory_space<vmem>>, vector<64x4xf32>
    %c0_1 = arith.constant 0 : index
    %c0_2 = arith.constant 0 : index
    %1 = vector.load %arg3[%c0_1, %c0_2] : memref<64x1xf32, #tpu.memory_space<vmem>>, vector<64x1xf32>
    %c0_3 = arith.constant 0 : index
    %c0_4 = arith.constant 0 : index
    %2 = vector.load %arg4[%c0_3, %c0_4] : memref<32x64xf32, #tpu.memory_space<vmem>>, vector<32x64xf32>
    %c0_5 = arith.constant 0 : index
    %c0_6 = arith.constant 0 : index
    %3 = vector.load %arg5[%c0_5, %c0_6] : memref<32x1xf32, #tpu.memory_space<vmem>>, vector<32x1xf32>
    %c0_7 = arith.constant 0 : index
    %c0_8 = arith.constant 0 : index
    %4 = vector.load %arg6[%c0_7, %c0_8] : memref<32x1xf32, #tpu.memory_space<vmem>>, vector<32x1xf32>
    %c0_9 = arith.constant 0 : index
    %c0_10 = arith.constant 0 : index
    %5 = vector.load %arg7[%c0_9, %c0_10] : memref<1x1xf32, #tpu.memory_space<vmem>>, vector<1x1xf32>
    %c0_11 = arith.constant 0 : index
    %c0_12 = arith.constant 0 : index
    %6 = vector.load %arg1[%c0_11, %c0_12] : memref<4x4096xf32, #tpu.memory_space<vmem>>, vector<4x512xf32>
    %7 = vector.extract_strided_slice %0 {offsets = [0, 0], sizes = [64, 1], strides = [1, 1]} : vector<64x4xf32> to vector<64x1xf32>
    %8 = vector.extract_strided_slice %6 {offsets = [0, 0], sizes = [1, 512], strides = [1, 1]} : vector<4x512xf32> to vector<1x512xf32>
    %9 = vector.broadcast %7 : vector<64x1xf32> to vector<64x512xf32>
    %10 = vector.broadcast %8 : vector<1x512xf32> to vector<64x512xf32>
    %11 = arith.mulf %9, %10 : vector<64x512xf32>
    %12 = vector.extract_strided_slice %0 {offsets = [0, 1], sizes = [64, 1], strides = [1, 1]} : vector<64x4xf32> to vector<64x1xf32>
    %13 = vector.extract_strided_slice %6 {offsets = [1, 0], sizes = [1, 512], strides = [1, 1]} : vector<4x512xf32> to vector<1x512xf32>
    %14 = vector.broadcast %12 : vector<64x1xf32> to vector<64x512xf32>
    %15 = vector.broadcast %13 : vector<1x512xf32> to vector<64x512xf32>
    %16 = arith.mulf %14, %15 : vector<64x512xf32>
    %17 = arith.addf %11, %16 : vector<64x512xf32>
    %18 = vector.extract_strided_slice %0 {offsets = [0, 2], sizes = [64, 1], strides = [1, 1]} : vector<64x4xf32> to vector<64x1xf32>
    %19 = vector.extract_strided_slice %6 {offsets = [2, 0], sizes = [1, 512], strides = [1, 1]} : vector<4x512xf32> to vector<1x512xf32>
    %20 = vector.broadcast %18 : vector<64x1xf32> to vector<64x512xf32>
    %21 = vector.broadcast %19 : vector<1x512xf32> to vector<64x512xf32>
    %22 = arith.mulf %20, %21 : vector<64x512xf32>
    %23 = arith.addf %17, %22 : vector<64x512xf32>
    %24 = vector.extract_strided_slice %0 {offsets = [0, 3], sizes = [64, 1], strides = [1, 1]} : vector<64x4xf32> to vector<64x1xf32>
    %25 = vector.extract_strided_slice %6 {offsets = [3, 0], sizes = [1, 512], strides = [1, 1]} : vector<4x512xf32> to vector<1x512xf32>
    %26 = vector.broadcast %24 : vector<64x1xf32> to vector<64x512xf32>
    %27 = vector.broadcast %25 : vector<1x512xf32> to vector<64x512xf32>
    %28 = arith.mulf %26, %27 : vector<64x512xf32>
    %29 = arith.addf %23, %28 : vector<64x512xf32>
    %30 = vector.broadcast %1 : vector<64x1xf32> to vector<64x512xf32>
    %31 = arith.addf %29, %30 : vector<64x512xf32>
    %cst = arith.constant 0.000000e+00 : f32
    %32 = vector.broadcast %cst : f32 to vector<64x512xf32>
    %33 = arith.maximumf %31, %32 : vector<64x512xf32>
    %cst_13 = arith.constant dense<0.000000e+00> : vector<32x512xf32>
    %34 = tpu.matmul %2, %33, %cst_13 {dimension_numbers = #tpu.dot_dimension_numbers<[1], [0], [0], [1], [0, 0, 1, 1], [], []>} : vector<32x64xf32>, vector<64x512xf32>, vector<32x512xf32> -> vector<32x512xf32>
    %35 = vector.broadcast %3 : vector<32x1xf32> to vector<32x512xf32>
    %36 = arith.addf %34, %35 : vector<32x512xf32>
    %cst_14 = arith.constant 0.000000e+00 : f32
    %37 = vector.broadcast %cst_14 : f32 to vector<32x512xf32>
    %38 = arith.maximumf %36, %37 : vector<32x512xf32>
    %39 = vector.broadcast %4 : vector<32x1xf32> to vector<32x512xf32>
    %40 = arith.mulf %38, %39 : vector<32x512xf32>
    %cst_15 = arith.constant dense<0.000000e+00> : vector<512xf32>
    %41 = vector.multi_reduction <add>, %40, %cst_15 [0] : vector<32x512xf32> to vector<512xf32>
    %42 = vector.shape_cast %41 : vector<512xf32> to vector<1x512xf32>
    %43 = vector.broadcast %5 : vector<1x1xf32> to vector<1x512xf32>
    %44 = arith.addf %42, %43 : vector<1x512xf32>
    %c0_16 = arith.constant 0 : index
    %c0_17 = arith.constant 0 : index
    %45 = vector.load %arg8[%c0_16, %c0_17] : memref<1x4096xf32, #tpu.memory_space<vmem>>, vector<1x512xf32>
    tpu.vector_store %arg8[%c0_16, %c0_17], %44 {strides = array<i32>} : memref<1x4096xf32, #tpu.memory_space<vmem>>, vector<1x512xf32>,
    %c0_18 = arith.constant 0 : index
    %c512 = arith.constant 512 : index
    %46 = vector.load %arg1[%c0_18, %c512] : memref<4x4096xf32, #tpu.memory_space<vmem>>, vector<4x512xf32>
    %47 = vector.extract_strided_slice %0 {offsets = [0, 0], sizes = [64, 1], strides = [1, 1]} : vector<64x4xf32> to vector<64x1xf32>
    %48 = vector.extract_strided_slice %46 {offsets = [0, 0], sizes = [1, 512], strides = [1, 1]} : vector<4x512xf32> to vector<1x512xf32>
    %49 = vector.broadcast %47 : vector<64x1xf32> to vector<64x512xf32>
    %50 = vector.broadcast %48 : vector<1x512xf32> to vector<64x512xf32>
    %51 = arith.mulf %49, %50 : vector<64x512xf32>
    %52 = vector.extract_strided_slice %0 {offsets = [0, 1], sizes = [64, 1], strides = [1, 1]} : vector<64x4xf32> to vector<64x1xf32>
    %53 = vector.extract_strided_slice %46 {offsets = [1, 0], sizes = [1, 512], strides = [1, 1]} : vector<4x512xf32> to vector<1x512xf32>
    %54 = vector.broadcast %52 : vector<64x1xf32> to vector<64x512xf32>
    %55 = vector.broadcast %53 : vector<1x512xf32> to vector<64x512xf32>
    %56 = arith.mulf %54, %55 : vector<64x512xf32>
    %57 = arith.addf %51, %56 : vector<64x512xf32>
    %58 = vector.extract_strided_slice %0 {offsets = [0, 2], sizes = [64, 1], strides = [1, 1]} : vector<64x4xf32> to vector<64x1xf32>
    %59 = vector.extract_strided_slice %46 {offsets = [2, 0], sizes = [1, 512], strides = [1, 1]} : vector<4x512xf32> to vector<1x512xf32>
    %60 = vector.broadcast %58 : vector<64x1xf32> to vector<64x512xf32>
    %61 = vector.broadcast %59 : vector<1x512xf32> to vector<64x512xf32>
    %62 = arith.mulf %60, %61 : vector<64x512xf32>
    %63 = arith.addf %57, %62 : vector<64x512xf32>
    %64 = vector.extract_strided_slice %0 {offsets = [0, 3], sizes = [64, 1], strides = [1, 1]} : vector<64x4xf32> to vector<64x1xf32>
    %65 = vector.extract_strided_slice %46 {offsets = [3, 0], sizes = [1, 512], strides = [1, 1]} : vector<4x512xf32> to vector<1x512xf32>
    %66 = vector.broadcast %64 : vector<64x1xf32> to vector<64x512xf32>
    %67 = vector.broadcast %65 : vector<1x512xf32> to vector<64x512xf32>
    %68 = arith.mulf %66, %67 : vector<64x512xf32>
    %69 = arith.addf %63, %68 : vector<64x512xf32>
    %70 = vector.broadcast %1 : vector<64x1xf32> to vector<64x512xf32>
    %71 = arith.addf %69, %70 : vector<64x512xf32>
    %cst_19 = arith.constant 0.000000e+00 : f32
    %72 = vector.broadcast %cst_19 : f32 to vector<64x512xf32>
    %73 = arith.maximumf %71, %72 : vector<64x512xf32>
    %cst_20 = arith.constant dense<0.000000e+00> : vector<32x512xf32>
    %74 = tpu.matmul %2, %73, %cst_20 {dimension_numbers = #tpu.dot_dimension_numbers<[1], [0], [0], [1], [0, 0, 1, 1], [], []>} : vector<32x64xf32>, vector<64x512xf32>, vector<32x512xf32> -> vector<32x512xf32>
    %75 = vector.broadcast %3 : vector<32x1xf32> to vector<32x512xf32>
    %76 = arith.addf %74, %75 : vector<32x512xf32>
    %cst_21 = arith.constant 0.000000e+00 : f32
    %77 = vector.broadcast %cst_21 : f32 to vector<32x512xf32>
    %78 = arith.maximumf %76, %77 : vector<32x512xf32>
    %79 = vector.broadcast %4 : vector<32x1xf32> to vector<32x512xf32>
    %80 = arith.mulf %78, %79 : vector<32x512xf32>
    %cst_22 = arith.constant dense<0.000000e+00> : vector<512xf32>
    %81 = vector.multi_reduction <add>, %80, %cst_22 [0] : vector<32x512xf32> to vector<512xf32>
    %82 = vector.shape_cast %81 : vector<512xf32> to vector<1x512xf32>
    %83 = vector.broadcast %5 : vector<1x1xf32> to vector<1x512xf32>
    %84 = arith.addf %82, %83 : vector<1x512xf32>
    %c0_23 = arith.constant 0 : index
    %c512_24 = arith.constant 512 : index
    %85 = vector.load %arg8[%c0_23, %c512_24] : memref<1x4096xf32, #tpu.memory_space<vmem>>, vector<1x512xf32>
    tpu.vector_store %arg8[%c0_23, %c512_24], %84 {strides = array<i32>} : memref<1x4096xf32, #tpu.memory_space<vmem>>, vector<1x512xf32>,
    %c0_25 = arith.constant 0 : index
    %c1024 = arith.constant 1024 : index
    %86 = vector.load %arg1[%c0_25, %c1024] : memref<4x4096xf32, #tpu.memory_space<vmem>>, vector<4x512xf32>
    %87 = vector.extract_strided_slice %0 {offsets = [0, 0], sizes = [64, 1], strides = [1, 1]} : vector<64x4xf32> to vector<64x1xf32>
    %88 = vector.extract_strided_slice %86 {offsets = [0, 0], sizes = [1, 512], strides = [1, 1]} : vector<4x512xf32> to vector<1x512xf32>
    %89 = vector.broadcast %87 : vector<64x1xf32> to vector<64x512xf32>
    %90 = vector.broadcast %88 : vector<1x512xf32> to vector<64x512xf32>
    %91 = arith.mulf %89, %90 : vector<64x512xf32>
    %92 = vector.extract_strided_slice %0 {offsets = [0, 1], sizes = [64, 1], strides = [1, 1]} : vector<64x4xf32> to vector<64x1xf32>
    %93 = vector.extract_strided_slice %86 {offsets = [1, 0], sizes = [1, 512], strides = [1, 1]} : vector<4x512xf32> to vector<1x512xf32>
    %94 = vector.broadcast %92 : vector<64x1xf32> to vector<64x512xf32>
    %95 = vector.broadcast %93 : vector<1x512xf32> to vector<64x512xf32>
    %96 = arith.mulf %94, %95 : vector<64x512xf32>
    %97 = arith.addf %91, %96 : vector<64x512xf32>
    %98 = vector.extract_strided_slice %0 {offsets = [0, 2], sizes = [64, 1], strides = [1, 1]} : vector<64x4xf32> to vector<64x1xf32>
    %99 = vector.extract_strided_slice %86 {offsets = [2, 0], sizes = [1, 512], strides = [1, 1]} : vector<4x512xf32> to vector<1x512xf32>
    %100 = vector.broadcast %98 : vector<64x1xf32> to vector<64x512xf32>
    %101 = vector.broadcast %99 : vector<1x512xf32> to vector<64x512xf32>
    %102 = arith.mulf %100, %101 : vector<64x512xf32>
    %103 = arith.addf %97, %102 : vector<64x512xf32>
    %104 = vector.extract_strided_slice %0 {offsets = [0, 3], sizes = [64, 1], strides = [1, 1]} : vector<64x4xf32> to vector<64x1xf32>
    %105 = vector.extract_strided_slice %86 {offsets = [3, 0], sizes = [1, 512], strides = [1, 1]} : vector<4x512xf32> to vector<1x512xf32>
    %106 = vector.broadcast %104 : vector<64x1xf32> to vector<64x512xf32>
    %107 = vector.broadcast %105 : vector<1x512xf32> to vector<64x512xf32>
    %108 = arith.mulf %106, %107 : vector<64x512xf32>
    %109 = arith.addf %103, %108 : vector<64x512xf32>
    %110 = vector.broadcast %1 : vector<64x1xf32> to vector<64x512xf32>
    %111 = arith.addf %109, %110 : vector<64x512xf32>
    %cst_26 = arith.constant 0.000000e+00 : f32
    %112 = vector.broadcast %cst_26 : f32 to vector<64x512xf32>
    %113 = arith.maximumf %111, %112 : vector<64x512xf32>
    %cst_27 = arith.constant dense<0.000000e+00> : vector<32x512xf32>
    %114 = tpu.matmul %2, %113, %cst_27 {dimension_numbers = #tpu.dot_dimension_numbers<[1], [0], [0], [1], [0, 0, 1, 1], [], []>} : vector<32x64xf32>, vector<64x512xf32>, vector<32x512xf32> -> vector<32x512xf32>
    %115 = vector.broadcast %3 : vector<32x1xf32> to vector<32x512xf32>
    %116 = arith.addf %114, %115 : vector<32x512xf32>
    %cst_28 = arith.constant 0.000000e+00 : f32
    %117 = vector.broadcast %cst_28 : f32 to vector<32x512xf32>
    %118 = arith.maximumf %116, %117 : vector<32x512xf32>
    %119 = vector.broadcast %4 : vector<32x1xf32> to vector<32x512xf32>
    %120 = arith.mulf %118, %119 : vector<32x512xf32>
    %cst_29 = arith.constant dense<0.000000e+00> : vector<512xf32>
    %121 = vector.multi_reduction <add>, %120, %cst_29 [0] : vector<32x512xf32> to vector<512xf32>
    %122 = vector.shape_cast %121 : vector<512xf32> to vector<1x512xf32>
    %123 = vector.broadcast %5 : vector<1x1xf32> to vector<1x512xf32>
    %124 = arith.addf %122, %123 : vector<1x512xf32>
    %c0_30 = arith.constant 0 : index
    %c1024_31 = arith.constant 1024 : index
    %125 = vector.load %arg8[%c0_30, %c1024_31] : memref<1x4096xf32, #tpu.memory_space<vmem>>, vector<1x512xf32>
    tpu.vector_store %arg8[%c0_30, %c1024_31], %124 {strides = array<i32>} : memref<1x4096xf32, #tpu.memory_space<vmem>>, vector<1x512xf32>,
    %c0_32 = arith.constant 0 : index
    %c1536 = arith.constant 1536 : index
    %126 = vector.load %arg1[%c0_32, %c1536] : memref<4x4096xf32, #tpu.memory_space<vmem>>, vector<4x512xf32>
    %127 = vector.extract_strided_slice %0 {offsets = [0, 0], sizes = [64, 1], strides = [1, 1]} : vector<64x4xf32> to vector<64x1xf32>
    %128 = vector.extract_strided_slice %126 {offsets = [0, 0], sizes = [1, 512], strides = [1, 1]} : vector<4x512xf32> to vector<1x512xf32>
    %129 = vector.broadcast %127 : vector<64x1xf32> to vector<64x512xf32>
    %130 = vector.broadcast %128 : vector<1x512xf32> to vector<64x512xf32>
    %131 = arith.mulf %129, %130 : vector<64x512xf32>
    %132 = vector.extract_strided_slice %0 {offsets = [0, 1], sizes = [64, 1], strides = [1, 1]} : vector<64x4xf32> to vector<64x1xf32>
    %133 = vector.extract_strided_slice %126 {offsets = [1, 0], sizes = [1, 512], strides = [1, 1]} : vector<4x512xf32> to vector<1x512xf32>
    %134 = vector.broadcast %132 : vector<64x1xf32> to vector<64x512xf32>
    %135 = vector.broadcast %133 : vector<1x512xf32> to vector<64x512xf32>
    %136 = arith.mulf %134, %135 : vector<64x512xf32>
    %137 = arith.addf %131, %136 : vector<64x512xf32>
    %138 = vector.extract_strided_slice %0 {offsets = [0, 2], sizes = [64, 1], strides = [1, 1]} : vector<64x4xf32> to vector<64x1xf32>
    %139 = vector.extract_strided_slice %126 {offsets = [2, 0], sizes = [1, 512], strides = [1, 1]} : vector<4x512xf32> to vector<1x512xf32>
    %140 = vector.broadcast %138 : vector<64x1xf32> to vector<64x512xf32>
    %141 = vector.broadcast %139 : vector<1x512xf32> to vector<64x512xf32>
    %142 = arith.mulf %140, %141 : vector<64x512xf32>
    %143 = arith.addf %137, %142 : vector<64x512xf32>
    %144 = vector.extract_strided_slice %0 {offsets = [0, 3], sizes = [64, 1], strides = [1, 1]} : vector<64x4xf32> to vector<64x1xf32>
    %145 = vector.extract_strided_slice %126 {offsets = [3, 0], sizes = [1, 512], strides = [1, 1]} : vector<4x512xf32> to vector<1x512xf32>
    %146 = vector.broadcast %144 : vector<64x1xf32> to vector<64x512xf32>
    %147 = vector.broadcast %145 : vector<1x512xf32> to vector<64x512xf32>
    %148 = arith.mulf %146, %147 : vector<64x512xf32>
    %149 = arith.addf %143, %148 : vector<64x512xf32>
    %150 = vector.broadcast %1 : vector<64x1xf32> to vector<64x512xf32>
    %151 = arith.addf %149, %150 : vector<64x512xf32>
    %cst_33 = arith.constant 0.000000e+00 : f32
    %152 = vector.broadcast %cst_33 : f32 to vector<64x512xf32>
    %153 = arith.maximumf %151, %152 : vector<64x512xf32>
    %cst_34 = arith.constant dense<0.000000e+00> : vector<32x512xf32>
    %154 = tpu.matmul %2, %153, %cst_34 {dimension_numbers = #tpu.dot_dimension_numbers<[1], [0], [0], [1], [0, 0, 1, 1], [], []>} : vector<32x64xf32>, vector<64x512xf32>, vector<32x512xf32> -> vector<32x512xf32>
    %155 = vector.broadcast %3 : vector<32x1xf32> to vector<32x512xf32>
    %156 = arith.addf %154, %155 : vector<32x512xf32>
    %cst_35 = arith.constant 0.000000e+00 : f32
    %157 = vector.broadcast %cst_35 : f32 to vector<32x512xf32>
    %158 = arith.maximumf %156, %157 : vector<32x512xf32>
    %159 = vector.broadcast %4 : vector<32x1xf32> to vector<32x512xf32>
    %160 = arith.mulf %158, %159 : vector<32x512xf32>
    %cst_36 = arith.constant dense<0.000000e+00> : vector<512xf32>
    %161 = vector.multi_reduction <add>, %160, %cst_36 [0] : vector<32x512xf32> to vector<512xf32>
    %162 = vector.shape_cast %161 : vector<512xf32> to vector<1x512xf32>
    %163 = vector.broadcast %5 : vector<1x1xf32> to vector<1x512xf32>
    %164 = arith.addf %162, %163 : vector<1x512xf32>
    %c0_37 = arith.constant 0 : index
    %c1536_38 = arith.constant 1536 : index
    %165 = vector.load %arg8[%c0_37, %c1536_38] : memref<1x4096xf32, #tpu.memory_space<vmem>>, vector<1x512xf32>
    tpu.vector_store %arg8[%c0_37, %c1536_38], %164 {strides = array<i32>} : memref<1x4096xf32, #tpu.memory_space<vmem>>, vector<1x512xf32>,
    %c0_39 = arith.constant 0 : index
    %c2048 = arith.constant 2048 : index
    %166 = vector.load %arg1[%c0_39, %c2048] : memref<4x4096xf32, #tpu.memory_space<vmem>>, vector<4x512xf32>
    %167 = vector.extract_strided_slice %0 {offsets = [0, 0], sizes = [64, 1], strides = [1, 1]} : vector<64x4xf32> to vector<64x1xf32>
    %168 = vector.extract_strided_slice %166 {offsets = [0, 0], sizes = [1, 512], strides = [1, 1]} : vector<4x512xf32> to vector<1x512xf32>
    %169 = vector.broadcast %167 : vector<64x1xf32> to vector<64x512xf32>
    %170 = vector.broadcast %168 : vector<1x512xf32> to vector<64x512xf32>
    %171 = arith.mulf %169, %170 : vector<64x512xf32>
    %172 = vector.extract_strided_slice %0 {offsets = [0, 1], sizes = [64, 1], strides = [1, 1]} : vector<64x4xf32> to vector<64x1xf32>
    %173 = vector.extract_strided_slice %166 {offsets = [1, 0], sizes = [1, 512], strides = [1, 1]} : vector<4x512xf32> to vector<1x512xf32>
    %174 = vector.broadcast %172 : vector<64x1xf32> to vector<64x512xf32>
    %175 = vector.broadcast %173 : vector<1x512xf32> to vector<64x512xf32>
    %176 = arith.mulf %174, %175 : vector<64x512xf32>
    %177 = arith.addf %171, %176 : vector<64x512xf32>
    %178 = vector.extract_strided_slice %0 {offsets = [0, 2], sizes = [64, 1], strides = [1, 1]} : vector<64x4xf32> to vector<64x1xf32>
    %179 = vector.extract_strided_slice %166 {offsets = [2, 0], sizes = [1, 512], strides = [1, 1]} : vector<4x512xf32> to vector<1x512xf32>
    %180 = vector.broadcast %178 : vector<64x1xf32> to vector<64x512xf32>
    %181 = vector.broadcast %179 : vector<1x512xf32> to vector<64x512xf32>
    %182 = arith.mulf %180, %181 : vector<64x512xf32>
    %183 = arith.addf %177, %182 : vector<64x512xf32>
    %184 = vector.extract_strided_slice %0 {offsets = [0, 3], sizes = [64, 1], strides = [1, 1]} : vector<64x4xf32> to vector<64x1xf32>
    %185 = vector.extract_strided_slice %166 {offsets = [3, 0], sizes = [1, 512], strides = [1, 1]} : vector<4x512xf32> to vector<1x512xf32>
    %186 = vector.broadcast %184 : vector<64x1xf32> to vector<64x512xf32>
    %187 = vector.broadcast %185 : vector<1x512xf32> to vector<64x512xf32>
    %188 = arith.mulf %186, %187 : vector<64x512xf32>
    %189 = arith.addf %183, %188 : vector<64x512xf32>
    %190 = vector.broadcast %1 : vector<64x1xf32> to vector<64x512xf32>
    %191 = arith.addf %189, %190 : vector<64x512xf32>
    %cst_40 = arith.constant 0.000000e+00 : f32
    %192 = vector.broadcast %cst_40 : f32 to vector<64x512xf32>
    %193 = arith.maximumf %191, %192 : vector<64x512xf32>
    %cst_41 = arith.constant dense<0.000000e+00> : vector<32x512xf32>
    %194 = tpu.matmul %2, %193, %cst_41 {dimension_numbers = #tpu.dot_dimension_numbers<[1], [0], [0], [1], [0, 0, 1, 1], [], []>} : vector<32x64xf32>, vector<64x512xf32>, vector<32x512xf32> -> vector<32x512xf32>
    %195 = vector.broadcast %3 : vector<32x1xf32> to vector<32x512xf32>
    %196 = arith.addf %194, %195 : vector<32x512xf32>
    %cst_42 = arith.constant 0.000000e+00 : f32
    %197 = vector.broadcast %cst_42 : f32 to vector<32x512xf32>
    %198 = arith.maximumf %196, %197 : vector<32x512xf32>
    %199 = vector.broadcast %4 : vector<32x1xf32> to vector<32x512xf32>
    %200 = arith.mulf %198, %199 : vector<32x512xf32>
    %cst_43 = arith.constant dense<0.000000e+00> : vector<512xf32>
    %201 = vector.multi_reduction <add>, %200, %cst_43 [0] : vector<32x512xf32> to vector<512xf32>
    %202 = vector.shape_cast %201 : vector<512xf32> to vector<1x512xf32>
    %203 = vector.broadcast %5 : vector<1x1xf32> to vector<1x512xf32>
    %204 = arith.addf %202, %203 : vector<1x512xf32>
    %c0_44 = arith.constant 0 : index
    %c2048_45 = arith.constant 2048 : index
    %205 = vector.load %arg8[%c0_44, %c2048_45] : memref<1x4096xf32, #tpu.memory_space<vmem>>, vector<1x512xf32>
    tpu.vector_store %arg8[%c0_44, %c2048_45], %204 {strides = array<i32>} : memref<1x4096xf32, #tpu.memory_space<vmem>>, vector<1x512xf32>,
    %c0_46 = arith.constant 0 : index
    %c2560 = arith.constant 2560 : index
    %206 = vector.load %arg1[%c0_46, %c2560] : memref<4x4096xf32, #tpu.memory_space<vmem>>, vector<4x512xf32>
    %207 = vector.extract_strided_slice %0 {offsets = [0, 0], sizes = [64, 1], strides = [1, 1]} : vector<64x4xf32> to vector<64x1xf32>
    %208 = vector.extract_strided_slice %206 {offsets = [0, 0], sizes = [1, 512], strides = [1, 1]} : vector<4x512xf32> to vector<1x512xf32>
    %209 = vector.broadcast %207 : vector<64x1xf32> to vector<64x512xf32>
    %210 = vector.broadcast %208 : vector<1x512xf32> to vector<64x512xf32>
    %211 = arith.mulf %209, %210 : vector<64x512xf32>
    %212 = vector.extract_strided_slice %0 {offsets = [0, 1], sizes = [64, 1], strides = [1, 1]} : vector<64x4xf32> to vector<64x1xf32>
    %213 = vector.extract_strided_slice %206 {offsets = [1, 0], sizes = [1, 512], strides = [1, 1]} : vector<4x512xf32> to vector<1x512xf32>
    %214 = vector.broadcast %212 : vector<64x1xf32> to vector<64x512xf32>
    %215 = vector.broadcast %213 : vector<1x512xf32> to vector<64x512xf32>
    %216 = arith.mulf %214, %215 : vector<64x512xf32>
    %217 = arith.addf %211, %216 : vector<64x512xf32>
    %218 = vector.extract_strided_slice %0 {offsets = [0, 2], sizes = [64, 1], strides = [1, 1]} : vector<64x4xf32> to vector<64x1xf32>
    %219 = vector.extract_strided_slice %206 {offsets = [2, 0], sizes = [1, 512], strides = [1, 1]} : vector<4x512xf32> to vector<1x512xf32>
    %220 = vector.broadcast %218 : vector<64x1xf32> to vector<64x512xf32>
    %221 = vector.broadcast %219 : vector<1x512xf32> to vector<64x512xf32>
    %222 = arith.mulf %220, %221 : vector<64x512xf32>
    %223 = arith.addf %217, %222 : vector<64x512xf32>
    %224 = vector.extract_strided_slice %0 {offsets = [0, 3], sizes = [64, 1], strides = [1, 1]} : vector<64x4xf32> to vector<64x1xf32>
    %225 = vector.extract_strided_slice %206 {offsets = [3, 0], sizes = [1, 512], strides = [1, 1]} : vector<4x512xf32> to vector<1x512xf32>
    %226 = vector.broadcast %224 : vector<64x1xf32> to vector<64x512xf32>
    %227 = vector.broadcast %225 : vector<1x512xf32> to vector<64x512xf32>
    %228 = arith.mulf %226, %227 : vector<64x512xf32>
    %229 = arith.addf %223, %228 : vector<64x512xf32>
    %230 = vector.broadcast %1 : vector<64x1xf32> to vector<64x512xf32>
    %231 = arith.addf %229, %230 : vector<64x512xf32>
    %cst_47 = arith.constant 0.000000e+00 : f32
    %232 = vector.broadcast %cst_47 : f32 to vector<64x512xf32>
    %233 = arith.maximumf %231, %232 : vector<64x512xf32>
    %cst_48 = arith.constant dense<0.000000e+00> : vector<32x512xf32>
    %234 = tpu.matmul %2, %233, %cst_48 {dimension_numbers = #tpu.dot_dimension_numbers<[1], [0], [0], [1], [0, 0, 1, 1], [], []>} : vector<32x64xf32>, vector<64x512xf32>, vector<32x512xf32> -> vector<32x512xf32>
    %235 = vector.broadcast %3 : vector<32x1xf32> to vector<32x512xf32>
    %236 = arith.addf %234, %235 : vector<32x512xf32>
    %cst_49 = arith.constant 0.000000e+00 : f32
    %237 = vector.broadcast %cst_49 : f32 to vector<32x512xf32>
    %238 = arith.maximumf %236, %237 : vector<32x512xf32>
    %239 = vector.broadcast %4 : vector<32x1xf32> to vector<32x512xf32>
    %240 = arith.mulf %238, %239 : vector<32x512xf32>
    %cst_50 = arith.constant dense<0.000000e+00> : vector<512xf32>
    %241 = vector.multi_reduction <add>, %240, %cst_50 [0] : vector<32x512xf32> to vector<512xf32>
    %242 = vector.shape_cast %241 : vector<512xf32> to vector<1x512xf32>
    %243 = vector.broadcast %5 : vector<1x1xf32> to vector<1x512xf32>
    %244 = arith.addf %242, %243 : vector<1x512xf32>
    %c0_51 = arith.constant 0 : index
    %c2560_52 = arith.constant 2560 : index
    %245 = vector.load %arg8[%c0_51, %c2560_52] : memref<1x4096xf32, #tpu.memory_space<vmem>>, vector<1x512xf32>
    tpu.vector_store %arg8[%c0_51, %c2560_52], %244 {strides = array<i32>} : memref<1x4096xf32, #tpu.memory_space<vmem>>, vector<1x512xf32>,
    %c0_53 = arith.constant 0 : index
    %c3072 = arith.constant 3072 : index
    %246 = vector.load %arg1[%c0_53, %c3072] : memref<4x4096xf32, #tpu.memory_space<vmem>>, vector<4x512xf32>
    %247 = vector.extract_strided_slice %0 {offsets = [0, 0], sizes = [64, 1], strides = [1, 1]} : vector<64x4xf32> to vector<64x1xf32>
    %248 = vector.extract_strided_slice %246 {offsets = [0, 0], sizes = [1, 512], strides = [1, 1]} : vector<4x512xf32> to vector<1x512xf32>
    %249 = vector.broadcast %247 : vector<64x1xf32> to vector<64x512xf32>
    %250 = vector.broadcast %248 : vector<1x512xf32> to vector<64x512xf32>
    %251 = arith.mulf %249, %250 : vector<64x512xf32>
    %252 = vector.extract_strided_slice %0 {offsets = [0, 1], sizes = [64, 1], strides = [1, 1]} : vector<64x4xf32> to vector<64x1xf32>
    %253 = vector.extract_strided_slice %246 {offsets = [1, 0], sizes = [1, 512], strides = [1, 1]} : vector<4x512xf32> to vector<1x512xf32>
    %254 = vector.broadcast %252 : vector<64x1xf32> to vector<64x512xf32>
    %255 = vector.broadcast %253 : vector<1x512xf32> to vector<64x512xf32>
    %256 = arith.mulf %254, %255 : vector<64x512xf32>
    %257 = arith.addf %251, %256 : vector<64x512xf32>
    %258 = vector.extract_strided_slice %0 {offsets = [0, 2], sizes = [64, 1], strides = [1, 1]} : vector<64x4xf32> to vector<64x1xf32>
    %259 = vector.extract_strided_slice %246 {offsets = [2, 0], sizes = [1, 512], strides = [1, 1]} : vector<4x512xf32> to vector<1x512xf32>
    %260 = vector.broadcast %258 : vector<64x1xf32> to vector<64x512xf32>
    %261 = vector.broadcast %259 : vector<1x512xf32> to vector<64x512xf32>
    %262 = arith.mulf %260, %261 : vector<64x512xf32>
    %263 = arith.addf %257, %262 : vector<64x512xf32>
    %264 = vector.extract_strided_slice %0 {offsets = [0, 3], sizes = [64, 1], strides = [1, 1]} : vector<64x4xf32> to vector<64x1xf32>
    %265 = vector.extract_strided_slice %246 {offsets = [3, 0], sizes = [1, 512], strides = [1, 1]} : vector<4x512xf32> to vector<1x512xf32>
    %266 = vector.broadcast %264 : vector<64x1xf32> to vector<64x512xf32>
    %267 = vector.broadcast %265 : vector<1x512xf32> to vector<64x512xf32>
    %268 = arith.mulf %266, %267 : vector<64x512xf32>
    %269 = arith.addf %263, %268 : vector<64x512xf32>
    %270 = vector.broadcast %1 : vector<64x1xf32> to vector<64x512xf32>
    %271 = arith.addf %269, %270 : vector<64x512xf32>
    %cst_54 = arith.constant 0.000000e+00 : f32
    %272 = vector.broadcast %cst_54 : f32 to vector<64x512xf32>
    %273 = arith.maximumf %271, %272 : vector<64x512xf32>
    %cst_55 = arith.constant dense<0.000000e+00> : vector<32x512xf32>
    %274 = tpu.matmul %2, %273, %cst_55 {dimension_numbers = #tpu.dot_dimension_numbers<[1], [0], [0], [1], [0, 0, 1, 1], [], []>} : vector<32x64xf32>, vector<64x512xf32>, vector<32x512xf32> -> vector<32x512xf32>
    %275 = vector.broadcast %3 : vector<32x1xf32> to vector<32x512xf32>
    %276 = arith.addf %274, %275 : vector<32x512xf32>
    %cst_56 = arith.constant 0.000000e+00 : f32
    %277 = vector.broadcast %cst_56 : f32 to vector<32x512xf32>
    %278 = arith.maximumf %276, %277 : vector<32x512xf32>
    %279 = vector.broadcast %4 : vector<32x1xf32> to vector<32x512xf32>
    %280 = arith.mulf %278, %279 : vector<32x512xf32>
    %cst_57 = arith.constant dense<0.000000e+00> : vector<512xf32>
    %281 = vector.multi_reduction <add>, %280, %cst_57 [0] : vector<32x512xf32> to vector<512xf32>
    %282 = vector.shape_cast %281 : vector<512xf32> to vector<1x512xf32>
    %283 = vector.broadcast %5 : vector<1x1xf32> to vector<1x512xf32>
    %284 = arith.addf %282, %283 : vector<1x512xf32>
    %c0_58 = arith.constant 0 : index
    %c3072_59 = arith.constant 3072 : index
    %285 = vector.load %arg8[%c0_58, %c3072_59] : memref<1x4096xf32, #tpu.memory_space<vmem>>, vector<1x512xf32>
    tpu.vector_store %arg8[%c0_58, %c3072_59], %284 {strides = array<i32>} : memref<1x4096xf32, #tpu.memory_space<vmem>>, vector<1x512xf32>,
    %c0_60 = arith.constant 0 : index
    %c3584 = arith.constant 3584 : index
    %286 = vector.load %arg1[%c0_60, %c3584] : memref<4x4096xf32, #tpu.memory_space<vmem>>, vector<4x512xf32>
    %287 = vector.extract_strided_slice %0 {offsets = [0, 0], sizes = [64, 1], strides = [1, 1]} : vector<64x4xf32> to vector<64x1xf32>
    %288 = vector.extract_strided_slice %286 {offsets = [0, 0], sizes = [1, 512], strides = [1, 1]} : vector<4x512xf32> to vector<1x512xf32>
    %289 = vector.broadcast %287 : vector<64x1xf32> to vector<64x512xf32>
    %290 = vector.broadcast %288 : vector<1x512xf32> to vector<64x512xf32>
    %291 = arith.mulf %289, %290 : vector<64x512xf32>
    %292 = vector.extract_strided_slice %0 {offsets = [0, 1], sizes = [64, 1], strides = [1, 1]} : vector<64x4xf32> to vector<64x1xf32>
    %293 = vector.extract_strided_slice %286 {offsets = [1, 0], sizes = [1, 512], strides = [1, 1]} : vector<4x512xf32> to vector<1x512xf32>
    %294 = vector.broadcast %292 : vector<64x1xf32> to vector<64x512xf32>
    %295 = vector.broadcast %293 : vector<1x512xf32> to vector<64x512xf32>
    %296 = arith.mulf %294, %295 : vector<64x512xf32>
    %297 = arith.addf %291, %296 : vector<64x512xf32>
    %298 = vector.extract_strided_slice %0 {offsets = [0, 2], sizes = [64, 1], strides = [1, 1]} : vector<64x4xf32> to vector<64x1xf32>
    %299 = vector.extract_strided_slice %286 {offsets = [2, 0], sizes = [1, 512], strides = [1, 1]} : vector<4x512xf32> to vector<1x512xf32>
    %300 = vector.broadcast %298 : vector<64x1xf32> to vector<64x512xf32>
    %301 = vector.broadcast %299 : vector<1x512xf32> to vector<64x512xf32>
    %302 = arith.mulf %300, %301 : vector<64x512xf32>
    %303 = arith.addf %297, %302 : vector<64x512xf32>
    %304 = vector.extract_strided_slice %0 {offsets = [0, 3], sizes = [64, 1], strides = [1, 1]} : vector<64x4xf32> to vector<64x1xf32>
    %305 = vector.extract_strided_slice %286 {offsets = [3, 0], sizes = [1, 512], strides = [1, 1]} : vector<4x512xf32> to vector<1x512xf32>
    %306 = vector.broadcast %304 : vector<64x1xf32> to vector<64x512xf32>
    %307 = vector.broadcast %305 : vector<1x512xf32> to vector<64x512xf32>
    %308 = arith.mulf %306, %307 : vector<64x512xf32>
    %309 = arith.addf %303, %308 : vector<64x512xf32>
    %310 = vector.broadcast %1 : vector<64x1xf32> to vector<64x512xf32>
    %311 = arith.addf %309, %310 : vector<64x512xf32>
    %cst_61 = arith.constant 0.000000e+00 : f32
    %312 = vector.broadcast %cst_61 : f32 to vector<64x512xf32>
    %313 = arith.maximumf %311, %312 : vector<64x512xf32>
    %cst_62 = arith.constant dense<0.000000e+00> : vector<32x512xf32>
    %314 = tpu.matmul %2, %313, %cst_62 {dimension_numbers = #tpu.dot_dimension_numbers<[1], [0], [0], [1], [0, 0, 1, 1], [], []>} : vector<32x64xf32>, vector<64x512xf32>, vector<32x512xf32> -> vector<32x512xf32>
    %315 = vector.broadcast %3 : vector<32x1xf32> to vector<32x512xf32>
    %316 = arith.addf %314, %315 : vector<32x512xf32>
    %cst_63 = arith.constant 0.000000e+00 : f32
    %317 = vector.broadcast %cst_63 : f32 to vector<32x512xf32>
    %318 = arith.maximumf %316, %317 : vector<32x512xf32>
    %319 = vector.broadcast %4 : vector<32x1xf32> to vector<32x512xf32>
    %320 = arith.mulf %318, %319 : vector<32x512xf32>
    %cst_64 = arith.constant dense<0.000000e+00> : vector<512xf32>
    %321 = vector.multi_reduction <add>, %320, %cst_64 [0] : vector<32x512xf32> to vector<512xf32>
    %322 = vector.shape_cast %321 : vector<512xf32> to vector<1x512xf32>
    %323 = vector.broadcast %5 : vector<1x1xf32> to vector<1x512xf32>
    %324 = arith.addf %322, %323 : vector<1x512xf32>
    %c0_65 = arith.constant 0 : index
    %c3584_66 = arith.constant 3584 : index
    %325 = vector.load %arg8[%c0_65, %c3584_66] : memref<1x4096xf32, #tpu.memory_space<vmem>>, vector<1x512xf32>
    tpu.vector_store %arg8[%c0_65, %c3584_66], %324 {strides = array<i32>} : memref<1x4096xf32, #tpu.memory_space<vmem>>, vector<1x512xf32>,
    return
  }
  func.func @transform_0(%arg0: i32) -> (i32, i32) {
    %c0_i32 = arith.constant 0 : i32
    %c0_i32_0 = arith.constant 0 : i32
    return %c0_i32, %arg0 : i32, i32
  }
  func.func @transform_1(%arg0: i32) -> (i32, i32) {
    %c0_i32 = arith.constant 0 : i32
    %c0_i32_0 = arith.constant 0 : i32
    %c0_i32_1 = arith.constant 0 : i32
    return %c0_i32, %c0_i32_0 : i32, i32
  }
  func.func @transform_2(%arg0: i32) -> (i32, i32) {
    %c0_i32 = arith.constant 0 : i32
    %c0_i32_0 = arith.constant 0 : i32
    %c0_i32_1 = arith.constant 0 : i32
    return %c0_i32, %c0_i32_0 : i32, i32
  }
  func.func @transform_3(%arg0: i32) -> (i32, i32) {
    %c0_i32 = arith.constant 0 : i32
    %c0_i32_0 = arith.constant 0 : i32
    %c0_i32_1 = arith.constant 0 : i32
    return %c0_i32, %c0_i32_0 : i32, i32
  }
  func.func @transform_4(%arg0: i32) -> (i32, i32) {
    %c0_i32 = arith.constant 0 : i32
    %c0_i32_0 = arith.constant 0 : i32
    %c0_i32_1 = arith.constant 0 : i32
    return %c0_i32, %c0_i32_0 : i32, i32
  }
  func.func @transform_5(%arg0: i32) -> (i32, i32) {
    %c0_i32 = arith.constant 0 : i32
    %c0_i32_0 = arith.constant 0 : i32
    %c0_i32_1 = arith.constant 0 : i32
    return %c0_i32, %c0_i32_0 : i32, i32
  }
  func.func @transform_6(%arg0: i32) -> (i32, i32) {
    %c0_i32 = arith.constant 0 : i32
    %c0_i32_0 = arith.constant 0 : i32
    %c0_i32_1 = arith.constant 0 : i32
    return %c0_i32, %c0_i32_0 : i32, i32
  }
  func.func @transform_7(%arg0: i32) -> (i32, i32) {
    %c0_i32 = arith.constant 0 : i32
    %c0_i32_0 = arith.constant 0 : i32
    return %c0_i32, %arg0 : i32, i32
  }
}

</mosaic_0001>

<llo_original>
// kernel: tpu_custom_call.1
$region0: #{tpu_custom_call.1}
  #allocation0 [shape = 'u32[]', space=smem, size = 0x4, offset = 0x4, fixed_abs, tag = 'smem constant byte address 0x4 - core index']
  #allocation1 [shape = 'u32[144,128]{1,0:T(1,128)}', space=vmem, size = 0x12000, scoped, tag = 'internal scratch']
  #allocation2 [shape = 'f32[1,1]{1,0:T(1,128)S(1)}', space=vmem, size = 0x200, scoped, tag = 'scoped memory for tpu_custom_call.1']
  %s0 = inlined_call_operand.vmem [shape: f32[4,4096], index: 0, kind: input, shape index: {}]
  %s1 = inlined_call_operand.vmem [shape: f32[64,4], index: 1, kind: input, shape index: {}]
  %s2 = inlined_call_operand.vmem [shape: f32[64,1], index: 2, kind: input, shape index: {}]
  %s3 = inlined_call_operand.vmem [shape: f32[32,64], index: 3, kind: input, shape index: {}]
  %s4 = inlined_call_operand.vmem [shape: f32[32,1], index: 4, kind: input, shape index: {}]
  %s5 = inlined_call_operand.vmem [shape: f32[32,1], index: 5, kind: input, shape index: {}]
  %s6 = inlined_call_operand.<no memory space> [shape: f32[1,1], index: 6, kind: input, shape index: {}]
  %s7 = inlined_call_operand.hbm [shape: f32[1,4096], index: 7, kind: output, shape index: {}]
  %s8 = sld [smem:[#allocation0]]
  $region38: #{tpu_custom_call.1} parent=0
    _
  %s10 = ssub.s32 1, %s8
  %s11 = scalar_select 0, %s10, %s8
  %v12 = vstv %s6
  %13 = vst [vmem:[#allocation2] sm:$0x1] %v12
  $region1: #{tpu_custom_call.1} parent=0
    #allocation3 [shape = 'u8[16384]{0}', space=vmem, size = 0x4000, scoped, tag = 'output window, operand 0, single buffered']
    #allocation4 [shape = 's32[1]{0}', space=sflag, size = 0x4, scoped, tag = 'scoped memory for tpu_custom_call.1']
    %14 = vsyncpa [#allocation4], 0
    // Predicated region
    $region2: #{tpu_custom_call.1} parent=1 // pred_check
      _
    $region3: #{tpu_custom_call.1} parent=1 // pred_check_branch
      %16 = sbr.rel (0) target = $region5
    $region4: #{tpu_custom_call.1} parent=1 // pred_region
      _
    $region5: #{tpu_custom_call.1} parent=1 // pred_fallthru
      _
    // Predicated region
    $region6: #{tpu_custom_call.1} parent=1 // pred_check
      _
    $region7: #{tpu_custom_call.1} parent=1 // pred_check_branch
      %18 = sbr.rel (0) target = $region9
    $region8: #{tpu_custom_call.1} parent=1 // pred_region
      _
    $region9: #{tpu_custom_call.1} parent=1 // pred_fallthru
      _
    // Predicated region
    $region10: #{tpu_custom_call.1} parent=1 // pred_check
      _
    $region11: #{tpu_custom_call.1} parent=1 // pred_check_branch
      %20 = sbr.rel (0) target = $region13
    $region12: #{tpu_custom_call.1} parent=1 // pred_region
      _
    $region13: #{tpu_custom_call.1} parent=1 // pred_fallthru
      _
    // Predicated region
    $region14: #{tpu_custom_call.1} parent=1 // pred_check
      _
    $region15: #{tpu_custom_call.1} parent=1 // pred_check_branch
      %22 = sbr.rel (0) target = $region17
    $region16: #{tpu_custom_call.1} parent=1 // pred_region
      _
    $region17: #{tpu_custom_call.1} parent=1 // pred_fallthru
      _
    // Predicated region
    $region18: #{tpu_custom_call.1} parent=1 // pred_check
      _
    $region19: #{tpu_custom_call.1} parent=1 // pred_check_branch
      %24 = sbr.rel (0) target = $region21
    $region20: #{tpu_custom_call.1} parent=1 // pred_region
      _
    $region21: #{tpu_custom_call.1} parent=1 // pred_fallthru
      _
    // Predicated region
    $region22: #{tpu_custom_call.1} parent=1 // pred_check
      _
    $region23: #{tpu_custom_call.1} parent=1 // pred_check_branch
      %26 = sbr.rel (0) target = $region25
    $region24: #{tpu_custom_call.1} parent=1 // pred_region
      _
    $region25: #{tpu_custom_call.1} parent=1 // pred_fallthru
      _
    // Predicated region
    $region26: #{tpu_custom_call.1} parent=1 // pred_check
      _
    $region27: #{tpu_custom_call.1} parent=1 // pred_check_branch
      %28 = sbr.rel (0) target = $region29
    $region28: #{tpu_custom_call.1} parent=1 // pred_region
      _
    $region29: #{tpu_custom_call.1} parent=1 // pred_fallthru
      _
    %v29 = vld [vmem:[%s1] sm:$0xff]
    %v30 = vld [vmem:[%s1 + $0x8] sm:$0xff]
    %v31 = vld [vmem:[%s1 + $0x10] sm:$0xff]
    %v32 = vld [vmem:[%s1 + $0x18] sm:$0xff]
    %v33 = vld [vmem:[%s1 + $0x20] sm:$0xff]
    %v34 = vld [vmem:[%s1 + $0x28] sm:$0xff]
    %v35 = vld [vmem:[%s1 + $0x30] sm:$0xff]
    %v36 = vld [vmem:[%s1 + $0x38] sm:$0xff]
    %v37 = vld [vmem:[%s2] sm:$0xff]
    %v38 = vld [vmem:[%s2 + $0x8] sm:$0xff]
    %v39 = vld [vmem:[%s2 + $0x10] sm:$0xff]
    %v40 = vld [vmem:[%s2 + $0x18] sm:$0xff]
    %v41 = vld [vmem:[%s2 + $0x20] sm:$0xff]
    %v42 = vld [vmem:[%s2 + $0x28] sm:$0xff]
    %v43 = vld [vmem:[%s2 + $0x30] sm:$0xff]
    %v44 = vld [vmem:[%s2 + $0x38] sm:$0xff]
    %v45 = vld [vmem:[%s3] sm:$0xff]
    %v46 = vld [vmem:[%s3 + $0x8] sm:$0xff]
    %v47 = vld [vmem:[%s3 + $0x10] sm:$0xff]
    %v48 = vld [vmem:[%s3 + $0x18] sm:$0xff]
    %v49 = vld [vmem:[%s4] sm:$0xff]
    %v50 = vld [vmem:[%s4 + $0x8] sm:$0xff]
    %v51 = vld [vmem:[%s4 + $0x10] sm:$0xff]
    %v52 = vld [vmem:[%s4 + $0x18] sm:$0xff]
    %v53 = vld [vmem:[%s5] sm:$0xff]
    %v54 = vld [vmem:[%s5 + $0x8] sm:$0xff]
    %v55 = vld [vmem:[%s5 + $0x10] sm:$0xff]
    %v56 = vld [vmem:[%s5 + $0x18] sm:$0xff]
    %v57 = vld [vmem:[#allocation2] sm:$0x1]
    %v58 = vld [vmem:[%s0] sm:$0xff]
    %v59 = vld [vmem:[%s0 + $0x8] sm:$0xff]
    %61 = vset.pattern.permute.xlu0 0
    %62 = vperm.xlu0 %61, %v29
    %v63 = vpop.permute.xlu0 %62
    %66 = vset.pattern.permute.xlu0 0
    %67 = vperm.xlu0 %66, %v30
    %v68 = vpop.permute.xlu0 %67
    %71 = vset.pattern.permute.xlu0 0
    %72 = vperm.xlu0 %71, %v31
    %v73 = vpop.permute.xlu0 %72
    %76 = vset.pattern.permute.xlu0 0
    %77 = vperm.xlu0 %76, %v32
    %v78 = vpop.permute.xlu0 %77
    %81 = vset.pattern.permute.xlu0 0
    %82 = vperm.xlu0 %81, %v33
    %v83 = vpop.permute.xlu0 %82
    %86 = vset.pattern.permute.xlu0 0
    %87 = vperm.xlu0 %86, %v34
    %v88 = vpop.permute.xlu0 %87
    %91 = vset.pattern.permute.xlu0 0
    %92 = vperm.xlu0 %91, %v35
    %v93 = vpop.permute.xlu0 %92
    %96 = vset.pattern.permute.xlu0 0
    %97 = vperm.xlu0 %96, %v36
    %v98 = vpop.permute.xlu0 %97
    %v102 = vlaneseq
    %v103 = vshrl.u32 %v102, 7
    %v104 = vsub.s32 0, %v103
    %v105 = vrot.slane %v58, %v104
    %v106 = vlaneseq
    %v107 = vshrl.u32 %v106, 7
    %v108 = vsub.s32 4, %v107
    %v109 = vrot.slane %v58, %v108
    %v110 = vlaneseq
    %v111 = vshrl.u32 %v110, 7
    %v112 = vsub.s32 0, %v111
    %v113 = vrot.slane %v59, %v112
    %v114 = vlaneseq
    %v115 = vshrl.u32 %v114, 7
    %v116 = vsub.s32 4, %v115
    %v117 = vrot.slane %v59, %v116
    %v122 = vlaneseq
    %v123 = vshrl.u32 %v122, 7
    %v124 = vsub.s32 0, %v123
    %v125 = vrot.slane %v105, %v124
    %v126 = vlaneseq
    %v127 = vshrl.u32 %v126, 7
    %v128 = vsub.s32 0, %v127
    %v129 = vrot.slane %v109, %v128
    %v130 = vlaneseq
    %v131 = vshrl.u32 %v130, 7
    %v132 = vsub.s32 0, %v131
    %v133 = vrot.slane %v113, %v132
    %v134 = vlaneseq
    %v135 = vshrl.u32 %v134, 7
    %v136 = vsub.s32 0, %v135
    %v137 = vrot.slane %v117, %v136
    %v138 = vmul.f32 %v63, %v125
    %v139 = vmul.f32 %v63, %v129
    %v140 = vmul.f32 %v63, %v133
    %v141 = vmul.f32 %v63, %v137
    %v142 = vmul.f32 %v68, %v125
    %v143 = vmul.f32 %v68, %v129
    %v144 = vmul.f32 %v68, %v133
    %v145 = vmul.f32 %v68, %v137
    %v146 = vmul.f32 %v73, %v125
    %v147 = vmul.f32 %v73, %v129
    %v148 = vmul.f32 %v73, %v133
    %v149 = vmul.f32 %v73, %v137
    %v150 = vmul.f32 %v78, %v125
    %v151 = vmul.f32 %v78, %v129
    %v152 = vmul.f32 %v78, %v133
    %v153 = vmul.f32 %v78, %v137
    %v154 = vmul.f32 %v83, %v125
    %v155 = vmul.f32 %v83, %v129
    %v156 = vmul.f32 %v83, %v133
    %v157 = vmul.f32 %v83, %v137
    %v158 = vmul.f32 %v88, %v125
    %v159 = vmul.f32 %v88, %v129
    %v160 = vmul.f32 %v88, %v133
    %v161 = vmul.f32 %v88, %v137
    %v162 = vmul.f32 %v93, %v125
    %v163 = vmul.f32 %v93, %v129
    %v164 = vmul.f32 %v93, %v133
    %v165 = vmul.f32 %v93, %v137
    %v166 = vmul.f32 %v98, %v125
    %v167 = vmul.f32 %v98, %v129
    %v168 = vmul.f32 %v98, %v133
    %v169 = vmul.f32 %v98, %v137
    %170 = vset.pattern.permute.xlu0 1
    %171 = vperm.xlu0 %170, %v29
    %v172 = vpop.permute.xlu0 %171
    %174 = vset.pattern.permute.xlu0 1
    %175 = vperm.xlu0 %174, %v30
    %v176 = vpop.permute.xlu0 %175
    %178 = vset.pattern.permute.xlu0 1
    %179 = vperm.xlu0 %178, %v31
    %v180 = vpop.permute.xlu0 %179
    %182 = vset.pattern.permute.xlu0 1
    %183 = vperm.xlu0 %182, %v32
    %v184 = vpop.permute.xlu0 %183
    %186 = vset.pattern.permute.xlu0 1
    %187 = vperm.xlu0 %186, %v33
    %v188 = vpop.permute.xlu0 %187
    %190 = vset.pattern.permute.xlu0 1
    %191 = vperm.xlu0 %190, %v34
    %v192 = vpop.permute.xlu0 %191
    %194 = vset.pattern.permute.xlu0 1
    %195 = vperm.xlu0 %194, %v35
    %v196 = vpop.permute.xlu0 %195
    %198 = vset.pattern.permute.xlu0 1
    %199 = vperm.xlu0 %198, %v36
    %v200 = vpop.permute.xlu0 %199
    %v202 = vlaneseq
    %v203 = vshrl.u32 %v202, 7
    %v204 = vsub.s32 1, %v203
    %v205 = vrot.slane %v58, %v204
    %v206 = vlaneseq
    %v207 = vshrl.u32 %v206, 7
    %v208 = vsub.s32 5, %v207
    %v209 = vrot.slane %v58, %v208
    %v210 = vlaneseq
    %v211 = vshrl.u32 %v210, 7
    %v212 = vsub.s32 1, %v211
    %v213 = vrot.slane %v59, %v212
    %v214 = vlaneseq
    %v215 = vshrl.u32 %v214, 7
    %v216 = vsub.s32 5, %v215
    %v217 = vrot.slane %v59, %v216
    %v222 = vlaneseq
    %v223 = vshrl.u32 %v222, 7
    %v224 = vsub.s32 1, %v223
    %v225 = vrot.slane %v205, %v224
    %v226 = vlaneseq
    %v227 = vshrl.u32 %v226, 7
    %v228 = vsub.s32 1, %v227
    %v229 = vrot.slane %v209, %v228
    %v230 = vlaneseq
    %v231 = vshrl.u32 %v230, 7
    %v232 = vsub.s32 1, %v231
    %v233 = vrot.slane %v213, %v232
    %v234 = vlaneseq
    %v235 = vshrl.u32 %v234, 7
    %v236 = vsub.s32 1, %v235
    %v237 = vrot.slane %v217, %v236
    %v238 = vmul.f32 %v172, %v225
    %v239 = vmul.f32 %v172, %v229
    %v240 = vmul.f32 %v172, %v233
    %v241 = vmul.f32 %v172, %v237
    %v242 = vmul.f32 %v176, %v225
    %v243 = vmul.f32 %v176, %v229
    %v244 = vmul.f32 %v176, %v233
    %v245 = vmul.f32 %v176, %v237
    %v246 = vmul.f32 %v180, %v225
    %v247 = vmul.f32 %v180, %v229
    %v248 = vmul.f32 %v180, %v233
    %v249 = vmul.f32 %v180, %v237
    %v250 = vmul.f32 %v184, %v225
    %v251 = vmul.f32 %v184, %v229
    %v252 = vmul.f32 %v184, %v233
    %v253 = vmul.f32 %v184, %v237
    %v254 = vmul.f32 %v188, %v225
    %v255 = vmul.f32 %v188, %v229
    %v256 = vmul.f32 %v188, %v233
    %v257 = vmul.f32 %v188, %v237
    %v258 = vmul.f32 %v192, %v225
    %v259 = vmul.f32 %v192, %v229
    %v260 = vmul.f32 %v192, %v233
    %v261 = vmul.f32 %v192, %v237
    %v262 = vmul.f32 %v196, %v225
    %v263 = vmul.f32 %v196, %v229
    %v264 = vmul.f32 %v196, %v233
    %v265 = vmul.f32 %v196, %v237
    %v266 = vmul.f32 %v200, %v225
    %v267 = vmul.f32 %v200, %v229
    %v268 = vmul.f32 %v200, %v233
    %v269 = vmul.f32 %v200, %v237
    %v270 = vadd.f32 %v138, %v238
    %v271 = vadd.f32 %v139, %v239
    %v272 = vadd.f32 %v140, %v240
    %v273 = vadd.f32 %v141, %v241
    %v274 = vadd.f32 %v142, %v242
    %v275 = vadd.f32 %v143, %v243
    %v276 = vadd.f32 %v144, %v244
    %v277 = vadd.f32 %v145, %v245
    %v278 = vadd.f32 %v146, %v246
    %v279 = vadd.f32 %v147, %v247
    %v280 = vadd.f32 %v148, %v248
    %v281 = vadd.f32 %v149, %v249
    %v282 = vadd.f32 %v150, %v250
    %v283 = vadd.f32 %v151, %v251
    %v284 = vadd.f32 %v152, %v252
    %v285 = vadd.f32 %v153, %v253
    %v286 = vadd.f32 %v154, %v254
    %v287 = vadd.f32 %v155, %v255
    %v288 = vadd.f32 %v156, %v256
    %v289 = vadd.f32 %v157, %v257
    %v290 = vadd.f32 %v158, %v258
    %v291 = vadd.f32 %v159, %v259
    %v292 = vadd.f32 %v160, %v260
    %v293 = vadd.f32 %v161, %v261
    %v294 = vadd.f32 %v162, %v262
    %v295 = vadd.f32 %v163, %v263
    %v296 = vadd.f32 %v164, %v264
    %v297 = vadd.f32 %v165, %v265
    %v298 = vadd.f32 %v166, %v266
    %v299 = vadd.f32 %v167, %v267
    %v300 = vadd.f32 %v168, %v268
    %v301 = vadd.f32 %v169, %v269
    %302 = vset.pattern.permute.xlu0 2
    %303 = vperm.xlu0 %302, %v29
    %v304 = vpop.permute.xlu0 %303
    %306 = vset.pattern.permute.xlu0 2
    %307 = vperm.xlu0 %306, %v30
    %v308 = vpop.permute.xlu0 %307
    %310 = vset.pattern.permute.xlu0 2
    %311 = vperm.xlu0 %310, %v31
    %v312 = vpop.permute.xlu0 %311
    %314 = vset.pattern.permute.xlu0 2
    %315 = vperm.xlu0 %314, %v32
    %v316 = vpop.permute.xlu0 %315
    %318 = vset.pattern.permute.xlu0 2
    %319 = vperm.xlu0 %318, %v33
    %v320 = vpop.permute.xlu0 %319
    %322 = vset.pattern.permute.xlu0 2
    %323 = vperm.xlu0 %322, %v34
    %v324 = vpop.permute.xlu0 %323
    %326 = vset.pattern.permute.xlu0 2
    %327 = vperm.xlu0 %326, %v35
    %v328 = vpop.permute.xlu0 %327
    %330 = vset.pattern.permute.xlu0 2
    %331 = vperm.xlu0 %330, %v36
    %v332 = vpop.permute.xlu0 %331
    %v334 = vlaneseq
    %v335 = vshrl.u32 %v334, 7
    %v336 = vsub.s32 2, %v335
    %v337 = vrot.slane %v58, %v336
    %v338 = vlaneseq
    %v339 = vshrl.u32 %v338, 7
    %v340 = vsub.s32 6, %v339
    %v341 = vrot.slane %v58, %v340
    %v342 = vlaneseq
    %v343 = vshrl.u32 %v342, 7
    %v344 = vsub.s32 2, %v343
    %v345 = vrot.slane %v59, %v344
    %v346 = vlaneseq
    %v347 = vshrl.u32 %v346, 7
    %v348 = vsub.s32 6, %v347
    %v349 = vrot.slane %v59, %v348
    %v354 = vlaneseq
    %v355 = vshrl.u32 %v354, 7
    %v356 = vsub.s32 2, %v355
    %v357 = vrot.slane %v337, %v356
    %v358 = vlaneseq
    %v359 = vshrl.u32 %v358, 7
    %v360 = vsub.s32 2, %v359
    %v361 = vrot.slane %v341, %v360
    %v362 = vlaneseq
    %v363 = vshrl.u32 %v362, 7
    %v364 = vsub.s32 2, %v363
    %v365 = vrot.slane %v345, %v364
    %v366 = vlaneseq
    %v367 = vshrl.u32 %v366, 7
    %v368 = vsub.s32 2, %v367
    %v369 = vrot.slane %v349, %v368
    %v370 = vmul.f32 %v304, %v357
    %v371 = vmul.f32 %v304, %v361
    %v372 = vmul.f32 %v304, %v365
    %v373 = vmul.f32 %v304, %v369
    %v374 = vmul.f32 %v308, %v357
    %v375 = vmul.f32 %v308, %v361
    %v376 = vmul.f32 %v308, %v365
    %v377 = vmul.f32 %v308, %v369
    %v378 = vmul.f32 %v312, %v357
    %v379 = vmul.f32 %v312, %v361
    %v380 = vmul.f32 %v312, %v365
    %v381 = vmul.f32 %v312, %v369
    %v382 = vmul.f32 %v316, %v357
    %v383 = vmul.f32 %v316, %v361
    %v384 = vmul.f32 %v316, %v365
    %v385 = vmul.f32 %v316, %v369
    %v386 = vmul.f32 %v320, %v357
    %v387 = vmul.f32 %v320, %v361
    %v388 = vmul.f32 %v320, %v365
    %v389 = vmul.f32 %v320, %v369
    %v390 = vmul.f32 %v324, %v357
    %v391 = vmul.f32 %v324, %v361
    %v392 = vmul.f32 %v324, %v365
    %v393 = vmul.f32 %v324, %v369
    %v394 = vmul.f32 %v328, %v357
    %v395 = vmul.f32 %v328, %v361
    %v396 = vmul.f32 %v328, %v365
    %v397 = vmul.f32 %v328, %v369
    %v398 = vmul.f32 %v332, %v357
    %v399 = vmul.f32 %v332, %v361
    %v400 = vmul.f32 %v332, %v365
    %v401 = vmul.f32 %v332, %v369
    %v402 = vadd.f32 %v270, %v370
    %v403 = vadd.f32 %v271, %v371
    %v404 = vadd.f32 %v272, %v372
    %v405 = vadd.f32 %v273, %v373
    %v406 = vadd.f32 %v274, %v374
    %v407 = vadd.f32 %v275, %v375
    %v408 = vadd.f32 %v276, %v376
    %v409 = vadd.f32 %v277, %v377
    %v410 = vadd.f32 %v278, %v378
    %v411 = vadd.f32 %v279, %v379
    %v412 = vadd.f32 %v280, %v380
    %v413 = vadd.f32 %v281, %v381
    %v414 = vadd.f32 %v282, %v382
    %v415 = vadd.f32 %v283, %v383
    %v416 = vadd.f32 %v284, %v384
    %v417 = vadd.f32 %v285, %v385
    %v418 = vadd.f32 %v286, %v386
    %v419 = vadd.f32 %v287, %v387
    %v420 = vadd.f32 %v288, %v388
    %v421 = vadd.f32 %v289, %v389
    %v422 = vadd.f32 %v290, %v390
    %v423 = vadd.f32 %v291, %v391
    %v424 = vadd.f32 %v292, %v392
    %v425 = vadd.f32 %v293, %v393
    %v426 = vadd.f32 %v294, %v394
    %v427 = vadd.f32 %v295, %v395
    %v428 = vadd.f32 %v296, %v396
    %v429 = vadd.f32 %v297, %v397
    %v430 = vadd.f32 %v298, %v398
    %v431 = vadd.f32 %v299, %v399
    %v432 = vadd.f32 %v300, %v400
    %v433 = vadd.f32 %v301, %v401
    %434 = vset.pattern.permute.xlu0 3
    %435 = vperm.xlu0 %434, %v29
    %v436 = vpop.permute.xlu0 %435
    %438 = vset.pattern.permute.xlu0 3
    %439 = vperm.xlu0 %438, %v30
    %v440 = vpop.permute.xlu0 %439
    %442 = vset.pattern.permute.xlu0 3
    %443 = vperm.xlu0 %442, %v31
    %v444 = vpop.permute.xlu0 %443
    %446 = vset.pattern.permute.xlu0 3
    %447 = vperm.xlu0 %446, %v32
    %v448 = vpop.permute.xlu0 %447
    %450 = vset.pattern.permute.xlu0 3
    %451 = vperm.xlu0 %450, %v33
    %v452 = vpop.permute.xlu0 %451
    %454 = vset.pattern.permute.xlu0 3
    %455 = vperm.xlu0 %454, %v34
    %v456 = vpop.permute.xlu0 %455
    %458 = vset.pattern.permute.xlu0 3
    %459 = vperm.xlu0 %458, %v35
    %v460 = vpop.permute.xlu0 %459
    %462 = vset.pattern.permute.xlu0 3
    %463 = vperm.xlu0 %462, %v36
    %v464 = vpop.permute.xlu0 %463
    %v466 = vlaneseq
    %v467 = vshrl.u32 %v466, 7
    %v468 = vsub.s32 3, %v467
    %v469 = vrot.slane %v58, %v468
    %v470 = vlaneseq
    %v471 = vshrl.u32 %v470, 7
    %v472 = vsub.s32 7, %v471
    %v473 = vrot.slane %v58, %v472
    %v474 = vlaneseq
    %v475 = vshrl.u32 %v474, 7
    %v476 = vsub.s32 3, %v475
    %v477 = vrot.slane %v59, %v476
    %v478 = vlaneseq
    %v479 = vshrl.u32 %v478, 7
    %v480 = vsub.s32 7, %v479
    %v481 = vrot.slane %v59, %v480
    %v486 = vlaneseq
    %v487 = vshrl.u32 %v486, 7
    %v488 = vsub.s32 3, %v487
    %v489 = vrot.slane %v469, %v488
    %v490 = vlaneseq
    %v491 = vshrl.u32 %v490, 7
    %v492 = vsub.s32 3, %v491
    %v493 = vrot.slane %v473, %v492
    %v494 = vlaneseq
    %v495 = vshrl.u32 %v494, 7
    %v496 = vsub.s32 3, %v495
    %v497 = vrot.slane %v477, %v496
    %v498 = vlaneseq
    %v499 = vshrl.u32 %v498, 7
    %v500 = vsub.s32 3, %v499
    %v501 = vrot.slane %v481, %v500
    %v502 = vmul.f32 %v436, %v489
    %v503 = vmul.f32 %v436, %v493
    %v504 = vmul.f32 %v436, %v497
    %v505 = vmul.f32 %v436, %v501
    %v506 = vmul.f32 %v440, %v489
    %v507 = vmul.f32 %v440, %v493
    %v508 = vmul.f32 %v440, %v497
    %v509 = vmul.f32 %v440, %v501
    %v510 = vmul.f32 %v444, %v489
    %v511 = vmul.f32 %v444, %v493
    %v512 = vmul.f32 %v444, %v497
    %v513 = vmul.f32 %v444, %v501
    %v514 = vmul.f32 %v448, %v489
    %v515 = vmul.f32 %v448, %v493
    %v516 = vmul.f32 %v448, %v497
    %v517 = vmul.f32 %v448, %v501
    %v518 = vmul.f32 %v452, %v489
    %v519 = vmul.f32 %v452, %v493
    %v520 = vmul.f32 %v452, %v497
    %v521 = vmul.f32 %v452, %v501
    %v522 = vmul.f32 %v456, %v489
    %v523 = vmul.f32 %v456, %v493
    %v524 = vmul.f32 %v456, %v497
    %v525 = vmul.f32 %v456, %v501
    %v526 = vmul.f32 %v460, %v489
    %v527 = vmul.f32 %v460, %v493
    %v528 = vmul.f32 %v460, %v497
    %v529 = vmul.f32 %v460, %v501
    %v530 = vmul.f32 %v464, %v489
    %v531 = vmul.f32 %v464, %v493
    %v532 = vmul.f32 %v464, %v497
    %v533 = vmul.f32 %v464, %v501
    %v534 = vadd.f32 %v402, %v502
    %v535 = vadd.f32 %v403, %v503
    %v536 = vadd.f32 %v404, %v504
    %v537 = vadd.f32 %v405, %v505
    %v538 = vadd.f32 %v406, %v506
    %v539 = vadd.f32 %v407, %v507
    %v540 = vadd.f32 %v408, %v508
    %v541 = vadd.f32 %v409, %v509
    %v542 = vadd.f32 %v410, %v510
    %v543 = vadd.f32 %v411, %v511
    %v544 = vadd.f32 %v412, %v512
    %v545 = vadd.f32 %v413, %v513
    %v546 = vadd.f32 %v414, %v514
    %v547 = vadd.f32 %v415, %v515
    %v548 = vadd.f32 %v416, %v516
    %v549 = vadd.f32 %v417, %v517
    %v550 = vadd.f32 %v418, %v518
    %v551 = vadd.f32 %v419, %v519
    %v552 = vadd.f32 %v420, %v520
    %v553 = vadd.f32 %v421, %v521
    %v554 = vadd.f32 %v422, %v522
    %v555 = vadd.f32 %v423, %v523
    %v556 = vadd.f32 %v424, %v524
    %v557 = vadd.f32 %v425, %v525
    %v558 = vadd.f32 %v426, %v526
    %v559 = vadd.f32 %v427, %v527
    %v560 = vadd.f32 %v428, %v528
    %v561 = vadd.f32 %v429, %v529
    %v562 = vadd.f32 %v430, %v530
    %v563 = vadd.f32 %v431, %v531
    %v564 = vadd.f32 %v432, %v532
    %v565 = vadd.f32 %v433, %v533
    %567 = vset.pattern.permute.xlu0 0
    %568 = vperm.xlu0 %567, %v37
    %v569 = vpop.permute.xlu0 %568
    %572 = vset.pattern.permute.xlu0 0
    %573 = vperm.xlu0 %572, %v38
    %v574 = vpop.permute.xlu0 %573
    %577 = vset.pattern.permute.xlu0 0
    %578 = vperm.xlu0 %577, %v39
    %v579 = vpop.permute.xlu0 %578
    %582 = vset.pattern.permute.xlu0 0
    %583 = vperm.xlu0 %582, %v40
    %v584 = vpop.permute.xlu0 %583
    %587 = vset.pattern.permute.xlu0 0
    %588 = vperm.xlu0 %587, %v41
    %v589 = vpop.permute.xlu0 %588
    %592 = vset.pattern.permute.xlu0 0
    %593 = vperm.xlu0 %592, %v42
    %v594 = vpop.permute.xlu0 %593
    %597 = vset.pattern.permute.xlu0 0
    %598 = vperm.xlu0 %597, %v43
    %v599 = vpop.permute.xlu0 %598
    %602 = vset.pattern.permute.xlu0 0
    %603 = vperm.xlu0 %602, %v44
    %v604 = vpop.permute.xlu0 %603
    %v606 = vadd.f32 %v534, %v569
    %v607 = vadd.f32 %v535, %v569
    %v608 = vadd.f32 %v536, %v569
    %v609 = vadd.f32 %v537, %v569
    %v610 = vadd.f32 %v538, %v574
    %v611 = vadd.f32 %v539, %v574
    %v612 = vadd.f32 %v540, %v574
    %v613 = vadd.f32 %v541, %v574
    %v614 = vadd.f32 %v542, %v579
    %v615 = vadd.f32 %v543, %v579
    %v616 = vadd.f32 %v544, %v579
    %v617 = vadd.f32 %v545, %v579
    %v618 = vadd.f32 %v546, %v584
    %v619 = vadd.f32 %v547, %v584
    %v620 = vadd.f32 %v548, %v584
    %v621 = vadd.f32 %v549, %v584
    %v622 = vadd.f32 %v550, %v589
    %v623 = vadd.f32 %v551, %v589
    %v624 = vadd.f32 %v552, %v589
    %v625 = vadd.f32 %v553, %v589
    %v626 = vadd.f32 %v554, %v594
    %v627 = vadd.f32 %v555, %v594
    %v628 = vadd.f32 %v556, %v594
    %v629 = vadd.f32 %v557, %v594
    %v630 = vadd.f32 %v558, %v599
    %v631 = vadd.f32 %v559, %v599
    %v632 = vadd.f32 %v560, %v599
    %v633 = vadd.f32 %v561, %v599
    %v634 = vadd.f32 %v562, %v604
    %v635 = vadd.f32 %v563, %v604
    %v636 = vadd.f32 %v564, %v604
    %v637 = vadd.f32 %v565, %v604
    %v638 = vmax.f32 %v606, 0.0
    %v639 = vmax.f32 %v607, 0.0
    %v640 = vmax.f32 %v608, 0.0
    %v641 = vmax.f32 %v609, 0.0
    %v642 = vmax.f32 %v610, 0.0
    %v643 = vmax.f32 %v611, 0.0
    %v644 = vmax.f32 %v612, 0.0
    %v645 = vmax.f32 %v613, 0.0
    %v646 = vmax.f32 %v614, 0.0
    %v647 = vmax.f32 %v615, 0.0
    %v648 = vmax.f32 %v616, 0.0
    %v649 = vmax.f32 %v617, 0.0
    %v650 = vmax.f32 %v618, 0.0
    %v651 = vmax.f32 %v619, 0.0
    %v652 = vmax.f32 %v620, 0.0
    %v653 = vmax.f32 %v621, 0.0
    %v654 = vmax.f32 %v622, 0.0
    %v655 = vmax.f32 %v623, 0.0
    %v656 = vmax.f32 %v624, 0.0
    %v657 = vmax.f32 %v625, 0.0
    %v658 = vmax.f32 %v626, 0.0
    %v659 = vmax.f32 %v627, 0.0
    %v660 = vmax.f32 %v628, 0.0
    %v661 = vmax.f32 %v629, 0.0
    %v662 = vmax.f32 %v630, 0.0
    %v663 = vmax.f32 %v631, 0.0
    %v664 = vmax.f32 %v632, 0.0
    %v665 = vmax.f32 %v633, 0.0
    %v666 = vmax.f32 %v634, 0.0
    %v667 = vmax.f32 %v635, 0.0
    %v668 = vmax.f32 %v636, 0.0
    %v669 = vmax.f32 %v637, 0.0
    %671 = vset.pattern.permute.xlu0 0
    %672 = vperm.xlu0 %671, %v49
    %v673 = vpop.permute.xlu0 %672
    %676 = vset.pattern.permute.xlu0 0
    %677 = vperm.xlu0 %676, %v50
    %v678 = vpop.permute.xlu0 %677
    %681 = vset.pattern.permute.xlu0 0
    %682 = vperm.xlu0 %681, %v51
    %v683 = vpop.permute.xlu0 %682
    %686 = vset.pattern.permute.xlu0 0
    %687 = vperm.xlu0 %686, %v52
    %v688 = vpop.permute.xlu0 %687
    %vm690 = vcmask 523264
    %v692 = vsel %vm690, %v45, 0
    %v695 = vsel %vm690, %v46, 0
    %v698 = vsel %vm690, %v47, 0
    %v701 = vsel %vm690, %v48, 0
    %703 = vmatprep.subr.mxu0 %v639
    %704 = vmatpush1.msra.mxu0 %v638
    %705 = vmatprep.subr.mxu0 %v643
    %706 = vmatpush1.msra.mxu0 %v642
    %707 = vmatprep.subr.mxu0 %v647
    %708 = vmatpush1.msra.mxu0 %v646
    %709 = vmatprep.subr.mxu0 %v651
    %710 = vmatpush1.msra.mxu0 %v650
    %711 = vmatprep.subr.mxu0 %v655
    %712 = vmatpush1.msra.mxu0 %v654
    %713 = vmatprep.subr.mxu0 %v659
    %714 = vmatpush1.msra.mxu0 %v658
    %715 = vmatprep.subr.mxu0 %v663
    %716 = vmatpush1.msra.mxu0 %v662
    %717 = vmatprep.subr.mxu0 %v667
    %718 = vmatpush1.msra.mxu0 %v666
    %719 = vmatprep.subr.mxu0 0.0
    %720 = vmatpush1.msra.mxu0 0.0
    %721 = vmatprep.subr.mxu0 0.0
    %722 = vmatpush1.msra.mxu0 0.0
    %723 = vmatprep.subr.mxu0 0.0
    %724 = vmatpush1.msra.mxu0 0.0
    %725 = vmatprep.subr.mxu0 0.0
    %726 = vmatpush1.msra.mxu0 0.0
    %727 = vmatprep.subr.mxu0 0.0
    %728 = vmatpush1.msra.mxu0 0.0
    %729 = vmatprep.subr.mxu0 0.0
    %730 = vmatpush1.msra.mxu0 0.0
    %731 = vmatprep.subr.mxu0 0.0
    %732 = vmatpush1.msra.mxu0 0.0
    %733 = vmatprep.subr.mxu0 0.0
    %734 = vmatpush1.msra.mxu0 0.0
    %735 = vmatprep.subr.mxu0 0.0
    %736 = vmatpush1.msra.mxu0 0.0
    %737 = vmatprep.subr.mxu0 0.0
    %738 = vmatpush1.msra.mxu0 0.0
    %739 = vmatprep.subr.mxu0 0.0
    %740 = vmatpush1.msra.mxu0 0.0
    %741 = vmatprep.subr.mxu0 0.0
    %742 = vmatpush1.msra.mxu0 0.0
    %743 = vmatprep.subr.mxu0 0.0
    %744 = vmatpush1.msra.mxu0 0.0
    %745 = vmatprep.subr.mxu0 0.0
    %746 = vmatpush1.msra.mxu0 0.0
    %747 = vmatprep.subr.mxu0 0.0
    %748 = vmatpush1.msra.mxu0 0.0
    %749 = vmatprep.subr.mxu0 0.0
    %750 = vmatpush1.msra.mxu0 0.0
    %751 = vmatprep.subr.mxu0 0.0
    %752 = vmatpush1.msra.mxu0 0.0
    %753 = vmatprep.subr.mxu0 0.0
    %754 = vmatpush1.msra.mxu0 0.0
    %755 = vmatprep.subr.mxu0 0.0
    %756 = vmatpush1.msra.mxu0 0.0
    %757 = vmatprep.subr.mxu0 0.0
    %758 = vmatpush1.msra.mxu0 0.0
    %759 = vmatprep.subr.mxu0 0.0
    %760 = vmatpush1.msra.mxu0 0.0
    %761 = vmatprep.subr.mxu0 0.0
    %762 = vmatpush1.msra.mxu0 0.0
    %763 = vmatprep.subr.mxu0 0.0
    %764 = vmatpush1.msra.mxu0 0.0
    %765 = vmatprep.subr.mxu0 0.0
    %766 = vmatpush1.msra.mxu0 0.0
    %767 = vmatprep.mubr.f32.mxu0 0.0
    %768 = vmatmul.mubr.f32.gmra.mrb[0].mxu0 %v692
    %v769 = vpop.f32.mrb[0].mxu0
    %v770 = vadd.f32 %v673, %v769
    %v771 = vpop.f32.mrb[0].mxu0
    %v772 = vadd.f32 %v673, %v771
    %773 = vmatprep.mubr.f32.mxu0 0.0
    %774 = vmatmul.mubr.f32.gmra.mrb[0].mxu0 %v695
    %v775 = vpop.f32.mrb[0].mxu0
    %v776 = vadd.f32 %v678, %v775
    %v777 = vpop.f32.mrb[0].mxu0
    %v778 = vadd.f32 %v678, %v777
    %779 = vmatprep.mubr.f32.mxu0 0.0
    %780 = vmatmul.mubr.f32.gmra.mrb[0].mxu0 %v698
    %v781 = vpop.f32.mrb[0].mxu0
    %v782 = vadd.f32 %v683, %v781
    %v783 = vpop.f32.mrb[0].mxu0
    %v784 = vadd.f32 %v683, %v783
    %785 = vmatprep.mubr.f32.mxu0 0.0
    %786 = vmatmul.mubr.f32.gmra.mrb[0].mxu0 %v701
    %v787 = vpop.f32.mrb[0].mxu0
    %v788 = vadd.f32 %v688, %v787
    %v789 = vpop.f32.mrb[0].mxu0
    %v790 = vadd.f32 %v688, %v789
    %791 = vdwg.mxu0
    %792 = vmatprep.subr.mxu0 %v641
    %793 = vmatpush1.msra.mxu0 %v640
    %794 = vmatprep.subr.mxu0 %v645
    %795 = vmatpush1.msra.mxu0 %v644
    %796 = vmatprep.subr.mxu0 %v649
    %797 = vmatpush1.msra.mxu0 %v648
    %798 = vmatprep.subr.mxu0 %v653
    %799 = vmatpush1.msra.mxu0 %v652
    %800 = vmatprep.subr.mxu0 %v657
    %801 = vmatpush1.msra.mxu0 %v656
    %802 = vmatprep.subr.mxu0 %v661
    %803 = vmatpush1.msra.mxu0 %v660
    %804 = vmatprep.subr.mxu0 %v665
    %805 = vmatpush1.msra.mxu0 %v664
    %806 = vmatprep.subr.mxu0 %v669
    %807 = vmatpush1.msra.mxu0 %v668
    %808 = vmatprep.subr.mxu0 0.0
    %809 = vmatpush1.msra.mxu0 0.0
    %810 = vmatprep.subr.mxu0 0.0
    %811 = vmatpush1.msra.mxu0 0.0
    %812 = vmatprep.subr.mxu0 0.0
    %813 = vmatpush1.msra.mxu0 0.0
    %814 = vmatprep.subr.mxu0 0.0
    %815 = vmatpush1.msra.mxu0 0.0
    %816 = vmatprep.subr.mxu0 0.0
    %817 = vmatpush1.msra.mxu0 0.0
    %818 = vmatprep.subr.mxu0 0.0
    %819 = vmatpush1.msra.mxu0 0.0
    %820 = vmatprep.subr.mxu0 0.0
    %821 = vmatpush1.msra.mxu0 0.0
    %822 = vmatprep.subr.mxu0 0.0
    %823 = vmatpush1.msra.mxu0 0.0
    %824 = vmatprep.subr.mxu0 0.0
    %825 = vmatpush1.msra.mxu0 0.0
    %826 = vmatprep.subr.mxu0 0.0
    %827 = vmatpush1.msra.mxu0 0.0
    %828 = vmatprep.subr.mxu0 0.0
    %829 = vmatpush1.msra.mxu0 0.0
    %830 = vmatprep.subr.mxu0 0.0
    %831 = vmatpush1.msra.mxu0 0.0
    %832 = vmatprep.subr.mxu0 0.0
    %833 = vmatpush1.msra.mxu0 0.0
    %834 = vmatprep.subr.mxu0 0.0
    %835 = vmatpush1.msra.mxu0 0.0
    %836 = vmatprep.subr.mxu0 0.0
    %837 = vmatpush1.msra.mxu0 0.0
    %838 = vmatprep.subr.mxu0 0.0
    %839 = vmatpush1.msra.mxu0 0.0
    %840 = vmatprep.subr.mxu0 0.0
    %841 = vmatpush1.msra.mxu0 0.0
    %842 = vmatprep.subr.mxu0 0.0
    %843 = vmatpush1.msra.mxu0 0.0
    %844 = vmatprep.subr.mxu0 0.0
    %845 = vmatpush1.msra.mxu0 0.0
    %846 = vmatprep.subr.mxu0 0.0
    %847 = vmatpush1.msra.mxu0 0.0
    %848 = vmatprep.subr.mxu0 0.0
    %849 = vmatpush1.msra.mxu0 0.0
    %850 = vmatprep.subr.mxu0 0.0
    %851 = vmatpush1.msra.mxu0 0.0
    %852 = vmatprep.subr.mxu0 0.0
    %853 = vmatpush1.msra.mxu0 0.0
    %854 = vmatprep.subr.mxu0 0.0
    %855 = vmatpush1.msra.mxu0 0.0
    %856 = vmatprep.mubr.f32.mxu0 0.0
    %857 = vmatmul.mubr.f32.gmra.mrb[0].mxu0 %v692
    %v858 = vpop.f32.mrb[0].mxu0
    %v859 = vadd.f32 %v673, %v858
    %v860 = vpop.f32.mrb[0].mxu0
    %v861 = vadd.f32 %v673, %v860
    %862 = vmatprep.mubr.f32.mxu0 0.0
    %863 = vmatmul.mubr.f32.gmra.mrb[0].mxu0 %v695
    %v864 = vpop.f32.mrb[0].mxu0
    %v865 = vadd.f32 %v678, %v864
    %v866 = vpop.f32.mrb[0].mxu0
    %v867 = vadd.f32 %v678, %v866
    %868 = vmatprep.mubr.f32.mxu0 0.0
    %869 = vmatmul.mubr.f32.gmra.mrb[0].mxu0 %v698
    %v870 = vpop.f32.mrb[0].mxu0
    %v871 = vadd.f32 %v683, %v870
    %v872 = vpop.f32.mrb[0].mxu0
    %v873 = vadd.f32 %v683, %v872
    %874 = vmatprep.mubr.f32.mxu0 0.0
    %875 = vmatmul.mubr.f32.gmra.mrb[0].mxu0 %v701
    %v876 = vpop.f32.mrb[0].mxu0
    %v877 = vadd.f32 %v688, %v876
    %v878 = vpop.f32.mrb[0].mxu0
    %v879 = vadd.f32 %v688, %v878
    %880 = vdwg.mxu0
    %v881 = vmax.f32 %v770, 0.0
    %v882 = vmax.f32 %v772, 0.0
    %v883 = vmax.f32 %v859, 0.0
    %v884 = vmax.f32 %v861, 0.0
    %v885 = vmax.f32 %v776, 0.0
    %v886 = vmax.f32 %v778, 0.0
    %v887 = vmax.f32 %v865, 0.0
    %v888 = vmax.f32 %v867, 0.0
    %v889 = vmax.f32 %v782, 0.0
    %v890 = vmax.f32 %v784, 0.0
    %v891 = vmax.f32 %v871, 0.0
    %v892 = vmax.f32 %v873, 0.0
    %v893 = vmax.f32 %v788, 0.0
    %v894 = vmax.f32 %v790, 0.0
    %v895 = vmax.f32 %v877, 0.0
    %v896 = vmax.f32 %v879, 0.0
    %898 = vset.pattern.permute.xlu0 0
    %899 = vperm.xlu0 %898, %v53
    %v900 = vpop.permute.xlu0 %899
    %903 = vset.pattern.permute.xlu0 0
    %904 = vperm.xlu0 %903, %v54
    %v905 = vpop.permute.xlu0 %904
    %908 = vset.pattern.permute.xlu0 0
    %909 = vperm.xlu0 %908, %v55
    %v910 = vpop.permute.xlu0 %909
    %913 = vset.pattern.permute.xlu0 0
    %914 = vperm.xlu0 %913, %v56
    %v915 = vpop.permute.xlu0 %914
    %v917 = vmul.f32 %v881, %v900
    %v918 = vmul.f32 %v882, %v900
    %v919 = vmul.f32 %v883, %v900
    %v920 = vmul.f32 %v884, %v900
    %v921 = vmul.f32 %v885, %v905
    %v922 = vmul.f32 %v886, %v905
    %v923 = vmul.f32 %v887, %v905
    %v924 = vmul.f32 %v888, %v905
    %v925 = vmul.f32 %v889, %v910
    %v926 = vmul.f32 %v890, %v910
    %v927 = vmul.f32 %v891, %v910
    %v928 = vmul.f32 %v892, %v910
    %v929 = vmul.f32 %v893, %v915
    %v930 = vmul.f32 %v894, %v915
    %v931 = vmul.f32 %v895, %v915
    %v932 = vmul.f32 %v896, %v915
    %v933 = vadd.f32 %v917, %v921
    %v934 = vadd.f32 %v933, %v925
    %v935 = vadd.f32 %v934, %v929
    %v936 = vrot.slane %v935, 4
    %v937 = vadd.f32 %v935, %v936
    %v938 = vrot.slane %v937, 2
    %v939 = vadd.f32 %v937, %v938
    %v940 = vrot.slane %v939, 1
    %v941 = vadd.f32 %v939, %v940
    %v942 = vadd.f32 %v918, %v922
    %v943 = vadd.f32 %v942, %v926
    %v944 = vadd.f32 %v943, %v930
    %v945 = vrot.slane %v944, 4
    %v946 = vadd.f32 %v944, %v945
    %v947 = vrot.slane %v946, 2
    %v948 = vadd.f32 %v946, %v947
    %v949 = vrot.slane %v948, 1
    %v950 = vadd.f32 %v948, %v949
    %v951 = vadd.f32 %v919, %v923
    %v952 = vadd.f32 %v951, %v927
    %v953 = vadd.f32 %v952, %v931
    %v954 = vrot.slane %v953, 4
    %v955 = vadd.f32 %v953, %v954
    %v956 = vrot.slane %v955, 2
    %v957 = vadd.f32 %v955, %v956
    %v958 = vrot.slane %v957, 1
    %v959 = vadd.f32 %v957, %v958
    %v960 = vadd.f32 %v920, %v924
    %v961 = vadd.f32 %v960, %v928
    %v962 = vadd.f32 %v961, %v932
    %v963 = vrot.slane %v962, 4
    %v964 = vadd.f32 %v962, %v963
    %v965 = vrot.slane %v964, 2
    %v966 = vadd.f32 %v964, %v965
    %v967 = vrot.slane %v966, 1
    %v968 = vadd.f32 %v966, %v967
    %970 = vset.pattern.permute.xlu0 0
    %971 = vperm.xlu0 %970, %v57
    %v972 = vpop.permute.xlu0 %971
    %v974 = vlaneseq
    %v975 = vshrl.u32 %v974, 7
    %v976 = vsub.s32 0, %v975
    %v977 = vrot.slane %v972, %v976
    %v978 = vadd.f32 %v941, %v977
    %v979 = vadd.f32 %v950, %v977
    %v980 = vadd.f32 %v959, %v977
    %v981 = vadd.f32 %v968, %v977
    %v986 = vcombine.low %v978, %v979
    %v987 = vcombine.low %v980, %v981
    %v989 = vunpack.c.l.s4 1966171168
    %v990 = vunpack.c.0.s8 %v989
    %v991 = vlaneseq
    %v992 = vshrl.u32 %v991, 7
    %v993 = vsub.s32 %v990, %v992
    %v994 = vrot.slane %v986, %v993
    %v996 = vunpack.c.l.s4 1966171168
    %v997 = vunpack.c.0.s8 %v996
    %v998 = vlaneseq
    %v999 = vshrl.u32 %v998, 7
    %v1000 = vsub.s32 %v997, %v999
    %v1001 = vrot.slane %v987, %v1000
    %v1002 = vcombine.low %v994, %v1001
    %v1004 = vunpack.c.l.s4 1966171168
    %v1005 = vunpack.c.0.s8 %v1004
    %v1006 = vlaneseq
    %v1007 = vshrl.u32 %v1006, 7
    %v1008 = vsub.s32 %v1005, %v1007
    %v1009 = vrot.slane %v1002, %v1008
    %v1011 = vlaneseq
    %vm1012 = vcmp.ge.s32.totalorder %v1011, 0
    %vm1013 = vcmp.lt.s32.totalorder %v1011, 512
    %vm1014 = vmand %vm1012, %vm1013
    %1015 = vst.msk [vmem:[#allocation3] sm:$0xf] %vm1014, %v1009
    %v1016 = vld [vmem:[%s0 + $0x10] sm:$0xff]
    %v1017 = vld [vmem:[%s0 + $0x18] sm:$0xff]
    %v1020 = vlaneseq
    %v1021 = vshrl.u32 %v1020, 7
    %v1022 = vsub.s32 0, %v1021
    %v1023 = vrot.slane %v1016, %v1022
    %v1024 = vlaneseq
    %v1025 = vshrl.u32 %v1024, 7
    %v1026 = vsub.s32 4, %v1025
    %v1027 = vrot.slane %v1016, %v1026
    %v1028 = vlaneseq
    %v1029 = vshrl.u32 %v1028, 7
    %v1030 = vsub.s32 0, %v1029
    %v1031 = vrot.slane %v1017, %v1030
    %v1032 = vlaneseq
    %v1033 = vshrl.u32 %v1032, 7
    %v1034 = vsub.s32 4, %v1033
    %v1035 = vrot.slane %v1017, %v1034
    %v1040 = vlaneseq
    %v1041 = vshrl.u32 %v1040, 7
    %v1042 = vsub.s32 0, %v1041
    %v1043 = vrot.slane %v1023, %v1042
    %v1044 = vlaneseq
    %v1045 = vshrl.u32 %v1044, 7
    %v1046 = vsub.s32 0, %v1045
    %v1047 = vrot.slane %v1027, %v1046
    %v1048 = vlaneseq
    %v1049 = vshrl.u32 %v1048, 7
    %v1050 = vsub.s32 0, %v1049
    %v1051 = vrot.slane %v1031, %v1050
    %v1052 = vlaneseq
    %v1053 = vshrl.u32 %v1052, 7
    %v1054 = vsub.s32 0, %v1053
    %v1055 = vrot.slane %v1035, %v1054
    %v1056 = vmul.f32 %v63, %v1043
    %v1057 = vmul.f32 %v63, %v1047
    %v1058 = vmul.f32 %v63, %v1051
    %v1059 = vmul.f32 %v63, %v1055
    %v1060 = vmul.f32 %v68, %v1043
    %v1061 = vmul.f32 %v68, %v1047
    %v1062 = vmul.f32 %v68, %v1051
    %v1063 = vmul.f32 %v68, %v1055
    %v1064 = vmul.f32 %v73, %v1043
    %v1065 = vmul.f32 %v73, %v1047
    %v1066 = vmul.f32 %v73, %v1051
    %v1067 = vmul.f32 %v73, %v1055
    %v1068 = vmul.f32 %v78, %v1043
    %v1069 = vmul.f32 %v78, %v1047
    %v1070 = vmul.f32 %v78, %v1051
    %v1071 = vmul.f32 %v78, %v1055
    %v1072 = vmul.f32 %v83, %v1043
    %v1073 = vmul.f32 %v83, %v1047
    %v1074 = vmul.f32 %v83, %v1051
    %v1075 = vmul.f32 %v83, %v1055
    %v1076 = vmul.f32 %v88, %v1043
    %v1077 = vmul.f32 %v88, %v1047
    %v1078 = vmul.f32 %v88, %v1051
    %v1079 = vmul.f32 %v88, %v1055
    %v1080 = vmul.f32 %v93, %v1043
    %v1081 = vmul.f32 %v93, %v1047
    %v1082 = vmul.f32 %v93, %v1051
    %v1083 = vmul.f32 %v93, %v1055
    %v1084 = vmul.f32 %v98, %v1043
    %v1085 = vmul.f32 %v98, %v1047
    %v1086 = vmul.f32 %v98, %v1051
    %v1087 = vmul.f32 %v98, %v1055
    %v1088 = vlaneseq
    %v1089 = vshrl.u32 %v1088, 7
    %v1090 = vsub.s32 1, %v1089
    %v1091 = vrot.slane %v1016, %v1090
    %v1092 = vlaneseq
    %v1093 = vshrl.u32 %v1092, 7
    %v1094 = vsub.s32 5, %v1093
    %v1095 = vrot.slane %v1016, %v1094
    %v1096 = vlaneseq
    %v1097 = vshrl.u32 %v1096, 7
    %v1098 = vsub.s32 1, %v1097
    %v1099 = vrot.slane %v1017, %v1098
    %v1100 = vlaneseq
    %v1101 = vshrl.u32 %v1100, 7
    %v1102 = vsub.s32 5, %v1101
    %v1103 = vrot.slane %v1017, %v1102
    %v1108 = vlaneseq
    %v1109 = vshrl.u32 %v1108, 7
    %v1110 = vsub.s32 1, %v1109
    %v1111 = vrot.slane %v1091, %v1110
    %v1112 = vlaneseq
    %v1113 = vshrl.u32 %v1112, 7
    %v1114 = vsub.s32 1, %v1113
    %v1115 = vrot.slane %v1095, %v1114
    %v1116 = vlaneseq
    %v1117 = vshrl.u32 %v1116, 7
    %v1118 = vsub.s32 1, %v1117
    %v1119 = vrot.slane %v1099, %v1118
    %v1120 = vlaneseq
    %v1121 = vshrl.u32 %v1120, 7
    %v1122 = vsub.s32 1, %v1121
    %v1123 = vrot.slane %v1103, %v1122
    %v1124 = vmul.f32 %v172, %v1111
    %v1125 = vmul.f32 %v172, %v1115
    %v1126 = vmul.f32 %v172, %v1119
    %v1127 = vmul.f32 %v172, %v1123
    %v1128 = vmul.f32 %v176, %v1111
    %v1129 = vmul.f32 %v176, %v1115
    %v1130 = vmul.f32 %v176, %v1119
    %v1131 = vmul.f32 %v176, %v1123
    %v1132 = vmul.f32 %v180, %v1111
    %v1133 = vmul.f32 %v180, %v1115
    %v1134 = vmul.f32 %v180, %v1119
    %v1135 = vmul.f32 %v180, %v1123
    %v1136 = vmul.f32 %v184, %v1111
    %v1137 = vmul.f32 %v184, %v1115
    %v1138 = vmul.f32 %v184, %v1119
    %v1139 = vmul.f32 %v184, %v1123
    %v1140 = vmul.f32 %v188, %v1111
    %v1141 = vmul.f32 %v188, %v1115
    %v1142 = vmul.f32 %v188, %v1119
    %v1143 = vmul.f32 %v188, %v1123
    %v1144 = vmul.f32 %v192, %v1111
    %v1145 = vmul.f32 %v192, %v1115
    %v1146 = vmul.f32 %v192, %v1119
    %v1147 = vmul.f32 %v192, %v1123
    %v1148 = vmul.f32 %v196, %v1111
    %v1149 = vmul.f32 %v196, %v1115
    %v1150 = vmul.f32 %v196, %v1119
    %v1151 = vmul.f32 %v196, %v1123
    %v1152 = vmul.f32 %v200, %v1111
    %v1153 = vmul.f32 %v200, %v1115
    %v1154 = vmul.f32 %v200, %v1119
    %v1155 = vmul.f32 %v200, %v1123
    %v1156 = vadd.f32 %v1056, %v1124
    %v1157 = vadd.f32 %v1057, %v1125
    %v1158 = vadd.f32 %v1058, %v1126
    %v1159 = vadd.f32 %v1059, %v1127
    %v1160 = vadd.f32 %v1060, %v1128
    %v1161 = vadd.f32 %v1061, %v1129
    %v1162 = vadd.f32 %v1062, %v1130
    %v1163 = vadd.f32 %v1063, %v1131
    %v1164 = vadd.f32 %v1064, %v1132
    %v1165 = vadd.f32 %v1065, %v1133
    %v1166 = vadd.f32 %v1066, %v1134
    %v1167 = vadd.f32 %v1067, %v1135
    %v1168 = vadd.f32 %v1068, %v1136
    %v1169 = vadd.f32 %v1069, %v1137
    %v1170 = vadd.f32 %v1070, %v1138
    %v1171 = vadd.f32 %v1071, %v1139
    %v1172 = vadd.f32 %v1072, %v1140
    %v1173 = vadd.f32 %v1073, %v1141
    %v1174 = vadd.f32 %v1074, %v1142
    %v1175 = vadd.f32 %v1075, %v1143
    %v1176 = vadd.f32 %v1076, %v1144
    %v1177 = vadd.f32 %v1077, %v1145
    %v1178 = vadd.f32 %v1078, %v1146
    %v1179 = vadd.f32 %v1079, %v1147
    %v1180 = vadd.f32 %v1080, %v1148
    %v1181 = vadd.f32 %v1081, %v1149
    %v1182 = vadd.f32 %v1082, %v1150
    %v1183 = vadd.f32 %v1083, %v1151
    %v1184 = vadd.f32 %v1084, %v1152
    %v1185 = vadd.f32 %v1085, %v1153
    %v1186 = vadd.f32 %v1086, %v1154
    %v1187 = vadd.f32 %v1087, %v1155
    %v1188 = vlaneseq
    %v1189 = vshrl.u32 %v1188, 7
    %v1190 = vsub.s32 2, %v1189
    %v1191 = vrot.slane %v1016, %v1190
    %v1192 = vlaneseq
    %v1193 = vshrl.u32 %v1192, 7
    %v1194 = vsub.s32 6, %v1193
    %v1195 = vrot.slane %v1016, %v1194
    %v1196 = vlaneseq
    %v1197 = vshrl.u32 %v1196, 7
    %v1198 = vsub.s32 2, %v1197
    %v1199 = vrot.slane %v1017, %v1198
    %v1200 = vlaneseq
    %v1201 = vshrl.u32 %v1200, 7
    %v1202 = vsub.s32 6, %v1201
    %v1203 = vrot.slane %v1017, %v1202
    %v1208 = vlaneseq
    %v1209 = vshrl.u32 %v1208, 7
    %v1210 = vsub.s32 2, %v1209
    %v1211 = vrot.slane %v1191, %v1210
    %v1212 = vlaneseq
    %v1213 = vshrl.u32 %v1212, 7
    %v1214 = vsub.s32 2, %v1213
    %v1215 = vrot.slane %v1195, %v1214
    %v1216 = vlaneseq
    %v1217 = vshrl.u32 %v1216, 7
    %v1218 = vsub.s32 2, %v1217
    %v1219 = vrot.slane %v1199, %v1218
    %v1220 = vlaneseq
    %v1221 = vshrl.u32 %v1220, 7
    %v1222 = vsub.s32 2, %v1221
    %v1223 = vrot.slane %v1203, %v1222
    %v1224 = vmul.f32 %v304, %v1211
    %v1225 = vmul.f32 %v304, %v1215
    %v1226 = vmul.f32 %v304, %v1219
    %v1227 = vmul.f32 %v304, %v1223
    %v1228 = vmul.f32 %v308, %v1211
    %v1229 = vmul.f32 %v308, %v1215
    %v1230 = vmul.f32 %v308, %v1219
    %v1231 = vmul.f32 %v308, %v1223
    %v1232 = vmul.f32 %v312, %v1211
    %v1233 = vmul.f32 %v312, %v1215
    %v1234 = vmul.f32 %v312, %v1219
    %v1235 = vmul.f32 %v312, %v1223
    %v1236 = vmul.f32 %v316, %v1211
    %v1237 = vmul.f32 %v316, %v1215
    %v1238 = vmul.f32 %v316, %v1219
    %v1239 = vmul.f32 %v316, %v1223
    %v1240 = vmul.f32 %v320, %v1211
    %v1241 = vmul.f32 %v320, %v1215
    %v1242 = vmul.f32 %v320, %v1219
    %v1243 = vmul.f32 %v320, %v1223
    %v1244 = vmul.f32 %v324, %v1211
    %v1245 = vmul.f32 %v324, %v1215
    %v1246 = vmul.f32 %v324, %v1219
    %v1247 = vmul.f32 %v324, %v1223
    %v1248 = vmul.f32 %v328, %v1211
    %v1249 = vmul.f32 %v328, %v1215
    %v1250 = vmul.f32 %v328, %v1219
    %v1251 = vmul.f32 %v328, %v1223
    %v1252 = vmul.f32 %v332, %v1211
    %v1253 = vmul.f32 %v332, %v1215
    %v1254 = vmul.f32 %v332, %v1219
    %v1255 = vmul.f32 %v332, %v1223
    %v1256 = vadd.f32 %v1156, %v1224
    %v1257 = vadd.f32 %v1157, %v1225
    %v1258 = vadd.f32 %v1158, %v1226
    %v1259 = vadd.f32 %v1159, %v1227
    %v1260 = vadd.f32 %v1160, %v1228
    %v1261 = vadd.f32 %v1161, %v1229
    %v1262 = vadd.f32 %v1162, %v1230
    %v1263 = vadd.f32 %v1163, %v1231
    %v1264 = vadd.f32 %v1164, %v1232
    %v1265 = vadd.f32 %v1165, %v1233
    %v1266 = vadd.f32 %v1166, %v1234
    %v1267 = vadd.f32 %v1167, %v1235
    %v1268 = vadd.f32 %v1168, %v1236
    %v1269 = vadd.f32 %v1169, %v1237
    %v1270 = vadd.f32 %v1170, %v1238
    %v1271 = vadd.f32 %v1171, %v1239
    %v1272 = vadd.f32 %v1172, %v1240
    %v1273 = vadd.f32 %v1173, %v1241
    %v1274 = vadd.f32 %v1174, %v1242
    %v1275 = vadd.f32 %v1175, %v1243
    %v1276 = vadd.f32 %v1176, %v1244
    %v1277 = vadd.f32 %v1177, %v1245
    %v1278 = vadd.f32 %v1178, %v1246
    %v1279 = vadd.f32 %v1179, %v1247
    %v1280 = vadd.f32 %v1180, %v1248
    %v1281 = vadd.f32 %v1181, %v1249
    %v1282 = vadd.f32 %v1182, %v1250
    %v1283 = vadd.f32 %v1183, %v1251
    %v1284 = vadd.f32 %v1184, %v1252
    %v1285 = vadd.f32 %v1185, %v1253
    %v1286 = vadd.f32 %v1186, %v1254
    %v1287 = vadd.f32 %v1187, %v1255
    %v1288 = vlaneseq
    %v1289 = vshrl.u32 %v1288, 7
    %v1290 = vsub.s32 3, %v1289
    %v1291 = vrot.slane %v1016, %v1290
    %v1292 = vlaneseq
    %v1293 = vshrl.u32 %v1292, 7
    %v1294 = vsub.s32 7, %v1293
    %v1295 = vrot.slane %v1016, %v1294
    %v1296 = vlaneseq
    %v1297 = vshrl.u32 %v1296, 7
    %v1298 = vsub.s32 3, %v1297
    %v1299 = vrot.slane %v1017, %v1298
    %v1300 = vlaneseq
    %v1301 = vshrl.u32 %v1300, 7
    %v1302 = vsub.s32 7, %v1301
    %v1303 = vrot.slane %v1017, %v1302
    %v1308 = vlaneseq
    %v1309 = vshrl.u32 %v1308, 7
    %v1310 = vsub.s32 3, %v1309
    %v1311 = vrot.slane %v1291, %v1310
    %v1312 = vlaneseq
    %v1313 = vshrl.u32 %v1312, 7
    %v1314 = vsub.s32 3, %v1313
    %v1315 = vrot.slane %v1295, %v1314
    %v1316 = vlaneseq
    %v1317 = vshrl.u32 %v1316, 7
    %v1318 = vsub.s32 3, %v1317
    %v1319 = vrot.slane %v1299, %v1318
    %v1320 = vlaneseq
    %v1321 = vshrl.u32 %v1320, 7
    %v1322 = vsub.s32 3, %v1321
    %v1323 = vrot.slane %v1303, %v1322
    %v1324 = vmul.f32 %v436, %v1311
    %v1325 = vmul.f32 %v436, %v1315
    %v1326 = vmul.f32 %v436, %v1319
    %v1327 = vmul.f32 %v436, %v1323
    %v1328 = vmul.f32 %v440, %v1311
    %v1329 = vmul.f32 %v440, %v1315
    %v1330 = vmul.f32 %v440, %v1319
    %v1331 = vmul.f32 %v440, %v1323
    %v1332 = vmul.f32 %v444, %v1311
    %v1333 = vmul.f32 %v444, %v1315
    %v1334 = vmul.f32 %v444, %v1319
    %v1335 = vmul.f32 %v444, %v1323
    %v1336 = vmul.f32 %v448, %v1311
    %v1337 = vmul.f32 %v448, %v1315
    %v1338 = vmul.f32 %v448, %v1319
    %v1339 = vmul.f32 %v448, %v1323
    %v1340 = vmul.f32 %v452, %v1311
    %v1341 = vmul.f32 %v452, %v1315
    %v1342 = vmul.f32 %v452, %v1319
    %v1343 = vmul.f32 %v452, %v1323
    %v1344 = vmul.f32 %v456, %v1311
    %v1345 = vmul.f32 %v456, %v1315
    %v1346 = vmul.f32 %v456, %v1319
    %v1347 = vmul.f32 %v456, %v1323
    %v1348 = vmul.f32 %v460, %v1311
    %v1349 = vmul.f32 %v460, %v1315
    %v1350 = vmul.f32 %v460, %v1319
    %v1351 = vmul.f32 %v460, %v1323
    %v1352 = vmul.f32 %v464, %v1311
    %v1353 = vmul.f32 %v464, %v1315
    %v1354 = vmul.f32 %v464, %v1319
    %v1355 = vmul.f32 %v464, %v1323
    %v1356 = vadd.f32 %v1256, %v1324
    %v1357 = vadd.f32 %v1257, %v1325
    %v1358 = vadd.f32 %v1258, %v1326
    %v1359 = vadd.f32 %v1259, %v1327
    %v1360 = vadd.f32 %v1260, %v1328
    %v1361 = vadd.f32 %v1261, %v1329
    %v1362 = vadd.f32 %v1262, %v1330
    %v1363 = vadd.f32 %v1263, %v1331
    %v1364 = vadd.f32 %v1264, %v1332
    %v1365 = vadd.f32 %v1265, %v1333
    %v1366 = vadd.f32 %v1266, %v1334
    %v1367 = vadd.f32 %v1267, %v1335
    %v1368 = vadd.f32 %v1268, %v1336
    %v1369 = vadd.f32 %v1269, %v1337
    %v1370 = vadd.f32 %v1270, %v1338
    %v1371 = vadd.f32 %v1271, %v1339
    %v1372 = vadd.f32 %v1272, %v1340
    %v1373 = vadd.f32 %v1273, %v1341
    %v1374 = vadd.f32 %v1274, %v1342
    %v1375 = vadd.f32 %v1275, %v1343
    %v1376 = vadd.f32 %v1276, %v1344
    %v1377 = vadd.f32 %v1277, %v1345
    %v1378 = vadd.f32 %v1278, %v1346
    %v1379 = vadd.f32 %v1279, %v1347
    %v1380 = vadd.f32 %v1280, %v1348
    %v1381 = vadd.f32 %v1281, %v1349
    %v1382 = vadd.f32 %v1282, %v1350
    %v1383 = vadd.f32 %v1283, %v1351
    %v1384 = vadd.f32 %v1284, %v1352
    %v1385 = vadd.f32 %v1285, %v1353
    %v1386 = vadd.f32 %v1286, %v1354
    %v1387 = vadd.f32 %v1287, %v1355
    %v1388 = vadd.f32 %v1356, %v569
    %v1389 = vadd.f32 %v1357, %v569
    %v1390 = vadd.f32 %v1358, %v569
    %v1391 = vadd.f32 %v1359, %v569
    %v1392 = vadd.f32 %v1360, %v574
    %v1393 = vadd.f32 %v1361, %v574
    %v1394 = vadd.f32 %v1362, %v574
    %v1395 = vadd.f32 %v1363, %v574
    %v1396 = vadd.f32 %v1364, %v579
    %v1397 = vadd.f32 %v1365, %v579
    %v1398 = vadd.f32 %v1366, %v579
    %v1399 = vadd.f32 %v1367, %v579
    %v1400 = vadd.f32 %v1368, %v584
    %v1401 = vadd.f32 %v1369, %v584
    %v1402 = vadd.f32 %v1370, %v584
    %v1403 = vadd.f32 %v1371, %v584
    %v1404 = vadd.f32 %v1372, %v589
    %v1405 = vadd.f32 %v1373, %v589
    %v1406 = vadd.f32 %v1374, %v589
    %v1407 = vadd.f32 %v1375, %v589
    %v1408 = vadd.f32 %v1376, %v594
    %v1409 = vadd.f32 %v1377, %v594
    %v1410 = vadd.f32 %v1378, %v594
    %v1411 = vadd.f32 %v1379, %v594
    %v1412 = vadd.f32 %v1380, %v599
    %v1413 = vadd.f32 %v1381, %v599
    %v1414 = vadd.f32 %v1382, %v599
    %v1415 = vadd.f32 %v1383, %v599
    %v1416 = vadd.f32 %v1384, %v604
    %v1417 = vadd.f32 %v1385, %v604
    %v1418 = vadd.f32 %v1386, %v604
    %v1419 = vadd.f32 %v1387, %v604
    %v1420 = vmax.f32 %v1388, 0.0
    %v1421 = vmax.f32 %v1389, 0.0
    %v1422 = vmax.f32 %v1390, 0.0
    %v1423 = vmax.f32 %v1391, 0.0
    %v1424 = vmax.f32 %v1392, 0.0
    %v1425 = vmax.f32 %v1393, 0.0
    %v1426 = vmax.f32 %v1394, 0.0
    %v1427 = vmax.f32 %v1395, 0.0
    %v1428 = vmax.f32 %v1396, 0.0
    %v1429 = vmax.f32 %v1397, 0.0
    %v1430 = vmax.f32 %v1398, 0.0
    %v1431 = vmax.f32 %v1399, 0.0
    %v1432 = vmax.f32 %v1400, 0.0
    %v1433 = vmax.f32 %v1401, 0.0
    %v1434 = vmax.f32 %v1402, 0.0
    %v1435 = vmax.f32 %v1403, 0.0
    %v1436 = vmax.f32 %v1404, 0.0
    %v1437 = vmax.f32 %v1405, 0.0
    %v1438 = vmax.f32 %v1406, 0.0
    %v1439 = vmax.f32 %v1407, 0.0
    %v1440 = vmax.f32 %v1408, 0.0
    %v1441 = vmax.f32 %v1409, 0.0
    %v1442 = vmax.f32 %v1410, 0.0
    %v1443 = vmax.f32 %v1411, 0.0
    %v1444 = vmax.f32 %v1412, 0.0
    %v1445 = vmax.f32 %v1413, 0.0
    %v1446 = vmax.f32 %v1414, 0.0
    %v1447 = vmax.f32 %v1415, 0.0
    %v1448 = vmax.f32 %v1416, 0.0
    %v1449 = vmax.f32 %v1417, 0.0
    %v1450 = vmax.f32 %v1418, 0.0
    %v1451 = vmax.f32 %v1419, 0.0
    %1452 = vmatprep.subr.mxu0 %v1421
    %1453 = vmatpush1.msra.mxu0 %v1420
    %1454 = vmatprep.subr.mxu0 %v1425
    %1455 = vmatpush1.msra.mxu0 %v1424
    %1456 = vmatprep.subr.mxu0 %v1429
    %1457 = vmatpush1.msra.mxu0 %v1428
    %1458 = vmatprep.subr.mxu0 %v1433
    %1459 = vmatpush1.msra.mxu0 %v1432
    %1460 = vmatprep.subr.mxu0 %v1437
    %1461 = vmatpush1.msra.mxu0 %v1436
    %1462 = vmatprep.subr.mxu0 %v1441
    %1463 = vmatpush1.msra.mxu0 %v1440
    %1464 = vmatprep.subr.mxu0 %v1445
    %1465 = vmatpush1.msra.mxu0 %v1444
    %1466 = vmatprep.subr.mxu0 %v1449
    %1467 = vmatpush1.msra.mxu0 %v1448
    %1468 = vmatprep.subr.mxu0 0.0
    %1469 = vmatpush1.msra.mxu0 0.0
    %1470 = vmatprep.subr.mxu0 0.0
    %1471 = vmatpush1.msra.mxu0 0.0
    %1472 = vmatprep.subr.mxu0 0.0
    %1473 = vmatpush1.msra.mxu0 0.0
    %1474 = vmatprep.subr.mxu0 0.0
    %1475 = vmatpush1.msra.mxu0 0.0
    %1476 = vmatprep.subr.mxu0 0.0
    %1477 = vmatpush1.msra.mxu0 0.0
    %1478 = vmatprep.subr.mxu0 0.0
    %1479 = vmatpush1.msra.mxu0 0.0
    %1480 = vmatprep.subr.mxu0 0.0
    %1481 = vmatpush1.msra.mxu0 0.0
    %1482 = vmatprep.subr.mxu0 0.0
    %1483 = vmatpush1.msra.mxu0 0.0
    %1484 = vmatprep.subr.mxu0 0.0
    %1485 = vmatpush1.msra.mxu0 0.0
    %1486 = vmatprep.subr.mxu0 0.0
    %1487 = vmatpush1.msra.mxu0 0.0
    %1488 = vmatprep.subr.mxu0 0.0
    %1489 = vmatpush1.msra.mxu0 0.0
    %1490 = vmatprep.subr.mxu0 0.0
    %1491 = vmatpush1.msra.mxu0 0.0
    %1492 = vmatprep.subr.mxu0 0.0
    %1493 = vmatpush1.msra.mxu0 0.0
    %1494 = vmatprep.subr.mxu0 0.0
    %1495 = vmatpush1.msra.mxu0 0.0
    %1496 = vmatprep.subr.mxu0 0.0
    %1497 = vmatpush1.msra.mxu0 0.0
    %1498 = vmatprep.subr.mxu0 0.0
    %1499 = vmatpush1.msra.mxu0 0.0
    %1500 = vmatprep.subr.mxu0 0.0
    %1501 = vmatpush1.msra.mxu0 0.0
    %1502 = vmatprep.subr.mxu0 0.0
    %1503 = vmatpush1.msra.mxu0 0.0
    %1504 = vmatprep.subr.mxu0 0.0
    %1505 = vmatpush1.msra.mxu0 0.0
    %1506 = vmatprep.subr.mxu0 0.0
    %1507 = vmatpush1.msra.mxu0 0.0
    %1508 = vmatprep.subr.mxu0 0.0
    %1509 = vmatpush1.msra.mxu0 0.0
    %1510 = vmatprep.subr.mxu0 0.0
    %1511 = vmatpush1.msra.mxu0 0.0
    %1512 = vmatprep.subr.mxu0 0.0
    %1513 = vmatpush1.msra.mxu0 0.0
    %1514 = vmatprep.subr.mxu0 0.0
    %1515 = vmatpush1.msra.mxu0 0.0
    %1516 = vmatprep.mubr.f32.mxu0 0.0
    %1517 = vmatmul.mubr.f32.gmra.mrb[0].mxu0 %v692
    %v1518 = vpop.f32.mrb[0].mxu0
    %v1519 = vadd.f32 %v673, %v1518
    %v1520 = vpop.f32.mrb[0].mxu0
    %v1521 = vadd.f32 %v673, %v1520
    %1522 = vmatprep.mubr.f32.mxu0 0.0
    %1523 = vmatmul.mubr.f32.gmra.mrb[0].mxu0 %v695
    %v1524 = vpop.f32.mrb[0].mxu0
    %v1525 = vadd.f32 %v678, %v1524
    %v1526 = vpop.f32.mrb[0].mxu0
    %v1527 = vadd.f32 %v678, %v1526
    %1528 = vmatprep.mubr.f32.mxu0 0.0
    %1529 = vmatmul.mubr.f32.gmra.mrb[0].mxu0 %v698
    %v1530 = vpop.f32.mrb[0].mxu0
    %v1531 = vadd.f32 %v683, %v1530
    %v1532 = vpop.f32.mrb[0].mxu0
    %v1533 = vadd.f32 %v683, %v1532
    %1534 = vmatprep.mubr.f32.mxu0 0.0
    %1535 = vmatmul.mubr.f32.gmra.mrb[0].mxu0 %v701
    %v1536 = vpop.f32.mrb[0].mxu0
    %v1537 = vadd.f32 %v688, %v1536
    %v1538 = vpop.f32.mrb[0].mxu0
    %v1539 = vadd.f32 %v688, %v1538
    %1540 = vdwg.mxu0
    %1541 = vmatprep.subr.mxu0 %v1423
    %1542 = vmatpush1.msra.mxu0 %v1422
    %1543 = vmatprep.subr.mxu0 %v1427
    %1544 = vmatpush1.msra.mxu0 %v1426
    %1545 = vmatprep.subr.mxu0 %v1431
    %1546 = vmatpush1.msra.mxu0 %v1430
    %1547 = vmatprep.subr.mxu0 %v1435
    %1548 = vmatpush1.msra.mxu0 %v1434
    %1549 = vmatprep.subr.mxu0 %v1439
    %1550 = vmatpush1.msra.mxu0 %v1438
    %1551 = vmatprep.subr.mxu0 %v1443
    %1552 = vmatpush1.msra.mxu0 %v1442
    %1553 = vmatprep.subr.mxu0 %v1447
    %1554 = vmatpush1.msra.mxu0 %v1446
    %1555 = vmatprep.subr.mxu0 %v1451
    %1556 = vmatpush1.msra.mxu0 %v1450
    %1557 = vmatprep.subr.mxu0 0.0
    %1558 = vmatpush1.msra.mxu0 0.0
    %1559 = vmatprep.subr.mxu0 0.0
    %1560 = vmatpush1.msra.mxu0 0.0
    %1561 = vmatprep.subr.mxu0 0.0
    %1562 = vmatpush1.msra.mxu0 0.0
    %1563 = vmatprep.subr.mxu0 0.0
    %1564 = vmatpush1.msra.mxu0 0.0
    %1565 = vmatprep.subr.mxu0 0.0
    %1566 = vmatpush1.msra.mxu0 0.0
    %1567 = vmatprep.subr.mxu0 0.0
    %1568 = vmatpush1.msra.mxu0 0.0
    %1569 = vmatprep.subr.mxu0 0.0
    %1570 = vmatpush1.msra.mxu0 0.0
    %1571 = vmatprep.subr.mxu0 0.0
    %1572 = vmatpush1.msra.mxu0 0.0
    %1573 = vmatprep.subr.mxu0 0.0
    %1574 = vmatpush1.msra.mxu0 0.0
    %1575 = vmatprep.subr.mxu0 0.0
    %1576 = vmatpush1.msra.mxu0 0.0
    %1577 = vmatprep.subr.mxu0 0.0
    %1578 = vmatpush1.msra.mxu0 0.0
    %1579 = vmatprep.subr.mxu0 0.0
    %1580 = vmatpush1.msra.mxu0 0.0
    %1581 = vmatprep.subr.mxu0 0.0
    %1582 = vmatpush1.msra.mxu0 0.0
    %1583 = vmatprep.subr.mxu0 0.0
    %1584 = vmatpush1.msra.mxu0 0.0
    %1585 = vmatprep.subr.mxu0 0.0
    %1586 = vmatpush1.msra.mxu0 0.0
    %1587 = vmatprep.subr.mxu0 0.0
    %1588 = vmatpush1.msra.mxu0 0.0
    %1589 = vmatprep.subr.mxu0 0.0
    %1590 = vmatpush1.msra.mxu0 0.0
    %1591 = vmatprep.subr.mxu0 0.0
    %1592 = vmatpush1.msra.mxu0 0.0
    %1593 = vmatprep.subr.mxu0 0.0
    %1594 = vmatpush1.msra.mxu0 0.0
    %1595 = vmatprep.subr.mxu0 0.0
    %1596 = vmatpush1.msra.mxu0 0.0
    %1597 = vmatprep.subr.mxu0 0.0
    %1598 = vmatpush1.msra.mxu0 0.0
    %1599 = vmatprep.subr.mxu0 0.0
    %1600 = vmatpush1.msra.mxu0 0.0
    %1601 = vmatprep.subr.mxu0 0.0
    %1602 = vmatpush1.msra.mxu0 0.0
    %1603 = vmatprep.subr.mxu0 0.0
    %1604 = vmatpush1.msra.mxu0 0.0
    %1605 = vmatprep.mubr.f32.mxu0 0.0
    %1606 = vmatmul.mubr.f32.gmra.mrb[0].mxu0 %v692
    %v1607 = vpop.f32.mrb[0].mxu0
    %v1608 = vadd.f32 %v673, %v1607
    %v1609 = vpop.f32.mrb[0].mxu0
    %v1610 = vadd.f32 %v673, %v1609
    %1611 = vmatprep.mubr.f32.mxu0 0.0
    %1612 = vmatmul.mubr.f32.gmra.mrb[0].mxu0 %v695
    %v1613 = vpop.f32.mrb[0].mxu0
    %v1614 = vadd.f32 %v678, %v1613
    %v1615 = vpop.f32.mrb[0].mxu0
    %v1616 = vadd.f32 %v678, %v1615
    %1617 = vmatprep.mubr.f32.mxu0 0.0
    %1618 = vmatmul.mubr.f32.gmra.mrb[0].mxu0 %v698
    %v1619 = vpop.f32.mrb[0].mxu0
    %v1620 = vadd.f32 %v683, %v1619
    %v1621 = vpop.f32.mrb[0].mxu0
    %v1622 = vadd.f32 %v683, %v1621
    %1623 = vmatprep.mubr.f32.mxu0 0.0
    %1624 = vmatmul.mubr.f32.gmra.mrb[0].mxu0 %v701
    %v1625 = vpop.f32.mrb[0].mxu0
    %v1626 = vadd.f32 %v688, %v1625
    %v1627 = vpop.f32.mrb[0].mxu0
    %v1628 = vadd.f32 %v688, %v1627
    %1629 = vdwg.mxu0
    %v1630 = vmax.f32 %v1519, 0.0
    %v1631 = vmax.f32 %v1521, 0.0
    %v1632 = vmax.f32 %v1608, 0.0
    %v1633 = vmax.f32 %v1610, 0.0
    %v1634 = vmax.f32 %v1525, 0.0
    %v1635 = vmax.f32 %v1527, 0.0
    %v1636 = vmax.f32 %v1614, 0.0
    %v1637 = vmax.f32 %v1616, 0.0
    %v1638 = vmax.f32 %v1531, 0.0
    %v1639 = vmax.f32 %v1533, 0.0
    %v1640 = vmax.f32 %v1620, 0.0
    %v1641 = vmax.f32 %v1622, 0.0
    %v1642 = vmax.f32 %v1537, 0.0
    %v1643 = vmax.f32 %v1539, 0.0
    %v1644 = vmax.f32 %v1626, 0.0
    %v1645 = vmax.f32 %v1628, 0.0
    %v1646 = vmul.f32 %v1630, %v900
    %v1647 = vmul.f32 %v1631, %v900
    %v1648 = vmul.f32 %v1632, %v900
    %v1649 = vmul.f32 %v1633, %v900
    %v1650 = vmul.f32 %v1634, %v905
    %v1651 = vmul.f32 %v1635, %v905
    %v1652 = vmul.f32 %v1636, %v905
    %v1653 = vmul.f32 %v1637, %v905
    %v1654 = vmul.f32 %v1638, %v910
    %v1655 = vmul.f32 %v1639, %v910
    %v1656 = vmul.f32 %v1640, %v910
    %v1657 = vmul.f32 %v1641, %v910
    %v1658 = vmul.f32 %v1642, %v915
    %v1659 = vmul.f32 %v1643, %v915
    %v1660 = vmul.f32 %v1644, %v915
    %v1661 = vmul.f32 %v1645, %v915
    %v1662 = vadd.f32 %v1646, %v1650
    %v1663 = vadd.f32 %v1662, %v1654
    %v1664 = vadd.f32 %v1663, %v1658
    %v1665 = vrot.slane %v1664, 4
    %v1666 = vadd.f32 %v1664, %v1665
    %v1667 = vrot.slane %v1666, 2
    %v1668 = vadd.f32 %v1666, %v1667
    %v1669 = vrot.slane %v1668, 1
    %v1670 = vadd.f32 %v1668, %v1669
    %v1671 = vadd.f32 %v1647, %v1651
    %v1672 = vadd.f32 %v1671, %v1655
    %v1673 = vadd.f32 %v1672, %v1659
    %v1674 = vrot.slane %v1673, 4
    %v1675 = vadd.f32 %v1673, %v1674
    %v1676 = vrot.slane %v1675, 2
    %v1677 = vadd.f32 %v1675, %v1676
    %v1678 = vrot.slane %v1677, 1
    %v1679 = vadd.f32 %v1677, %v1678
    %v1680 = vadd.f32 %v1648, %v1652
    %v1681 = vadd.f32 %v1680, %v1656
    %v1682 = vadd.f32 %v1681, %v1660
    %v1683 = vrot.slane %v1682, 4
    %v1684 = vadd.f32 %v1682, %v1683
    %v1685 = vrot.slane %v1684, 2
    %v1686 = vadd.f32 %v1684, %v1685
    %v1687 = vrot.slane %v1686, 1
    %v1688 = vadd.f32 %v1686, %v1687
    %v1689 = vadd.f32 %v1649, %v1653
    %v1690 = vadd.f32 %v1689, %v1657
    %v1691 = vadd.f32 %v1690, %v1661
    %v1692 = vrot.slane %v1691, 4
    %v1693 = vadd.f32 %v1691, %v1692
    %v1694 = vrot.slane %v1693, 2
    %v1695 = vadd.f32 %v1693, %v1694
    %v1696 = vrot.slane %v1695, 1
    %v1697 = vadd.f32 %v1695, %v1696
    %v1698 = vadd.f32 %v1670, %v977
    %v1699 = vadd.f32 %v1679, %v977
    %v1700 = vadd.f32 %v1688, %v977
    %v1701 = vadd.f32 %v1697, %v977
    %v1706 = vcombine.low %v1698, %v1699
    %v1707 = vcombine.low %v1700, %v1701
    %v1709 = vunpack.c.l.s4 1966171168
    %v1710 = vunpack.c.0.s8 %v1709
    %v1711 = vlaneseq
    %v1712 = vshrl.u32 %v1711, 7
    %v1713 = vsub.s32 %v1710, %v1712
    %v1714 = vrot.slane %v1706, %v1713
    %v1716 = vunpack.c.l.s4 1966171168
    %v1717 = vunpack.c.0.s8 %v1716
    %v1718 = vlaneseq
    %v1719 = vshrl.u32 %v1718, 7
    %v1720 = vsub.s32 %v1717, %v1719
    %v1721 = vrot.slane %v1707, %v1720
    %v1722 = vcombine.low %v1714, %v1721
    %v1724 = vunpack.c.l.s4 1966171168
    %v1725 = vunpack.c.0.s8 %v1724
    %v1726 = vlaneseq
    %v1727 = vshrl.u32 %v1726, 7
    %v1728 = vsub.s32 %v1725, %v1727
    %v1729 = vrot.slane %v1722, %v1728
    %1731 = vst.msk [vmem:[#allocation3 + $0x4] sm:$0xf] %vm1014, %v1729
    %v1732 = vld [vmem:[%s0 + $0x20] sm:$0xff]
    %v1733 = vld [vmem:[%s0 + $0x28] sm:$0xff]
    %v1736 = vlaneseq
    %v1737 = vshrl.u32 %v1736, 7
    %v1738 = vsub.s32 0, %v1737
    %v1739 = vrot.slane %v1732, %v1738
    %v1740 = vlaneseq
    %v1741 = vshrl.u32 %v1740, 7
    %v1742 = vsub.s32 4, %v1741
    %v1743 = vrot.slane %v1732, %v1742
    %v1744 = vlaneseq
    %v1745 = vshrl.u32 %v1744, 7
    %v1746 = vsub.s32 0, %v1745
    %v1747 = vrot.slane %v1733, %v1746
    %v1748 = vlaneseq
    %v1749 = vshrl.u32 %v1748, 7
    %v1750 = vsub.s32 4, %v1749
    %v1751 = vrot.slane %v1733, %v1750
    %v1756 = vlaneseq
    %v1757 = vshrl.u32 %v1756, 7
    %v1758 = vsub.s32 0, %v1757
    %v1759 = vrot.slane %v1739, %v1758
    %v1760 = vlaneseq
    %v1761 = vshrl.u32 %v1760, 7
    %v1762 = vsub.s32 0, %v1761
    %v1763 = vrot.slane %v1743, %v1762
    %v1764 = vlaneseq
    %v1765 = vshrl.u32 %v1764, 7
    %v1766 = vsub.s32 0, %v1765
    %v1767 = vrot.slane %v1747, %v1766
    %v1768 = vlaneseq
    %v1769 = vshrl.u32 %v1768, 7
    %v1770 = vsub.s32 0, %v1769
    %v1771 = vrot.slane %v1751, %v1770
    %v1772 = vmul.f32 %v63, %v1759
    %v1773 = vmul.f32 %v63, %v1763
    %v1774 = vmul.f32 %v63, %v1767
    %v1775 = vmul.f32 %v63, %v1771
    %v1776 = vmul.f32 %v68, %v1759
    %v1777 = vmul.f32 %v68, %v1763
    %v1778 = vmul.f32 %v68, %v1767
    %v1779 = vmul.f32 %v68, %v1771
    %v1780 = vmul.f32 %v73, %v1759
    %v1781 = vmul.f32 %v73, %v1763
    %v1782 = vmul.f32 %v73, %v1767
    %v1783 = vmul.f32 %v73, %v1771
    %v1784 = vmul.f32 %v78, %v1759
    %v1785 = vmul.f32 %v78, %v1763
    %v1786 = vmul.f32 %v78, %v1767
    %v1787 = vmul.f32 %v78, %v1771
    %v1788 = vmul.f32 %v83, %v1759
    %v1789 = vmul.f32 %v83, %v1763
    %v1790 = vmul.f32 %v83, %v1767
    %v1791 = vmul.f32 %v83, %v1771
    %v1792 = vmul.f32 %v88, %v1759
    %v1793 = vmul.f32 %v88, %v1763
    %v1794 = vmul.f32 %v88, %v1767
    %v1795 = vmul.f32 %v88, %v1771
    %v1796 = vmul.f32 %v93, %v1759
    %v1797 = vmul.f32 %v93, %v1763
    %v1798 = vmul.f32 %v93, %v1767
    %v1799 = vmul.f32 %v93, %v1771
    %v1800 = vmul.f32 %v98, %v1759
    %v1801 = vmul.f32 %v98, %v1763
    %v1802 = vmul.f32 %v98, %v1767
    %v1803 = vmul.f32 %v98, %v1771
    %v1804 = vlaneseq
    %v1805 = vshrl.u32 %v1804, 7
    %v1806 = vsub.s32 1, %v1805
    %v1807 = vrot.slane %v1732, %v1806
    %v1808 = vlaneseq
    %v1809 = vshrl.u32 %v1808, 7
    %v1810 = vsub.s32 5, %v1809
    %v1811 = vrot.slane %v1732, %v1810
    %v1812 = vlaneseq
    %v1813 = vshrl.u32 %v1812, 7
    %v1814 = vsub.s32 1, %v1813
    %v1815 = vrot.slane %v1733, %v1814
    %v1816 = vlaneseq
    %v1817 = vshrl.u32 %v1816, 7
    %v1818 = vsub.s32 5, %v1817
    %v1819 = vrot.slane %v1733, %v1818
    %v1824 = vlaneseq
    %v1825 = vshrl.u32 %v1824, 7
    %v1826 = vsub.s32 1, %v1825
    %v1827 = vrot.slane %v1807, %v1826
    %v1828 = vlaneseq
    %v1829 = vshrl.u32 %v1828, 7
    %v1830 = vsub.s32 1, %v1829
    %v1831 = vrot.slane %v1811, %v1830
    %v1832 = vlaneseq
    %v1833 = vshrl.u32 %v1832, 7
    %v1834 = vsub.s32 1, %v1833
    %v1835 = vrot.slane %v1815, %v1834
    %v1836 = vlaneseq
    %v1837 = vshrl.u32 %v1836, 7
    %v1838 = vsub.s32 1, %v1837
    %v1839 = vrot.slane %v1819, %v1838
    %v1840 = vmul.f32 %v172, %v1827
    %v1841 = vmul.f32 %v172, %v1831
    %v1842 = vmul.f32 %v172, %v1835
    %v1843 = vmul.f32 %v172, %v1839
    %v1844 = vmul.f32 %v176, %v1827
    %v1845 = vmul.f32 %v176, %v1831
    %v1846 = vmul.f32 %v176, %v1835
    %v1847 = vmul.f32 %v176, %v1839
    %v1848 = vmul.f32 %v180, %v1827
    %v1849 = vmul.f32 %v180, %v1831
    %v1850 = vmul.f32 %v180, %v1835
    %v1851 = vmul.f32 %v180, %v1839
    %v1852 = vmul.f32 %v184, %v1827
    %v1853 = vmul.f32 %v184, %v1831
    %v1854 = vmul.f32 %v184, %v1835
    %v1855 = vmul.f32 %v184, %v1839
    %v1856 = vmul.f32 %v188, %v1827
    %v1857 = vmul.f32 %v188, %v1831
    %v1858 = vmul.f32 %v188, %v1835
    %v1859 = vmul.f32 %v188, %v1839
    %v1860 = vmul.f32 %v192, %v1827
    %v1861 = vmul.f32 %v192, %v1831
    %v1862 = vmul.f32 %v192, %v1835
    %v1863 = vmul.f32 %v192, %v1839
    %v1864 = vmul.f32 %v196, %v1827
    %v1865 = vmul.f32 %v196, %v1831
    %v1866 = vmul.f32 %v196, %v1835
    %v1867 = vmul.f32 %v196, %v1839
    %v1868 = vmul.f32 %v200, %v1827
    %v1869 = vmul.f32 %v200, %v1831
    %v1870 = vmul.f32 %v200, %v1835
    %v1871 = vmul.f32 %v200, %v1839
    %v1872 = vadd.f32 %v1772, %v1840
    %v1873 = vadd.f32 %v1773, %v1841
    %v1874 = vadd.f32 %v1774, %v1842
    %v1875 = vadd.f32 %v1775, %v1843
    %v1876 = vadd.f32 %v1776, %v1844
    %v1877 = vadd.f32 %v1777, %v1845
    %v1878 = vadd.f32 %v1778, %v1846
    %v1879 = vadd.f32 %v1779, %v1847
    %v1880 = vadd.f32 %v1780, %v1848
    %v1881 = vadd.f32 %v1781, %v1849
    %v1882 = vadd.f32 %v1782, %v1850
    %v1883 = vadd.f32 %v1783, %v1851
    %v1884 = vadd.f32 %v1784, %v1852
    %v1885 = vadd.f32 %v1785, %v1853
    %v1886 = vadd.f32 %v1786, %v1854
    %v1887 = vadd.f32 %v1787, %v1855
    %v1888 = vadd.f32 %v1788, %v1856
    %v1889 = vadd.f32 %v1789, %v1857
    %v1890 = vadd.f32 %v1790, %v1858
    %v1891 = vadd.f32 %v1791, %v1859
    %v1892 = vadd.f32 %v1792, %v1860
    %v1893 = vadd.f32 %v1793, %v1861
    %v1894 = vadd.f32 %v1794, %v1862
    %v1895 = vadd.f32 %v1795, %v1863
    %v1896 = vadd.f32 %v1796, %v1864
    %v1897 = vadd.f32 %v1797, %v1865
    %v1898 = vadd.f32 %v1798, %v1866
    %v1899 = vadd.f32 %v1799, %v1867
    %v1900 = vadd.f32 %v1800, %v1868
    %v1901 = vadd.f32 %v1801, %v1869
    %v1902 = vadd.f32 %v1802, %v1870
    %v1903 = vadd.f32 %v1803, %v1871
    %v1904 = vlaneseq
    %v1905 = vshrl.u32 %v1904, 7
    %v1906 = vsub.s32 2, %v1905
    %v1907 = vrot.slane %v1732, %v1906
    %v1908 = vlaneseq
    %v1909 = vshrl.u32 %v1908, 7
    %v1910 = vsub.s32 6, %v1909
    %v1911 = vrot.slane %v1732, %v1910
    %v1912 = vlaneseq
    %v1913 = vshrl.u32 %v1912, 7
    %v1914 = vsub.s32 2, %v1913
    %v1915 = vrot.slane %v1733, %v1914
    %v1916 = vlaneseq
    %v1917 = vshrl.u32 %v1916, 7
    %v1918 = vsub.s32 6, %v1917
    %v1919 = vrot.slane %v1733, %v1918
    %v1924 = vlaneseq
    %v1925 = vshrl.u32 %v1924, 7
    %v1926 = vsub.s32 2, %v1925
    %v1927 = vrot.slane %v1907, %v1926
    %v1928 = vlaneseq
    %v1929 = vshrl.u32 %v1928, 7
    %v1930 = vsub.s32 2, %v1929
    %v1931 = vrot.slane %v1911, %v1930
    %v1932 = vlaneseq
    %v1933 = vshrl.u32 %v1932, 7
    %v1934 = vsub.s32 2, %v1933
    %v1935 = vrot.slane %v1915, %v1934
    %v1936 = vlaneseq
    %v1937 = vshrl.u32 %v1936, 7
    %v1938 = vsub.s32 2, %v1937
    %v1939 = vrot.slane %v1919, %v1938
    %v1940 = vmul.f32 %v304, %v1927
    %v1941 = vmul.f32 %v304, %v1931
    %v1942 = vmul.f32 %v304, %v1935
    %v1943 = vmul.f32 %v304, %v1939
    %v1944 = vmul.f32 %v308, %v1927
    %v1945 = vmul.f32 %v308, %v1931
    %v1946 = vmul.f32 %v308, %v1935
    %v1947 = vmul.f32 %v308, %v1939
    %v1948 = vmul.f32 %v312, %v1927
    %v1949 = vmul.f32 %v312, %v1931
    %v1950 = vmul.f32 %v312, %v1935
    %v1951 = vmul.f32 %v312, %v1939
    %v1952 = vmul.f32 %v316, %v1927
    %v1953 = vmul.f32 %v316, %v1931
    %v1954 = vmul.f32 %v316, %v1935
    %v1955 = vmul.f32 %v316, %v1939
    %v1956 = vmul.f32 %v320, %v1927
    %v1957 = vmul.f32 %v320, %v1931
    %v1958 = vmul.f32 %v320, %v1935
    %v1959 = vmul.f32 %v320, %v1939
    %v1960 = vmul.f32 %v324, %v1927
    %v1961 = vmul.f32 %v324, %v1931
    %v1962 = vmul.f32 %v324, %v1935
    %v1963 = vmul.f32 %v324, %v1939
    %v1964 = vmul.f32 %v328, %v1927
    %v1965 = vmul.f32 %v328, %v1931
    %v1966 = vmul.f32 %v328, %v1935
    %v1967 = vmul.f32 %v328, %v1939
    %v1968 = vmul.f32 %v332, %v1927
    %v1969 = vmul.f32 %v332, %v1931
    %v1970 = vmul.f32 %v332, %v1935
    %v1971 = vmul.f32 %v332, %v1939
    %v1972 = vadd.f32 %v1872, %v1940
    %v1973 = vadd.f32 %v1873, %v1941
    %v1974 = vadd.f32 %v1874, %v1942
    %v1975 = vadd.f32 %v1875, %v1943
    %v1976 = vadd.f32 %v1876, %v1944
    %v1977 = vadd.f32 %v1877, %v1945
    %v1978 = vadd.f32 %v1878, %v1946
    %v1979 = vadd.f32 %v1879, %v1947
    %v1980 = vadd.f32 %v1880, %v1948
    %v1981 = vadd.f32 %v1881, %v1949
    %v1982 = vadd.f32 %v1882, %v1950
    %v1983 = vadd.f32 %v1883, %v1951
    %v1984 = vadd.f32 %v1884, %v1952
    %v1985 = vadd.f32 %v1885, %v1953
    %v1986 = vadd.f32 %v1886, %v1954
    %v1987 = vadd.f32 %v1887, %v1955
    %v1988 = vadd.f32 %v1888, %v1956
    %v1989 = vadd.f32 %v1889, %v1957
    %v1990 = vadd.f32 %v1890, %v1958
    %v1991 = vadd.f32 %v1891, %v1959
    %v1992 = vadd.f32 %v1892, %v1960
    %v1993 = vadd.f32 %v1893, %v1961
    %v1994 = vadd.f32 %v1894, %v1962
    %v1995 = vadd.f32 %v1895, %v1963
    %v1996 = vadd.f32 %v1896, %v1964
    %v1997 = vadd.f32 %v1897, %v1965
    %v1998 = vadd.f32 %v1898, %v1966
    %v1999 = vadd.f32 %v1899, %v1967
    %v2000 = vadd.f32 %v1900, %v1968
    %v2001 = vadd.f32 %v1901, %v1969
    %v2002 = vadd.f32 %v1902, %v1970
    %v2003 = vadd.f32 %v1903, %v1971
    %v2004 = vlaneseq
    %v2005 = vshrl.u32 %v2004, 7
    %v2006 = vsub.s32 3, %v2005
    %v2007 = vrot.slane %v1732, %v2006
    %v2008 = vlaneseq
    %v2009 = vshrl.u32 %v2008, 7
    %v2010 = vsub.s32 7, %v2009
    %v2011 = vrot.slane %v1732, %v2010
    %v2012 = vlaneseq
    %v2013 = vshrl.u32 %v2012, 7
    %v2014 = vsub.s32 3, %v2013
    %v2015 = vrot.slane %v1733, %v2014
    %v2016 = vlaneseq
    %v2017 = vshrl.u32 %v2016, 7
    %v2018 = vsub.s32 7, %v2017
    %v2019 = vrot.slane %v1733, %v2018
    %v2024 = vlaneseq
    %v2025 = vshrl.u32 %v2024, 7
    %v2026 = vsub.s32 3, %v2025
    %v2027 = vrot.slane %v2007, %v2026
    %v2028 = vlaneseq
    %v2029 = vshrl.u32 %v2028, 7
    %v2030 = vsub.s32 3, %v2029
    %v2031 = vrot.slane %v2011, %v2030
    %v2032 = vlaneseq
    %v2033 = vshrl.u32 %v2032, 7
    %v2034 = vsub.s32 3, %v2033
    %v2035 = vrot.slane %v2015, %v2034
    %v2036 = vlaneseq
    %v2037 = vshrl.u32 %v2036, 7
    %v2038 = vsub.s32 3, %v2037
    %v2039 = vrot.slane %v2019, %v2038
    %v2040 = vmul.f32 %v436, %v2027
    %v2041 = vmul.f32 %v436, %v2031
    %v2042 = vmul.f32 %v436, %v2035
    %v2043 = vmul.f32 %v436, %v2039
    %v2044 = vmul.f32 %v440, %v2027
    %v2045 = vmul.f32 %v440, %v2031
    %v2046 = vmul.f32 %v440, %v2035
    %v2047 = vmul.f32 %v440, %v2039
    %v2048 = vmul.f32 %v444, %v2027
    %v2049 = vmul.f32 %v444, %v2031
    %v2050 = vmul.f32 %v444, %v2035
    %v2051 = vmul.f32 %v444, %v2039
    %v2052 = vmul.f32 %v448, %v2027
    %v2053 = vmul.f32 %v448, %v2031
    %v2054 = vmul.f32 %v448, %v2035
    %v2055 = vmul.f32 %v448, %v2039
    %v2056 = vmul.f32 %v452, %v2027
    %v2057 = vmul.f32 %v452, %v2031
    %v2058 = vmul.f32 %v452, %v2035
    %v2059 = vmul.f32 %v452, %v2039
    %v2060 = vmul.f32 %v456, %v2027
    %v2061 = vmul.f32 %v456, %v2031
    %v2062 = vmul.f32 %v456, %v2035
    %v2063 = vmul.f32 %v456, %v2039
    %v2064 = vmul.f32 %v460, %v2027
    %v2065 = vmul.f32 %v460, %v2031
    %v2066 = vmul.f32 %v460, %v2035
    %v2067 = vmul.f32 %v460, %v2039
    %v2068 = vmul.f32 %v464, %v2027
    %v2069 = vmul.f32 %v464, %v2031
    %v2070 = vmul.f32 %v464, %v2035
    %v2071 = vmul.f32 %v464, %v2039
    %v2072 = vadd.f32 %v1972, %v2040
    %v2073 = vadd.f32 %v1973, %v2041
    %v2074 = vadd.f32 %v1974, %v2042
    %v2075 = vadd.f32 %v1975, %v2043
    %v2076 = vadd.f32 %v1976, %v2044
    %v2077 = vadd.f32 %v1977, %v2045
    %v2078 = vadd.f32 %v1978, %v2046
    %v2079 = vadd.f32 %v1979, %v2047
    %v2080 = vadd.f32 %v1980, %v2048
    %v2081 = vadd.f32 %v1981, %v2049
    %v2082 = vadd.f32 %v1982, %v2050
    %v2083 = vadd.f32 %v1983, %v2051
    %v2084 = vadd.f32 %v1984, %v2052
    %v2085 = vadd.f32 %v1985, %v2053
    %v2086 = vadd.f32 %v1986, %v2054
    %v2087 = vadd.f32 %v1987, %v2055
    %v2088 = vadd.f32 %v1988, %v2056
    %v2089 = vadd.f32 %v1989, %v2057
    %v2090 = vadd.f32 %v1990, %v2058
    %v2091 = vadd.f32 %v1991, %v2059
    %v2092 = vadd.f32 %v1992, %v2060
    %v2093 = vadd.f32 %v1993, %v2061
    %v2094 = vadd.f32 %v1994, %v2062
    %v2095 = vadd.f32 %v1995, %v2063
    %v2096 = vadd.f32 %v1996, %v2064
    %v2097 = vadd.f32 %v1997, %v2065
    %v2098 = vadd.f32 %v1998, %v2066
    %v2099 = vadd.f32 %v1999, %v2067
    %v2100 = vadd.f32 %v2000, %v2068
    %v2101 = vadd.f32 %v2001, %v2069
    %v2102 = vadd.f32 %v2002, %v2070
    %v2103 = vadd.f32 %v2003, %v2071
    %v2104 = vadd.f32 %v2072, %v569
    %v2105 = vadd.f32 %v2073, %v569
    %v2106 = vadd.f32 %v2074, %v569
    %v2107 = vadd.f32 %v2075, %v569
    %v2108 = vadd.f32 %v2076, %v574
    %v2109 = vadd.f32 %v2077, %v574
    %v2110 = vadd.f32 %v2078, %v574
    %v2111 = vadd.f32 %v2079, %v574
    %v2112 = vadd.f32 %v2080, %v579
    %v2113 = vadd.f32 %v2081, %v579
    %v2114 = vadd.f32 %v2082, %v579
    %v2115 = vadd.f32 %v2083, %v579
    %v2116 = vadd.f32 %v2084, %v584
    %v2117 = vadd.f32 %v2085, %v584
    %v2118 = vadd.f32 %v2086, %v584
    %v2119 = vadd.f32 %v2087, %v584
    %v2120 = vadd.f32 %v2088, %v589
    %v2121 = vadd.f32 %v2089, %v589
    %v2122 = vadd.f32 %v2090, %v589
    %v2123 = vadd.f32 %v2091, %v589
    %v2124 = vadd.f32 %v2092, %v594
    %v2125 = vadd.f32 %v2093, %v594
    %v2126 = vadd.f32 %v2094, %v594
    %v2127 = vadd.f32 %v2095, %v594
    %v2128 = vadd.f32 %v2096, %v599
    %v2129 = vadd.f32 %v2097, %v599
    %v2130 = vadd.f32 %v2098, %v599
    %v2131 = vadd.f32 %v2099, %v599
    %v2132 = vadd.f32 %v2100, %v604
    %v2133 = vadd.f32 %v2101, %v604
    %v2134 = vadd.f32 %v2102, %v604
    %v2135 = vadd.f32 %v2103, %v604
    %v2136 = vmax.f32 %v2104, 0.0
    %v2137 = vmax.f32 %v2105, 0.0
    %v2138 = vmax.f32 %v2106, 0.0
    %v2139 = vmax.f32 %v2107, 0.0
    %v2140 = vmax.f32 %v2108, 0.0
    %v2141 = vmax.f32 %v2109, 0.0
    %v2142 = vmax.f32 %v2110, 0.0
    %v2143 = vmax.f32 %v2111, 0.0
    %v2144 = vmax.f32 %v2112, 0.0
    %v2145 = vmax.f32 %v2113, 0.0
    %v2146 = vmax.f32 %v2114, 0.0
    %v2147 = vmax.f32 %v2115, 0.0
    %v2148 = vmax.f32 %v2116, 0.0
    %v2149 = vmax.f32 %v2117, 0.0
    %v2150 = vmax.f32 %v2118, 0.0
    %v2151 = vmax.f32 %v2119, 0.0
    %v2152 = vmax.f32 %v2120, 0.0
    %v2153 = vmax.f32 %v2121, 0.0
    %v2154 = vmax.f32 %v2122, 0.0
    %v2155 = vmax.f32 %v2123, 0.0
    %v2156 = vmax.f32 %v2124, 0.0
    %v2157 = vmax.f32 %v2125, 0.0
    %v2158 = vmax.f32 %v2126, 0.0
    %v2159 = vmax.f32 %v2127, 0.0
    %v2160 = vmax.f32 %v2128, 0.0
    %v2161 = vmax.f32 %v2129, 0.0
    %v2162 = vmax.f32 %v2130, 0.0
    %v2163 = vmax.f32 %v2131, 0.0
    %v2164 = vmax.f32 %v2132, 0.0
    %v2165 = vmax.f32 %v2133, 0.0
    %v2166 = vmax.f32 %v2134, 0.0
    %v2167 = vmax.f32 %v2135, 0.0
    %2168 = vmatprep.subr.mxu0 %v2137
    %2169 = vmatpush1.msra.mxu0 %v2136
    %2170 = vmatprep.subr.mxu0 %v2141
    %2171 = vmatpush1.msra.mxu0 %v2140
    %2172 = vmatprep.subr.mxu0 %v2145
    %2173 = vmatpush1.msra.mxu0 %v2144
    %2174 = vmatprep.subr.mxu0 %v2149
    %2175 = vmatpush1.msra.mxu0 %v2148
    %2176 = vmatprep.subr.mxu0 %v2153
    %2177 = vmatpush1.msra.mxu0 %v2152
    %2178 = vmatprep.subr.mxu0 %v2157
    %2179 = vmatpush1.msra.mxu0 %v2156
    %2180 = vmatprep.subr.mxu0 %v2161
    %2181 = vmatpush1.msra.mxu0 %v2160
    %2182 = vmatprep.subr.mxu0 %v2165
    %2183 = vmatpush1.msra.mxu0 %v2164
    %2184 = vmatprep.subr.mxu0 0.0
    %2185 = vmatpush1.msra.mxu0 0.0
    %2186 = vmatprep.subr.mxu0 0.0
    %2187 = vmatpush1.msra.mxu0 0.0
    %2188 = vmatprep.subr.mxu0 0.0
    %2189 = vmatpush1.msra.mxu0 0.0
    %2190 = vmatprep.subr.mxu0 0.0
    %2191 = vmatpush1.msra.mxu0 0.0
    %2192 = vmatprep.subr.mxu0 0.0
    %2193 = vmatpush1.msra.mxu0 0.0
    %2194 = vmatprep.subr.mxu0 0.0
    %2195 = vmatpush1.msra.mxu0 0.0
    %2196 = vmatprep.subr.mxu0 0.0
    %2197 = vmatpush1.msra.mxu0 0.0
    %2198 = vmatprep.subr.mxu0 0.0
    %2199 = vmatpush1.msra.mxu0 0.0
    %2200 = vmatprep.subr.mxu0 0.0
    %2201 = vmatpush1.msra.mxu0 0.0
    %2202 = vmatprep.subr.mxu0 0.0
    %2203 = vmatpush1.msra.mxu0 0.0
    %2204 = vmatprep.subr.mxu0 0.0
    %2205 = vmatpush1.msra.mxu0 0.0
    %2206 = vmatprep.subr.mxu0 0.0
    %2207 = vmatpush1.msra.mxu0 0.0
    %2208 = vmatprep.subr.mxu0 0.0
    %2209 = vmatpush1.msra.mxu0 0.0
    %2210 = vmatprep.subr.mxu0 0.0
    %2211 = vmatpush1.msra.mxu0 0.0
    %2212 = vmatprep.subr.mxu0 0.0
    %2213 = vmatpush1.msra.mxu0 0.0
    %2214 = vmatprep.subr.mxu0 0.0
    %2215 = vmatpush1.msra.mxu0 0.0
    %2216 = vmatprep.subr.mxu0 0.0
    %2217 = vmatpush1.msra.mxu0 0.0
    %2218 = vmatprep.subr.mxu0 0.0
    %2219 = vmatpush1.msra.mxu0 0.0
    %2220 = vmatprep.subr.mxu0 0.0
    %2221 = vmatpush1.msra.mxu0 0.0
    %2222 = vmatprep.subr.mxu0 0.0
    %2223 = vmatpush1.msra.mxu0 0.0
    %2224 = vmatprep.subr.mxu0 0.0
    %2225 = vmatpush1.msra.mxu0 0.0
    %2226 = vmatprep.subr.mxu0 0.0
    %2227 = vmatpush1.msra.mxu0 0.0
    %2228 = vmatprep.subr.mxu0 0.0
    %2229 = vmatpush1.msra.mxu0 0.0
    %2230 = vmatprep.subr.mxu0 0.0
    %2231 = vmatpush1.msra.mxu0 0.0
    %2232 = vmatprep.mubr.f32.mxu0 0.0
    %2233 = vmatmul.mubr.f32.gmra.mrb[0].mxu0 %v692
    %v2234 = vpop.f32.mrb[0].mxu0
    %v2235 = vadd.f32 %v673, %v2234
    %v2236 = vpop.f32.mrb[0].mxu0
    %v2237 = vadd.f32 %v673, %v2236
    %2238 = vmatprep.mubr.f32.mxu0 0.0
    %2239 = vmatmul.mubr.f32.gmra.mrb[0].mxu0 %v695
    %v2240 = vpop.f32.mrb[0].mxu0
    %v2241 = vadd.f32 %v678, %v2240
    %v2242 = vpop.f32.mrb[0].mxu0
    %v2243 = vadd.f32 %v678, %v2242
    %2244 = vmatprep.mubr.f32.mxu0 0.0
    %2245 = vmatmul.mubr.f32.gmra.mrb[0].mxu0 %v698
    %v2246 = vpop.f32.mrb[0].mxu0
    %v2247 = vadd.f32 %v683, %v2246
    %v2248 = vpop.f32.mrb[0].mxu0
    %v2249 = vadd.f32 %v683, %v2248
    %2250 = vmatprep.mubr.f32.mxu0 0.0
    %2251 = vmatmul.mubr.f32.gmra.mrb[0].mxu0 %v701
    %v2252 = vpop.f32.mrb[0].mxu0
    %v2253 = vadd.f32 %v688, %v2252
    %v2254 = vpop.f32.mrb[0].mxu0
    %v2255 = vadd.f32 %v688, %v2254
    %2256 = vdwg.mxu0
    %2257 = vmatprep.subr.mxu0 %v2139
    %2258 = vmatpush1.msra.mxu0 %v2138
    %2259 = vmatprep.subr.mxu0 %v2143
    %2260 = vmatpush1.msra.mxu0 %v2142
    %2261 = vmatprep.subr.mxu0 %v2147
    %2262 = vmatpush1.msra.mxu0 %v2146
    %2263 = vmatprep.subr.mxu0 %v2151
    %2264 = vmatpush1.msra.mxu0 %v2150
    %2265 = vmatprep.subr.mxu0 %v2155
    %2266 = vmatpush1.msra.mxu0 %v2154
    %2267 = vmatprep.subr.mxu0 %v2159
    %2268 = vmatpush1.msra.mxu0 %v2158
    %2269 = vmatprep.subr.mxu0 %v2163
    %2270 = vmatpush1.msra.mxu0 %v2162
    %2271 = vmatprep.subr.mxu0 %v2167
    %2272 = vmatpush1.msra.mxu0 %v2166
    %2273 = vmatprep.subr.mxu0 0.0
    %2274 = vmatpush1.msra.mxu0 0.0
    %2275 = vmatprep.subr.mxu0 0.0
    %2276 = vmatpush1.msra.mxu0 0.0
    %2277 = vmatprep.subr.mxu0 0.0
    %2278 = vmatpush1.msra.mxu0 0.0
    %2279 = vmatprep.subr.mxu0 0.0
    %2280 = vmatpush1.msra.mxu0 0.0
    %2281 = vmatprep.subr.mxu0 0.0
    %2282 = vmatpush1.msra.mxu0 0.0
    %2283 = vmatprep.subr.mxu0 0.0
    %2284 = vmatpush1.msra.mxu0 0.0
    %2285 = vmatprep.subr.mxu0 0.0
    %2286 = vmatpush1.msra.mxu0 0.0
    %2287 = vmatprep.subr.mxu0 0.0
    %2288 = vmatpush1.msra.mxu0 0.0
    %2289 = vmatprep.subr.mxu0 0.0
    %2290 = vmatpush1.msra.mxu0 0.0
    %2291 = vmatprep.subr.mxu0 0.0
    %2292 = vmatpush1.msra.mxu0 0.0
    %2293 = vmatprep.subr.mxu0 0.0
    %2294 = vmatpush1.msra.mxu0 0.0
    %2295 = vmatprep.subr.mxu0 0.0
    %2296 = vmatpush1.msra.mxu0 0.0
    %2297 = vmatprep.subr.mxu0 0.0
    %2298 = vmatpush1.msra.mxu0 0.0
    %2299 = vmatprep.subr.mxu0 0.0
    %2300 = vmatpush1.msra.mxu0 0.0
    %2301 = vmatprep.subr.mxu0 0.0
    %2302 = vmatpush1.msra.mxu0 0.0
    %2303 = vmatprep.subr.mxu0 0.0
    %2304 = vmatpush1.msra.mxu0 0.0
    %2305 = vmatprep.subr.mxu0 0.0
    %2306 = vmatpush1.msra.mxu0 0.0
    %2307 = vmatprep.subr.mxu0 0.0
    %2308 = vmatpush1.msra.mxu0 0.0
    %2309 = vmatprep.subr.mxu0 0.0
    %2310 = vmatpush1.msra.mxu0 0.0
    %2311 = vmatprep.subr.mxu0 0.0
    %2312 = vmatpush1.msra.mxu0 0.0
    %2313 = vmatprep.subr.mxu0 0.0
    %2314 = vmatpush1.msra.mxu0 0.0
    %2315 = vmatprep.subr.mxu0 0.0
    %2316 = vmatpush1.msra.mxu0 0.0
    %2317 = vmatprep.subr.mxu0 0.0
    %2318 = vmatpush1.msra.mxu0 0.0
    %2319 = vmatprep.subr.mxu0 0.0
    %2320 = vmatpush1.msra.mxu0 0.0
    %2321 = vmatprep.mubr.f32.mxu0 0.0
    %2322 = vmatmul.mubr.f32.gmra.mrb[0].mxu0 %v692
    %v2323 = vpop.f32.mrb[0].mxu0
    %v2324 = vadd.f32 %v673, %v2323
    %v2325 = vpop.f32.mrb[0].mxu0
    %v2326 = vadd.f32 %v673, %v2325
    %2327 = vmatprep.mubr.f32.mxu0 0.0
    %2328 = vmatmul.mubr.f32.gmra.mrb[0].mxu0 %v695
    %v2329 = vpop.f32.mrb[0].mxu0
    %v2330 = vadd.f32 %v678, %v2329
    %v2331 = vpop.f32.mrb[0].mxu0
    %v2332 = vadd.f32 %v678, %v2331
    %2333 = vmatprep.mubr.f32.mxu0 0.0
    %2334 = vmatmul.mubr.f32.gmra.mrb[0].mxu0 %v698
    %v2335 = vpop.f32.mrb[0].mxu0
    %v2336 = vadd.f32 %v683, %v2335
    %v2337 = vpop.f32.mrb[0].mxu0
    %v2338 = vadd.f32 %v683, %v2337
    %2339 = vmatprep.mubr.f32.mxu0 0.0
    %2340 = vmatmul.mubr.f32.gmra.mrb[0].mxu0 %v701
    %v2341 = vpop.f32.mrb[0].mxu0
    %v2342 = vadd.f32 %v688, %v2341
    %v2343 = vpop.f32.mrb[0].mxu0
    %v2344 = vadd.f32 %v688, %v2343
    %2345 = vdwg.mxu0
    %v2346 = vmax.f32 %v2235, 0.0
    %v2347 = vmax.f32 %v2237, 0.0
    %v2348 = vmax.f32 %v2324, 0.0
    %v2349 = vmax.f32 %v2326, 0.0
    %v2350 = vmax.f32 %v2241, 0.0
    %v2351 = vmax.f32 %v2243, 0.0
    %v2352 = vmax.f32 %v2330, 0.0
    %v2353 = vmax.f32 %v2332, 0.0
    %v2354 = vmax.f32 %v2247, 0.0
    %v2355 = vmax.f32 %v2249, 0.0
    %v2356 = vmax.f32 %v2336, 0.0
    %v2357 = vmax.f32 %v2338, 0.0
    %v2358 = vmax.f32 %v2253, 0.0
    %v2359 = vmax.f32 %v2255, 0.0
    %v2360 = vmax.f32 %v2342, 0.0
    %v2361 = vmax.f32 %v2344, 0.0
    %v2362 = vmul.f32 %v2346, %v900
    %v2363 = vmul.f32 %v2347, %v900
    %v2364 = vmul.f32 %v2348, %v900
    %v2365 = vmul.f32 %v2349, %v900
    %v2366 = vmul.f32 %v2350, %v905
    %v2367 = vmul.f32 %v2351, %v905
    %v2368 = vmul.f32 %v2352, %v905
    %v2369 = vmul.f32 %v2353, %v905
    %v2370 = vmul.f32 %v2354, %v910
    %v2371 = vmul.f32 %v2355, %v910
    %v2372 = vmul.f32 %v2356, %v910
    %v2373 = vmul.f32 %v2357, %v910
    %v2374 = vmul.f32 %v2358, %v915
    %v2375 = vmul.f32 %v2359, %v915
    %v2376 = vmul.f32 %v2360, %v915
    %v2377 = vmul.f32 %v2361, %v915
    %v2378 = vadd.f32 %v2362, %v2366
    %v2379 = vadd.f32 %v2378, %v2370
    %v2380 = vadd.f32 %v2379, %v2374
    %v2381 = vrot.slane %v2380, 4
    %v2382 = vadd.f32 %v2380, %v2381
    %v2383 = vrot.slane %v2382, 2
    %v2384 = vadd.f32 %v2382, %v2383
    %v2385 = vrot.slane %v2384, 1
    %v2386 = vadd.f32 %v2384, %v2385
    %v2387 = vadd.f32 %v2363, %v2367
    %v2388 = vadd.f32 %v2387, %v2371
    %v2389 = vadd.f32 %v2388, %v2375
    %v2390 = vrot.slane %v2389, 4
    %v2391 = vadd.f32 %v2389, %v2390
    %v2392 = vrot.slane %v2391, 2
    %v2393 = vadd.f32 %v2391, %v2392
    %v2394 = vrot.slane %v2393, 1
    %v2395 = vadd.f32 %v2393, %v2394
    %v2396 = vadd.f32 %v2364, %v2368
    %v2397 = vadd.f32 %v2396, %v2372
    %v2398 = vadd.f32 %v2397, %v2376
    %v2399 = vrot.slane %v2398, 4
    %v2400 = vadd.f32 %v2398, %v2399
    %v2401 = vrot.slane %v2400, 2
    %v2402 = vadd.f32 %v2400, %v2401
    %v2403 = vrot.slane %v2402, 1
    %v2404 = vadd.f32 %v2402, %v2403
    %v2405 = vadd.f32 %v2365, %v2369
    %v2406 = vadd.f32 %v2405, %v2373
    %v2407 = vadd.f32 %v2406, %v2377
    %v2408 = vrot.slane %v2407, 4
    %v2409 = vadd.f32 %v2407, %v2408
    %v2410 = vrot.slane %v2409, 2
    %v2411 = vadd.f32 %v2409, %v2410
    %v2412 = vrot.slane %v2411, 1
    %v2413 = vadd.f32 %v2411, %v2412
    %v2414 = vadd.f32 %v2386, %v977
    %v2415 = vadd.f32 %v2395, %v977
    %v2416 = vadd.f32 %v2404, %v977
    %v2417 = vadd.f32 %v2413, %v977
    %v2422 = vcombine.low %v2414, %v2415
    %v2423 = vcombine.low %v2416, %v2417
    %v2425 = vunpack.c.l.s4 1966171168
    %v2426 = vunpack.c.0.s8 %v2425
    %v2427 = vlaneseq
    %v2428 = vshrl.u32 %v2427, 7
    %v2429 = vsub.s32 %v2426, %v2428
    %v2430 = vrot.slane %v2422, %v2429
    %v2432 = vunpack.c.l.s4 1966171168
    %v2433 = vunpack.c.0.s8 %v2432
    %v2434 = vlaneseq
    %v2435 = vshrl.u32 %v2434, 7
    %v2436 = vsub.s32 %v2433, %v2435
    %v2437 = vrot.slane %v2423, %v2436
    %v2438 = vcombine.low %v2430, %v2437
    %v2440 = vunpack.c.l.s4 1966171168
    %v2441 = vunpack.c.0.s8 %v2440
    %v2442 = vlaneseq
    %v2443 = vshrl.u32 %v2442, 7
    %v2444 = vsub.s32 %v2441, %v2443
    %v2445 = vrot.slane %v2438, %v2444
    %2447 = vst.msk [vmem:[#allocation3 + $0x8] sm:$0xf] %vm1014, %v2445
    %v2448 = vld [vmem:[%s0 + $0x30] sm:$0xff]
    %v2449 = vld [vmem:[%s0 + $0x38] sm:$0xff]
    %v2452 = vlaneseq
    %v2453 = vshrl.u32 %v2452, 7
    %v2454 = vsub.s32 0, %v2453
    %v2455 = vrot.slane %v2448, %v2454
    %v2456 = vlaneseq
    %v2457 = vshrl.u32 %v2456, 7
    %v2458 = vsub.s32 4, %v2457
    %v2459 = vrot.slane %v2448, %v2458
    %v2460 = vlaneseq
    %v2461 = vshrl.u32 %v2460, 7
    %v2462 = vsub.s32 0, %v2461
    %v2463 = vrot.slane %v2449, %v2462
    %v2464 = vlaneseq
    %v2465 = vshrl.u32 %v2464, 7
    %v2466 = vsub.s32 4, %v2465
    %v2467 = vrot.slane %v2449, %v2466
    %v2472 = vlaneseq
    %v2473 = vshrl.u32 %v2472, 7
    %v2474 = vsub.s32 0, %v2473
    %v2475 = vrot.slane %v2455, %v2474
    %v2476 = vlaneseq
    %v2477 = vshrl.u32 %v2476, 7
    %v2478 = vsub.s32 0, %v2477
    %v2479 = vrot.slane %v2459, %v2478
    %v2480 = vlaneseq
    %v2481 = vshrl.u32 %v2480, 7
    %v2482 = vsub.s32 0, %v2481
    %v2483 = vrot.slane %v2463, %v2482
    %v2484 = vlaneseq
    %v2485 = vshrl.u32 %v2484, 7
    %v2486 = vsub.s32 0, %v2485
    %v2487 = vrot.slane %v2467, %v2486
    %v2488 = vmul.f32 %v63, %v2475
    %v2489 = vmul.f32 %v63, %v2479
    %v2490 = vmul.f32 %v63, %v2483
    %v2491 = vmul.f32 %v63, %v2487
    %v2492 = vmul.f32 %v68, %v2475
    %v2493 = vmul.f32 %v68, %v2479
    %v2494 = vmul.f32 %v68, %v2483
    %v2495 = vmul.f32 %v68, %v2487
    %v2496 = vmul.f32 %v73, %v2475
    %v2497 = vmul.f32 %v73, %v2479
    %v2498 = vmul.f32 %v73, %v2483
    %v2499 = vmul.f32 %v73, %v2487
    %v2500 = vmul.f32 %v78, %v2475
    %v2501 = vmul.f32 %v78, %v2479
    %v2502 = vmul.f32 %v78, %v2483
    %v2503 = vmul.f32 %v78, %v2487
    %v2504 = vmul.f32 %v83, %v2475
    %v2505 = vmul.f32 %v83, %v2479
    %v2506 = vmul.f32 %v83, %v2483
    %v2507 = vmul.f32 %v83, %v2487
    %v2508 = vmul.f32 %v88, %v2475
    %v2509 = vmul.f32 %v88, %v2479
    %v2510 = vmul.f32 %v88, %v2483
    %v2511 = vmul.f32 %v88, %v2487
    %v2512 = vmul.f32 %v93, %v2475
    %v2513 = vmul.f32 %v93, %v2479
    %v2514 = vmul.f32 %v93, %v2483
    %v2515 = vmul.f32 %v93, %v2487
    %v2516 = vmul.f32 %v98, %v2475
    %v2517 = vmul.f32 %v98, %v2479
    %v2518 = vmul.f32 %v98, %v2483
    %v2519 = vmul.f32 %v98, %v2487
    %v2520 = vlaneseq
    %v2521 = vshrl.u32 %v2520, 7
    %v2522 = vsub.s32 1, %v2521
    %v2523 = vrot.slane %v2448, %v2522
    %v2524 = vlaneseq
    %v2525 = vshrl.u32 %v2524, 7
    %v2526 = vsub.s32 5, %v2525
    %v2527 = vrot.slane %v2448, %v2526
    %v2528 = vlaneseq
    %v2529 = vshrl.u32 %v2528, 7
    %v2530 = vsub.s32 1, %v2529
    %v2531 = vrot.slane %v2449, %v2530
    %v2532 = vlaneseq
    %v2533 = vshrl.u32 %v2532, 7
    %v2534 = vsub.s32 5, %v2533
    %v2535 = vrot.slane %v2449, %v2534
    %v2540 = vlaneseq
    %v2541 = vshrl.u32 %v2540, 7
    %v2542 = vsub.s32 1, %v2541
    %v2543 = vrot.slane %v2523, %v2542
    %v2544 = vlaneseq
    %v2545 = vshrl.u32 %v2544, 7
    %v2546 = vsub.s32 1, %v2545
    %v2547 = vrot.slane %v2527, %v2546
    %v2548 = vlaneseq
    %v2549 = vshrl.u32 %v2548, 7
    %v2550 = vsub.s32 1, %v2549
    %v2551 = vrot.slane %v2531, %v2550
    %v2552 = vlaneseq
    %v2553 = vshrl.u32 %v2552, 7
    %v2554 = vsub.s32 1, %v2553
    %v2555 = vrot.slane %v2535, %v2554
    %v2556 = vmul.f32 %v172, %v2543
    %v2557 = vmul.f32 %v172, %v2547
    %v2558 = vmul.f32 %v172, %v2551
    %v2559 = vmul.f32 %v172, %v2555
    %v2560 = vmul.f32 %v176, %v2543
    %v2561 = vmul.f32 %v176, %v2547
    %v2562 = vmul.f32 %v176, %v2551
    %v2563 = vmul.f32 %v176, %v2555
    %v2564 = vmul.f32 %v180, %v2543
    %v2565 = vmul.f32 %v180, %v2547
    %v2566 = vmul.f32 %v180, %v2551
    %v2567 = vmul.f32 %v180, %v2555
    %v2568 = vmul.f32 %v184, %v2543
    %v2569 = vmul.f32 %v184, %v2547
    %v2570 = vmul.f32 %v184, %v2551
    %v2571 = vmul.f32 %v184, %v2555
    %v2572 = vmul.f32 %v188, %v2543
    %v2573 = vmul.f32 %v188, %v2547
    %v2574 = vmul.f32 %v188, %v2551
    %v2575 = vmul.f32 %v188, %v2555
    %v2576 = vmul.f32 %v192, %v2543
    %v2577 = vmul.f32 %v192, %v2547
    %v2578 = vmul.f32 %v192, %v2551
    %v2579 = vmul.f32 %v192, %v2555
    %v2580 = vmul.f32 %v196, %v2543
    %v2581 = vmul.f32 %v196, %v2547
    %v2582 = vmul.f32 %v196, %v2551
    %v2583 = vmul.f32 %v196, %v2555
    %v2584 = vmul.f32 %v200, %v2543
    %v2585 = vmul.f32 %v200, %v2547
    %v2586 = vmul.f32 %v200, %v2551
    %v2587 = vmul.f32 %v200, %v2555
    %v2588 = vadd.f32 %v2488, %v2556
    %v2589 = vadd.f32 %v2489, %v2557
    %v2590 = vadd.f32 %v2490, %v2558
    %v2591 = vadd.f32 %v2491, %v2559
    %v2592 = vadd.f32 %v2492, %v2560
    %v2593 = vadd.f32 %v2493, %v2561
    %v2594 = vadd.f32 %v2494, %v2562
    %v2595 = vadd.f32 %v2495, %v2563
    %v2596 = vadd.f32 %v2496, %v2564
    %v2597 = vadd.f32 %v2497, %v2565
    %v2598 = vadd.f32 %v2498, %v2566
    %v2599 = vadd.f32 %v2499, %v2567
    %v2600 = vadd.f32 %v2500, %v2568
    %v2601 = vadd.f32 %v2501, %v2569
    %v2602 = vadd.f32 %v2502, %v2570
    %v2603 = vadd.f32 %v2503, %v2571
    %v2604 = vadd.f32 %v2504, %v2572
    %v2605 = vadd.f32 %v2505, %v2573
    %v2606 = vadd.f32 %v2506, %v2574
    %v2607 = vadd.f32 %v2507, %v2575
    %v2608 = vadd.f32 %v2508, %v2576
    %v2609 = vadd.f32 %v2509, %v2577
    %v2610 = vadd.f32 %v2510, %v2578
    %v2611 = vadd.f32 %v2511, %v2579
    %v2612 = vadd.f32 %v2512, %v2580
    %v2613 = vadd.f32 %v2513, %v2581
    %v2614 = vadd.f32 %v2514, %v2582
    %v2615 = vadd.f32 %v2515, %v2583
    %v2616 = vadd.f32 %v2516, %v2584
    %v2617 = vadd.f32 %v2517, %v2585
    %v2618 = vadd.f32 %v2518, %v2586
    %v2619 = vadd.f32 %v2519, %v2587
    %v2620 = vlaneseq
    %v2621 = vshrl.u32 %v2620, 7
    %v2622 = vsub.s32 2, %v2621
    %v2623 = vrot.slane %v2448, %v2622
    %v2624 = vlaneseq
    %v2625 = vshrl.u32 %v2624, 7
    %v2626 = vsub.s32 6, %v2625
    %v2627 = vrot.slane %v2448, %v2626
    %v2628 = vlaneseq
    %v2629 = vshrl.u32 %v2628, 7
    %v2630 = vsub.s32 2, %v2629
    %v2631 = vrot.slane %v2449, %v2630
    %v2632 = vlaneseq
    %v2633 = vshrl.u32 %v2632, 7
    %v2634 = vsub.s32 6, %v2633
    %v2635 = vrot.slane %v2449, %v2634
    %v2640 = vlaneseq
    %v2641 = vshrl.u32 %v2640, 7
    %v2642 = vsub.s32 2, %v2641
    %v2643 = vrot.slane %v2623, %v2642
    %v2644 = vlaneseq
    %v2645 = vshrl.u32 %v2644, 7
    %v2646 = vsub.s32 2, %v2645
    %v2647 = vrot.slane %v2627, %v2646
    %v2648 = vlaneseq
    %v2649 = vshrl.u32 %v2648, 7
    %v2650 = vsub.s32 2, %v2649
    %v2651 = vrot.slane %v2631, %v2650
    %v2652 = vlaneseq
    %v2653 = vshrl.u32 %v2652, 7
    %v2654 = vsub.s32 2, %v2653
    %v2655 = vrot.slane %v2635, %v2654
    %v2656 = vmul.f32 %v304, %v2643
    %v2657 = vmul.f32 %v304, %v2647
    %v2658 = vmul.f32 %v304, %v2651
    %v2659 = vmul.f32 %v304, %v2655
    %v2660 = vmul.f32 %v308, %v2643
    %v2661 = vmul.f32 %v308, %v2647
    %v2662 = vmul.f32 %v308, %v2651
    %v2663 = vmul.f32 %v308, %v2655
    %v2664 = vmul.f32 %v312, %v2643
    %v2665 = vmul.f32 %v312, %v2647
    %v2666 = vmul.f32 %v312, %v2651
    %v2667 = vmul.f32 %v312, %v2655
    %v2668 = vmul.f32 %v316, %v2643
    %v2669 = vmul.f32 %v316, %v2647
    %v2670 = vmul.f32 %v316, %v2651
    %v2671 = vmul.f32 %v316, %v2655
    %v2672 = vmul.f32 %v320, %v2643
    %v2673 = vmul.f32 %v320, %v2647
    %v2674 = vmul.f32 %v320, %v2651
    %v2675 = vmul.f32 %v320, %v2655
    %v2676 = vmul.f32 %v324, %v2643
    %v2677 = vmul.f32 %v324, %v2647
    %v2678 = vmul.f32 %v324, %v2651
    %v2679 = vmul.f32 %v324, %v2655
    %v2680 = vmul.f32 %v328, %v2643
    %v2681 = vmul.f32 %v328, %v2647
    %v2682 = vmul.f32 %v328, %v2651
    %v2683 = vmul.f32 %v328, %v2655
    %v2684 = vmul.f32 %v332, %v2643
    %v2685 = vmul.f32 %v332, %v2647
    %v2686 = vmul.f32 %v332, %v2651
    %v2687 = vmul.f32 %v332, %v2655
    %v2688 = vadd.f32 %v2588, %v2656
    %v2689 = vadd.f32 %v2589, %v2657
    %v2690 = vadd.f32 %v2590, %v2658
    %v2691 = vadd.f32 %v2591, %v2659
    %v2692 = vadd.f32 %v2592, %v2660
    %v2693 = vadd.f32 %v2593, %v2661
    %v2694 = vadd.f32 %v2594, %v2662
    %v2695 = vadd.f32 %v2595, %v2663
    %v2696 = vadd.f32 %v2596, %v2664
    %v2697 = vadd.f32 %v2597, %v2665
    %v2698 = vadd.f32 %v2598, %v2666
    %v2699 = vadd.f32 %v2599, %v2667
    %v2700 = vadd.f32 %v2600, %v2668
    %v2701 = vadd.f32 %v2601, %v2669
    %v2702 = vadd.f32 %v2602, %v2670
    %v2703 = vadd.f32 %v2603, %v2671
    %v2704 = vadd.f32 %v2604, %v2672
    %v2705 = vadd.f32 %v2605, %v2673
    %v2706 = vadd.f32 %v2606, %v2674
    %v2707 = vadd.f32 %v2607, %v2675
    %v2708 = vadd.f32 %v2608, %v2676
    %v2709 = vadd.f32 %v2609, %v2677
    %v2710 = vadd.f32 %v2610, %v2678
    %v2711 = vadd.f32 %v2611, %v2679
    %v2712 = vadd.f32 %v2612, %v2680
    %v2713 = vadd.f32 %v2613, %v2681
    %v2714 = vadd.f32 %v2614, %v2682
    %v2715 = vadd.f32 %v2615, %v2683
    %v2716 = vadd.f32 %v2616, %v2684
    %v2717 = vadd.f32 %v2617, %v2685
    %v2718 = vadd.f32 %v2618, %v2686
    %v2719 = vadd.f32 %v2619, %v2687
    %v2720 = vlaneseq
    %v2721 = vshrl.u32 %v2720, 7
    %v2722 = vsub.s32 3, %v2721
    %v2723 = vrot.slane %v2448, %v2722
    %v2724 = vlaneseq
    %v2725 = vshrl.u32 %v2724, 7
    %v2726 = vsub.s32 7, %v2725
    %v2727 = vrot.slane %v2448, %v2726
    %v2728 = vlaneseq
    %v2729 = vshrl.u32 %v2728, 7
    %v2730 = vsub.s32 3, %v2729
    %v2731 = vrot.slane %v2449, %v2730
    %v2732 = vlaneseq
    %v2733 = vshrl.u32 %v2732, 7
    %v2734 = vsub.s32 7, %v2733
    %v2735 = vrot.slane %v2449, %v2734
    %v2740 = vlaneseq
    %v2741 = vshrl.u32 %v2740, 7
    %v2742 = vsub.s32 3, %v2741
    %v2743 = vrot.slane %v2723, %v2742
    %v2744 = vlaneseq
    %v2745 = vshrl.u32 %v2744, 7
    %v2746 = vsub.s32 3, %v2745
    %v2747 = vrot.slane %v2727, %v2746
    %v2748 = vlaneseq
    %v2749 = vshrl.u32 %v2748, 7
    %v2750 = vsub.s32 3, %v2749
    %v2751 = vrot.slane %v2731, %v2750
    %v2752 = vlaneseq
    %v2753 = vshrl.u32 %v2752, 7
    %v2754 = vsub.s32 3, %v2753
    %v2755 = vrot.slane %v2735, %v2754
    %v2756 = vmul.f32 %v436, %v2743
    %v2757 = vmul.f32 %v436, %v2747
    %v2758 = vmul.f32 %v436, %v2751
    %v2759 = vmul.f32 %v436, %v2755
    %v2760 = vmul.f32 %v440, %v2743
    %v2761 = vmul.f32 %v440, %v2747
    %v2762 = vmul.f32 %v440, %v2751
    %v2763 = vmul.f32 %v440, %v2755
    %v2764 = vmul.f32 %v444, %v2743
    %v2765 = vmul.f32 %v444, %v2747
    %v2766 = vmul.f32 %v444, %v2751
    %v2767 = vmul.f32 %v444, %v2755
    %v2768 = vmul.f32 %v448, %v2743
    %v2769 = vmul.f32 %v448, %v2747
    %v2770 = vmul.f32 %v448, %v2751
    %v2771 = vmul.f32 %v448, %v2755
    %v2772 = vmul.f32 %v452, %v2743
    %v2773 = vmul.f32 %v452, %v2747
    %v2774 = vmul.f32 %v452, %v2751
    %v2775 = vmul.f32 %v452, %v2755
    %v2776 = vmul.f32 %v456, %v2743
    %v2777 = vmul.f32 %v456, %v2747
    %v2778 = vmul.f32 %v456, %v2751
    %v2779 = vmul.f32 %v456, %v2755
    %v2780 = vmul.f32 %v460, %v2743
    %v2781 = vmul.f32 %v460, %v2747
    %v2782 = vmul.f32 %v460, %v2751
    %v2783 = vmul.f32 %v460, %v2755
    %v2784 = vmul.f32 %v464, %v2743
    %v2785 = vmul.f32 %v464, %v2747
    %v2786 = vmul.f32 %v464, %v2751
    %v2787 = vmul.f32 %v464, %v2755
    %v2788 = vadd.f32 %v2688, %v2756
    %v2789 = vadd.f32 %v2689, %v2757
    %v2790 = vadd.f32 %v2690, %v2758
    %v2791 = vadd.f32 %v2691, %v2759
    %v2792 = vadd.f32 %v2692, %v2760
    %v2793 = vadd.f32 %v2693, %v2761
    %v2794 = vadd.f32 %v2694, %v2762
    %v2795 = vadd.f32 %v2695, %v2763
    %v2796 = vadd.f32 %v2696, %v2764
    %v2797 = vadd.f32 %v2697, %v2765
    %v2798 = vadd.f32 %v2698, %v2766
    %v2799 = vadd.f32 %v2699, %v2767
    %v2800 = vadd.f32 %v2700, %v2768
    %v2801 = vadd.f32 %v2701, %v2769
    %v2802 = vadd.f32 %v2702, %v2770
    %v2803 = vadd.f32 %v2703, %v2771
    %v2804 = vadd.f32 %v2704, %v2772
    %v2805 = vadd.f32 %v2705, %v2773
    %v2806 = vadd.f32 %v2706, %v2774
    %v2807 = vadd.f32 %v2707, %v2775
    %v2808 = vadd.f32 %v2708, %v2776
    %v2809 = vadd.f32 %v2709, %v2777
    %v2810 = vadd.f32 %v2710, %v2778
    %v2811 = vadd.f32 %v2711, %v2779
    %v2812 = vadd.f32 %v2712, %v2780
    %v2813 = vadd.f32 %v2713, %v2781
    %v2814 = vadd.f32 %v2714, %v2782
    %v2815 = vadd.f32 %v2715, %v2783
    %v2816 = vadd.f32 %v2716, %v2784
    %v2817 = vadd.f32 %v2717, %v2785
    %v2818 = vadd.f32 %v2718, %v2786
    %v2819 = vadd.f32 %v2719, %v2787
    %v2820 = vadd.f32 %v2788, %v569
    %v2821 = vadd.f32 %v2789, %v569
    %v2822 = vadd.f32 %v2790, %v569
    %v2823 = vadd.f32 %v2791, %v569
    %v2824 = vadd.f32 %v2792, %v574
    %v2825 = vadd.f32 %v2793, %v574
    %v2826 = vadd.f32 %v2794, %v574
    %v2827 = vadd.f32 %v2795, %v574
    %v2828 = vadd.f32 %v2796, %v579
    %v2829 = vadd.f32 %v2797, %v579
    %v2830 = vadd.f32 %v2798, %v579
    %v2831 = vadd.f32 %v2799, %v579
    %v2832 = vadd.f32 %v2800, %v584
    %v2833 = vadd.f32 %v2801, %v584
    %v2834 = vadd.f32 %v2802, %v584
    %v2835 = vadd.f32 %v2803, %v584
    %v2836 = vadd.f32 %v2804, %v589
    %v2837 = vadd.f32 %v2805, %v589
    %v2838 = vadd.f32 %v2806, %v589
    %v2839 = vadd.f32 %v2807, %v589
    %v2840 = vadd.f32 %v2808, %v594
    %v2841 = vadd.f32 %v2809, %v594
    %v2842 = vadd.f32 %v2810, %v594
    %v2843 = vadd.f32 %v2811, %v594
    %v2844 = vadd.f32 %v2812, %v599
    %v2845 = vadd.f32 %v2813, %v599
    %v2846 = vadd.f32 %v2814, %v599
    %v2847 = vadd.f32 %v2815, %v599
    %v2848 = vadd.f32 %v2816, %v604
    %v2849 = vadd.f32 %v2817, %v604
    %v2850 = vadd.f32 %v2818, %v604
    %v2851 = vadd.f32 %v2819, %v604
    %v2852 = vmax.f32 %v2820, 0.0
    %v2853 = vmax.f32 %v2821, 0.0
    %v2854 = vmax.f32 %v2822, 0.0
    %v2855 = vmax.f32 %v2823, 0.0
    %v2856 = vmax.f32 %v2824, 0.0
    %v2857 = vmax.f32 %v2825, 0.0
    %v2858 = vmax.f32 %v2826, 0.0
    %v2859 = vmax.f32 %v2827, 0.0
    %v2860 = vmax.f32 %v2828, 0.0
    %v2861 = vmax.f32 %v2829, 0.0
    %v2862 = vmax.f32 %v2830, 0.0
    %v2863 = vmax.f32 %v2831, 0.0
    %v2864 = vmax.f32 %v2832, 0.0
    %v2865 = vmax.f32 %v2833, 0.0
    %v2866 = vmax.f32 %v2834, 0.0
    %v2867 = vmax.f32 %v2835, 0.0
    %v2868 = vmax.f32 %v2836, 0.0
    %v2869 = vmax.f32 %v2837, 0.0
    %v2870 = vmax.f32 %v2838, 0.0
    %v2871 = vmax.f32 %v2839, 0.0
    %v2872 = vmax.f32 %v2840, 0.0
    %v2873 = vmax.f32 %v2841, 0.0
    %v2874 = vmax.f32 %v2842, 0.0
    %v2875 = vmax.f32 %v2843, 0.0
    %v2876 = vmax.f32 %v2844, 0.0
    %v2877 = vmax.f32 %v2845, 0.0
    %v2878 = vmax.f32 %v2846, 0.0
    %v2879 = vmax.f32 %v2847, 0.0
    %v2880 = vmax.f32 %v2848, 0.0
    %v2881 = vmax.f32 %v2849, 0.0
    %v2882 = vmax.f32 %v2850, 0.0
    %v2883 = vmax.f32 %v2851, 0.0
    %2884 = vmatprep.subr.mxu0 %v2853
    %2885 = vmatpush1.msra.mxu0 %v2852
    %2886 = vmatprep.subr.mxu0 %v2857
    %2887 = vmatpush1.msra.mxu0 %v2856
    %2888 = vmatprep.subr.mxu0 %v2861
    %2889 = vmatpush1.msra.mxu0 %v2860
    %2890 = vmatprep.subr.mxu0 %v2865
    %2891 = vmatpush1.msra.mxu0 %v2864
    %2892 = vmatprep.subr.mxu0 %v2869
    %2893 = vmatpush1.msra.mxu0 %v2868
    %2894 = vmatprep.subr.mxu0 %v2873
    %2895 = vmatpush1.msra.mxu0 %v2872
    %2896 = vmatprep.subr.mxu0 %v2877
    %2897 = vmatpush1.msra.mxu0 %v2876
    %2898 = vmatprep.subr.mxu0 %v2881
    %2899 = vmatpush1.msra.mxu0 %v2880
    %2900 = vmatprep.subr.mxu0 0.0
    %2901 = vmatpush1.msra.mxu0 0.0
    %2902 = vmatprep.subr.mxu0 0.0
    %2903 = vmatpush1.msra.mxu0 0.0
    %2904 = vmatprep.subr.mxu0 0.0
    %2905 = vmatpush1.msra.mxu0 0.0
    %2906 = vmatprep.subr.mxu0 0.0
    %2907 = vmatpush1.msra.mxu0 0.0
    %2908 = vmatprep.subr.mxu0 0.0
    %2909 = vmatpush1.msra.mxu0 0.0
    %2910 = vmatprep.subr.mxu0 0.0
    %2911 = vmatpush1.msra.mxu0 0.0
    %2912 = vmatprep.subr.mxu0 0.0
    %2913 = vmatpush1.msra.mxu0 0.0
    %2914 = vmatprep.subr.mxu0 0.0
    %2915 = vmatpush1.msra.mxu0 0.0
    %2916 = vmatprep.subr.mxu0 0.0
    %2917 = vmatpush1.msra.mxu0 0.0
    %2918 = vmatprep.subr.mxu0 0.0
    %2919 = vmatpush1.msra.mxu0 0.0
    %2920 = vmatprep.subr.mxu0 0.0
    %2921 = vmatpush1.msra.mxu0 0.0
    %2922 = vmatprep.subr.mxu0 0.0
    %2923 = vmatpush1.msra.mxu0 0.0
    %2924 = vmatprep.subr.mxu0 0.0
    %2925 = vmatpush1.msra.mxu0 0.0
    %2926 = vmatprep.subr.mxu0 0.0
    %2927 = vmatpush1.msra.mxu0 0.0
    %2928 = vmatprep.subr.mxu0 0.0
    %2929 = vmatpush1.msra.mxu0 0.0
    %2930 = vmatprep.subr.mxu0 0.0
    %2931 = vmatpush1.msra.mxu0 0.0
    %2932 = vmatprep.subr.mxu0 0.0
    %2933 = vmatpush1.msra.mxu0 0.0
    %2934 = vmatprep.subr.mxu0 0.0
    %2935 = vmatpush1.msra.mxu0 0.0
    %2936 = vmatprep.subr.mxu0 0.0
    %2937 = vmatpush1.msra.mxu0 0.0
    %2938 = vmatprep.subr.mxu0 0.0
    %2939 = vmatpush1.msra.mxu0 0.0
    %2940 = vmatprep.subr.mxu0 0.0
    %2941 = vmatpush1.msra.mxu0 0.0
    %2942 = vmatprep.subr.mxu0 0.0
    %2943 = vmatpush1.msra.mxu0 0.0
    %2944 = vmatprep.subr.mxu0 0.0
    %2945 = vmatpush1.msra.mxu0 0.0
    %2946 = vmatprep.subr.mxu0 0.0
    %2947 = vmatpush1.msra.mxu0 0.0
    %2948 = vmatprep.mubr.f32.mxu0 0.0
    %2949 = vmatmul.mubr.f32.gmra.mrb[0].mxu0 %v692
    %v2950 = vpop.f32.mrb[0].mxu0
    %v2951 = vadd.f32 %v673, %v2950
    %v2952 = vpop.f32.mrb[0].mxu0
    %v2953 = vadd.f32 %v673, %v2952
    %2954 = vmatprep.mubr.f32.mxu0 0.0
    %2955 = vmatmul.mubr.f32.gmra.mrb[0].mxu0 %v695
    %v2956 = vpop.f32.mrb[0].mxu0
    %v2957 = vadd.f32 %v678, %v2956
    %v2958 = vpop.f32.mrb[0].mxu0
    %v2959 = vadd.f32 %v678, %v2958
    %2960 = vmatprep.mubr.f32.mxu0 0.0
    %2961 = vmatmul.mubr.f32.gmra.mrb[0].mxu0 %v698
    %v2962 = vpop.f32.mrb[0].mxu0
    %v2963 = vadd.f32 %v683, %v2962
    %v2964 = vpop.f32.mrb[0].mxu0
    %v2965 = vadd.f32 %v683, %v2964
    %2966 = vmatprep.mubr.f32.mxu0 0.0
    %2967 = vmatmul.mubr.f32.gmra.mrb[0].mxu0 %v701
    %v2968 = vpop.f32.mrb[0].mxu0
    %v2969 = vadd.f32 %v688, %v2968
    %v2970 = vpop.f32.mrb[0].mxu0
    %v2971 = vadd.f32 %v688, %v2970
    %2972 = vdwg.mxu0
    %2973 = vmatprep.subr.mxu0 %v2855
    %2974 = vmatpush1.msra.mxu0 %v2854
    %2975 = vmatprep.subr.mxu0 %v2859
    %2976 = vmatpush1.msra.mxu0 %v2858
    %2977 = vmatprep.subr.mxu0 %v2863
    %2978 = vmatpush1.msra.mxu0 %v2862
    %2979 = vmatprep.subr.mxu0 %v2867
    %2980 = vmatpush1.msra.mxu0 %v2866
    %2981 = vmatprep.subr.mxu0 %v2871
    %2982 = vmatpush1.msra.mxu0 %v2870
    %2983 = vmatprep.subr.mxu0 %v2875
    %2984 = vmatpush1.msra.mxu0 %v2874
    %2985 = vmatprep.subr.mxu0 %v2879
    %2986 = vmatpush1.msra.mxu0 %v2878
    %2987 = vmatprep.subr.mxu0 %v2883
    %2988 = vmatpush1.msra.mxu0 %v2882
    %2989 = vmatprep.subr.mxu0 0.0
    %2990 = vmatpush1.msra.mxu0 0.0
    %2991 = vmatprep.subr.mxu0 0.0
    %2992 = vmatpush1.msra.mxu0 0.0
    %2993 = vmatprep.subr.mxu0 0.0
    %2994 = vmatpush1.msra.mxu0 0.0
    %2995 = vmatprep.subr.mxu0 0.0
    %2996 = vmatpush1.msra.mxu0 0.0
    %2997 = vmatprep.subr.mxu0 0.0
    %2998 = vmatpush1.msra.mxu0 0.0
    %2999 = vmatprep.subr.mxu0 0.0
    %3000 = vmatpush1.msra.mxu0 0.0
    %3001 = vmatprep.subr.mxu0 0.0
    %3002 = vmatpush1.msra.mxu0 0.0
    %3003 = vmatprep.subr.mxu0 0.0
    %3004 = vmatpush1.msra.mxu0 0.0
    %3005 = vmatprep.subr.mxu0 0.0
    %3006 = vmatpush1.msra.mxu0 0.0
    %3007 = vmatprep.subr.mxu0 0.0
    %3008 = vmatpush1.msra.mxu0 0.0
    %3009 = vmatprep.subr.mxu0 0.0
    %3010 = vmatpush1.msra.mxu0 0.0
    %3011 = vmatprep.subr.mxu0 0.0
    %3012 = vmatpush1.msra.mxu0 0.0
    %3013 = vmatprep.subr.mxu0 0.0
    %3014 = vmatpush1.msra.mxu0 0.0
    %3015 = vmatprep.subr.mxu0 0.0
    %3016 = vmatpush1.msra.mxu0 0.0
    %3017 = vmatprep.subr.mxu0 0.0
    %3018 = vmatpush1.msra.mxu0 0.0
    %3019 = vmatprep.subr.mxu0 0.0
    %3020 = vmatpush1.msra.mxu0 0.0
    %3021 = vmatprep.subr.mxu0 0.0
    %3022 = vmatpush1.msra.mxu0 0.0
    %3023 = vmatprep.subr.mxu0 0.0
    %3024 = vmatpush1.msra.mxu0 0.0
    %3025 = vmatprep.subr.mxu0 0.0
    %3026 = vmatpush1.msra.mxu0 0.0
    %3027 = vmatprep.subr.mxu0 0.0
    %3028 = vmatpush1.msra.mxu0 0.0
    %3029 = vmatprep.subr.mxu0 0.0
    %3030 = vmatpush1.msra.mxu0 0.0
    %3031 = vmatprep.subr.mxu0 0.0
    %3032 = vmatpush1.msra.mxu0 0.0
    %3033 = vmatprep.subr.mxu0 0.0
    %3034 = vmatpush1.msra.mxu0 0.0
    %3035 = vmatprep.subr.mxu0 0.0
    %3036 = vmatpush1.msra.mxu0 0.0
    %3037 = vmatprep.mubr.f32.mxu0 0.0
    %3038 = vmatmul.mubr.f32.gmra.mrb[0].mxu0 %v692
    %v3039 = vpop.f32.mrb[0].mxu0
    %v3040 = vadd.f32 %v673, %v3039
    %v3041 = vpop.f32.mrb[0].mxu0
    %v3042 = vadd.f32 %v673, %v3041
    %3043 = vmatprep.mubr.f32.mxu0 0.0
    %3044 = vmatmul.mubr.f32.gmra.mrb[0].mxu0 %v695
    %v3045 = vpop.f32.mrb[0].mxu0
    %v3046 = vadd.f32 %v678, %v3045
    %v3047 = vpop.f32.mrb[0].mxu0
    %v3048 = vadd.f32 %v678, %v3047
    %3049 = vmatprep.mubr.f32.mxu0 0.0
    %3050 = vmatmul.mubr.f32.gmra.mrb[0].mxu0 %v698
    %v3051 = vpop.f32.mrb[0].mxu0
    %v3052 = vadd.f32 %v683, %v3051
    %v3053 = vpop.f32.mrb[0].mxu0
    %v3054 = vadd.f32 %v683, %v3053
    %3055 = vmatprep.mubr.f32.mxu0 0.0
    %3056 = vmatmul.mubr.f32.gmra.mrb[0].mxu0 %v701
    %v3057 = vpop.f32.mrb[0].mxu0
    %v3058 = vadd.f32 %v688, %v3057
    %v3059 = vpop.f32.mrb[0].mxu0
    %v3060 = vadd.f32 %v688, %v3059
    %3061 = vdwg.mxu0
    %v3062 = vmax.f32 %v2951, 0.0
    %v3063 = vmax.f32 %v2953, 0.0
    %v3064 = vmax.f32 %v3040, 0.0
    %v3065 = vmax.f32 %v3042, 0.0
    %v3066 = vmax.f32 %v2957, 0.0
    %v3067 = vmax.f32 %v2959, 0.0
    %v3068 = vmax.f32 %v3046, 0.0
    %v3069 = vmax.f32 %v3048, 0.0
    %v3070 = vmax.f32 %v2963, 0.0
    %v3071 = vmax.f32 %v2965, 0.0
    %v3072 = vmax.f32 %v3052, 0.0
    %v3073 = vmax.f32 %v3054, 0.0
    %v3074 = vmax.f32 %v2969, 0.0
    %v3075 = vmax.f32 %v2971, 0.0
    %v3076 = vmax.f32 %v3058, 0.0
    %v3077 = vmax.f32 %v3060, 0.0
    %v3078 = vmul.f32 %v3062, %v900
    %v3079 = vmul.f32 %v3063, %v900
    %v3080 = vmul.f32 %v3064, %v900
    %v3081 = vmul.f32 %v3065, %v900
    %v3082 = vmul.f32 %v3066, %v905
    %v3083 = vmul.f32 %v3067, %v905
    %v3084 = vmul.f32 %v3068, %v905
    %v3085 = vmul.f32 %v3069, %v905
    %v3086 = vmul.f32 %v3070, %v910
    %v3087 = vmul.f32 %v3071, %v910
    %v3088 = vmul.f32 %v3072, %v910
    %v3089 = vmul.f32 %v3073, %v910
    %v3090 = vmul.f32 %v3074, %v915
    %v3091 = vmul.f32 %v3075, %v915
    %v3092 = vmul.f32 %v3076, %v915
    %v3093 = vmul.f32 %v3077, %v915
    %v3094 = vadd.f32 %v3078, %v3082
    %v3095 = vadd.f32 %v3094, %v3086
    %v3096 = vadd.f32 %v3095, %v3090
    %v3097 = vrot.slane %v3096, 4
    %v3098 = vadd.f32 %v3096, %v3097
    %v3099 = vrot.slane %v3098, 2
    %v3100 = vadd.f32 %v3098, %v3099
    %v3101 = vrot.slane %v3100, 1
    %v3102 = vadd.f32 %v3100, %v3101
    %v3103 = vadd.f32 %v3079, %v3083
    %v3104 = vadd.f32 %v3103, %v3087
    %v3105 = vadd.f32 %v3104, %v3091
    %v3106 = vrot.slane %v3105, 4
    %v3107 = vadd.f32 %v3105, %v3106
    %v3108 = vrot.slane %v3107, 2
    %v3109 = vadd.f32 %v3107, %v3108
    %v3110 = vrot.slane %v3109, 1
    %v3111 = vadd.f32 %v3109, %v3110
    %v3112 = vadd.f32 %v3080, %v3084
    %v3113 = vadd.f32 %v3112, %v3088
    %v3114 = vadd.f32 %v3113, %v3092
    %v3115 = vrot.slane %v3114, 4
    %v3116 = vadd.f32 %v3114, %v3115
    %v3117 = vrot.slane %v3116, 2
    %v3118 = vadd.f32 %v3116, %v3117
    %v3119 = vrot.slane %v3118, 1
    %v3120 = vadd.f32 %v3118, %v3119
    %v3121 = vadd.f32 %v3081, %v3085
    %v3122 = vadd.f32 %v3121, %v3089
    %v3123 = vadd.f32 %v3122, %v3093
    %v3124 = vrot.slane %v3123, 4
    %v3125 = vadd.f32 %v3123, %v3124
    %v3126 = vrot.slane %v3125, 2
    %v3127 = vadd.f32 %v3125, %v3126
    %v3128 = vrot.slane %v3127, 1
    %v3129 = vadd.f32 %v3127, %v3128
    %v3130 = vadd.f32 %v3102, %v977
    %v3131 = vadd.f32 %v3111, %v977
    %v3132 = vadd.f32 %v3120, %v977
    %v3133 = vadd.f32 %v3129, %v977
    %v3138 = vcombine.low %v3130, %v3131
    %v3139 = vcombine.low %v3132, %v3133
    %v3141 = vunpack.c.l.s4 1966171168
    %v3142 = vunpack.c.0.s8 %v3141
    %v3143 = vlaneseq
    %v3144 = vshrl.u32 %v3143, 7
    %v3145 = vsub.s32 %v3142, %v3144
    %v3146 = vrot.slane %v3138, %v3145
    %v3148 = vunpack.c.l.s4 1966171168
    %v3149 = vunpack.c.0.s8 %v3148
    %v3150 = vlaneseq
    %v3151 = vshrl.u32 %v3150, 7
    %v3152 = vsub.s32 %v3149, %v3151
    %v3153 = vrot.slane %v3139, %v3152
    %v3154 = vcombine.low %v3146, %v3153
    %v3156 = vunpack.c.l.s4 1966171168
    %v3157 = vunpack.c.0.s8 %v3156
    %v3158 = vlaneseq
    %v3159 = vshrl.u32 %v3158, 7
    %v3160 = vsub.s32 %v3157, %v3159
    %v3161 = vrot.slane %v3154, %v3160
    %3163 = vst.msk [vmem:[#allocation3 + $0xc] sm:$0xf] %vm1014, %v3161
    %v3164 = vld [vmem:[%s0 + $0x40] sm:$0xff]
    %v3165 = vld [vmem:[%s0 + $0x48] sm:$0xff]
    %v3168 = vlaneseq
    %v3169 = vshrl.u32 %v3168, 7
    %v3170 = vsub.s32 0, %v3169
    %v3171 = vrot.slane %v3164, %v3170
    %v3172 = vlaneseq
    %v3173 = vshrl.u32 %v3172, 7
    %v3174 = vsub.s32 4, %v3173
    %v3175 = vrot.slane %v3164, %v3174
    %v3176 = vlaneseq
    %v3177 = vshrl.u32 %v3176, 7
    %v3178 = vsub.s32 0, %v3177
    %v3179 = vrot.slane %v3165, %v3178
    %v3180 = vlaneseq
    %v3181 = vshrl.u32 %v3180, 7
    %v3182 = vsub.s32 4, %v3181
    %v3183 = vrot.slane %v3165, %v3182
    %v3188 = vlaneseq
    %v3189 = vshrl.u32 %v3188, 7
    %v3190 = vsub.s32 0, %v3189
    %v3191 = vrot.slane %v3171, %v3190
    %v3192 = vlaneseq
    %v3193 = vshrl.u32 %v3192, 7
    %v3194 = vsub.s32 0, %v3193
    %v3195 = vrot.slane %v3175, %v3194
    %v3196 = vlaneseq
    %v3197 = vshrl.u32 %v3196, 7
    %v3198 = vsub.s32 0, %v3197
    %v3199 = vrot.slane %v3179, %v3198
    %v3200 = vlaneseq
    %v3201 = vshrl.u32 %v3200, 7
    %v3202 = vsub.s32 0, %v3201
    %v3203 = vrot.slane %v3183, %v3202
    %v3204 = vmul.f32 %v63, %v3191
    %v3205 = vmul.f32 %v63, %v3195
    %v3206 = vmul.f32 %v63, %v3199
    %v3207 = vmul.f32 %v63, %v3203
    %v3208 = vmul.f32 %v68, %v3191
    %v3209 = vmul.f32 %v68, %v3195
    %v3210 = vmul.f32 %v68, %v3199
    %v3211 = vmul.f32 %v68, %v3203
    %v3212 = vmul.f32 %v73, %v3191
    %v3213 = vmul.f32 %v73, %v3195
    %v3214 = vmul.f32 %v73, %v3199
    %v3215 = vmul.f32 %v73, %v3203
    %v3216 = vmul.f32 %v78, %v3191
    %v3217 = vmul.f32 %v78, %v3195
    %v3218 = vmul.f32 %v78, %v3199
    %v3219 = vmul.f32 %v78, %v3203
    %v3220 = vmul.f32 %v83, %v3191
    %v3221 = vmul.f32 %v83, %v3195
    %v3222 = vmul.f32 %v83, %v3199
    %v3223 = vmul.f32 %v83, %v3203
    %v3224 = vmul.f32 %v88, %v3191
    %v3225 = vmul.f32 %v88, %v3195
    %v3226 = vmul.f32 %v88, %v3199
    %v3227 = vmul.f32 %v88, %v3203
    %v3228 = vmul.f32 %v93, %v3191
    %v3229 = vmul.f32 %v93, %v3195
    %v3230 = vmul.f32 %v93, %v3199
    %v3231 = vmul.f32 %v93, %v3203
    %v3232 = vmul.f32 %v98, %v3191
    %v3233 = vmul.f32 %v98, %v3195
    %v3234 = vmul.f32 %v98, %v3199
    %v3235 = vmul.f32 %v98, %v3203
    %v3236 = vlaneseq
    %v3237 = vshrl.u32 %v3236, 7
    %v3238 = vsub.s32 1, %v3237
    %v3239 = vrot.slane %v3164, %v3238
    %v3240 = vlaneseq
    %v3241 = vshrl.u32 %v3240, 7
    %v3242 = vsub.s32 5, %v3241
    %v3243 = vrot.slane %v3164, %v3242
    %v3244 = vlaneseq
    %v3245 = vshrl.u32 %v3244, 7
    %v3246 = vsub.s32 1, %v3245
    %v3247 = vrot.slane %v3165, %v3246
    %v3248 = vlaneseq
    %v3249 = vshrl.u32 %v3248, 7
    %v3250 = vsub.s32 5, %v3249
    %v3251 = vrot.slane %v3165, %v3250
    %v3256 = vlaneseq
    %v3257 = vshrl.u32 %v3256, 7
    %v3258 = vsub.s32 1, %v3257
    %v3259 = vrot.slane %v3239, %v3258
    %v3260 = vlaneseq
    %v3261 = vshrl.u32 %v3260, 7
    %v3262 = vsub.s32 1, %v3261
    %v3263 = vrot.slane %v3243, %v3262
    %v3264 = vlaneseq
    %v3265 = vshrl.u32 %v3264, 7
    %v3266 = vsub.s32 1, %v3265
    %v3267 = vrot.slane %v3247, %v3266
    %v3268 = vlaneseq
    %v3269 = vshrl.u32 %v3268, 7
    %v3270 = vsub.s32 1, %v3269
    %v3271 = vrot.slane %v3251, %v3270
    %v3272 = vmul.f32 %v172, %v3259
    %v3273 = vmul.f32 %v172, %v3263
    %v3274 = vmul.f32 %v172, %v3267
    %v3275 = vmul.f32 %v172, %v3271
    %v3276 = vmul.f32 %v176, %v3259
    %v3277 = vmul.f32 %v176, %v3263
    %v3278 = vmul.f32 %v176, %v3267
    %v3279 = vmul.f32 %v176, %v3271
    %v3280 = vmul.f32 %v180, %v3259
    %v3281 = vmul.f32 %v180, %v3263
    %v3282 = vmul.f32 %v180, %v3267
    %v3283 = vmul.f32 %v180, %v3271
    %v3284 = vmul.f32 %v184, %v3259
    %v3285 = vmul.f32 %v184, %v3263
    %v3286 = vmul.f32 %v184, %v3267
    %v3287 = vmul.f32 %v184, %v3271
    %v3288 = vmul.f32 %v188, %v3259
    %v3289 = vmul.f32 %v188, %v3263
    %v3290 = vmul.f32 %v188, %v3267
    %v3291 = vmul.f32 %v188, %v3271
    %v3292 = vmul.f32 %v192, %v3259
    %v3293 = vmul.f32 %v192, %v3263
    %v3294 = vmul.f32 %v192, %v3267
    %v3295 = vmul.f32 %v192, %v3271
    %v3296 = vmul.f32 %v196, %v3259
    %v3297 = vmul.f32 %v196, %v3263
    %v3298 = vmul.f32 %v196, %v3267
    %v3299 = vmul.f32 %v196, %v3271
    %v3300 = vmul.f32 %v200, %v3259
    %v3301 = vmul.f32 %v200, %v3263
    %v3302 = vmul.f32 %v200, %v3267
    %v3303 = vmul.f32 %v200, %v3271
    %v3304 = vadd.f32 %v3204, %v3272
    %v3305 = vadd.f32 %v3205, %v3273
    %v3306 = vadd.f32 %v3206, %v3274
    %v3307 = vadd.f32 %v3207, %v3275
    %v3308 = vadd.f32 %v3208, %v3276
    %v3309 = vadd.f32 %v3209, %v3277
    %v3310 = vadd.f32 %v3210, %v3278
    %v3311 = vadd.f32 %v3211, %v3279
    %v3312 = vadd.f32 %v3212, %v3280
    %v3313 = vadd.f32 %v3213, %v3281
    %v3314 = vadd.f32 %v3214, %v3282
    %v3315 = vadd.f32 %v3215, %v3283
    %v3316 = vadd.f32 %v3216, %v3284
    %v3317 = vadd.f32 %v3217, %v3285
    %v3318 = vadd.f32 %v3218, %v3286
    %v3319 = vadd.f32 %v3219, %v3287
    %v3320 = vadd.f32 %v3220, %v3288
    %v3321 = vadd.f32 %v3221, %v3289
    %v3322 = vadd.f32 %v3222, %v3290
    %v3323 = vadd.f32 %v3223, %v3291
    %v3324 = vadd.f32 %v3224, %v3292
    %v3325 = vadd.f32 %v3225, %v3293
    %v3326 = vadd.f32 %v3226, %v3294
    %v3327 = vadd.f32 %v3227, %v3295
    %v3328 = vadd.f32 %v3228, %v3296
    %v3329 = vadd.f32 %v3229, %v3297
    %v3330 = vadd.f32 %v3230, %v3298
    %v3331 = vadd.f32 %v3231, %v3299
    %v3332 = vadd.f32 %v3232, %v3300
    %v3333 = vadd.f32 %v3233, %v3301
    %v3334 = vadd.f32 %v3234, %v3302
    %v3335 = vadd.f32 %v3235, %v3303
    %v3336 = vlaneseq
    %v3337 = vshrl.u32 %v3336, 7
    %v3338 = vsub.s32 2, %v3337
    %v3339 = vrot.slane %v3164, %v3338
    %v3340 = vlaneseq
    %v3341 = vshrl.u32 %v3340, 7
    %v3342 = vsub.s32 6, %v3341
    %v3343 = vrot.slane %v3164, %v3342
    %v3344 = vlaneseq
    %v3345 = vshrl.u32 %v3344, 7
    %v3346 = vsub.s32 2, %v3345
    %v3347 = vrot.slane %v3165, %v3346
    %v3348 = vlaneseq
    %v3349 = vshrl.u32 %v3348, 7
    %v3350 = vsub.s32 6, %v3349
    %v3351 = vrot.slane %v3165, %v3350
    %v3356 = vlaneseq
    %v3357 = vshrl.u32 %v3356, 7
    %v3358 = vsub.s32 2, %v3357
    %v3359 = vrot.slane %v3339, %v3358
    %v3360 = vlaneseq
    %v3361 = vshrl.u32 %v3360, 7
    %v3362 = vsub.s32 2, %v3361
    %v3363 = vrot.slane %v3343, %v3362
    %v3364 = vlaneseq
    %v3365 = vshrl.u32 %v3364, 7
    %v3366 = vsub.s32 2, %v3365
    %v3367 = vrot.slane %v3347, %v3366
    %v3368 = vlaneseq
    %v3369 = vshrl.u32 %v3368, 7
    %v3370 = vsub.s32 2, %v3369
    %v3371 = vrot.slane %v3351, %v3370
    %v3372 = vmul.f32 %v304, %v3359
    %v3373 = vmul.f32 %v304, %v3363
    %v3374 = vmul.f32 %v304, %v3367
    %v3375 = vmul.f32 %v304, %v3371
    %v3376 = vmul.f32 %v308, %v3359
    %v3377 = vmul.f32 %v308, %v3363
    %v3378 = vmul.f32 %v308, %v3367
    %v3379 = vmul.f32 %v308, %v3371
    %v3380 = vmul.f32 %v312, %v3359
    %v3381 = vmul.f32 %v312, %v3363
    %v3382 = vmul.f32 %v312, %v3367
    %v3383 = vmul.f32 %v312, %v3371
    %v3384 = vmul.f32 %v316, %v3359
    %v3385 = vmul.f32 %v316, %v3363
    %v3386 = vmul.f32 %v316, %v3367
    %v3387 = vmul.f32 %v316, %v3371
    %v3388 = vmul.f32 %v320, %v3359
    %v3389 = vmul.f32 %v320, %v3363
    %v3390 = vmul.f32 %v320, %v3367
    %v3391 = vmul.f32 %v320, %v3371
    %v3392 = vmul.f32 %v324, %v3359
    %v3393 = vmul.f32 %v324, %v3363
    %v3394 = vmul.f32 %v324, %v3367
    %v3395 = vmul.f32 %v324, %v3371
    %v3396 = vmul.f32 %v328, %v3359
    %v3397 = vmul.f32 %v328, %v3363
    %v3398 = vmul.f32 %v328, %v3367
    %v3399 = vmul.f32 %v328, %v3371
    %v3400 = vmul.f32 %v332, %v3359
    %v3401 = vmul.f32 %v332, %v3363
    %v3402 = vmul.f32 %v332, %v3367
    %v3403 = vmul.f32 %v332, %v3371
    %v3404 = vadd.f32 %v3304, %v3372
    %v3405 = vadd.f32 %v3305, %v3373
    %v3406 = vadd.f32 %v3306, %v3374
    %v3407 = vadd.f32 %v3307, %v3375
    %v3408 = vadd.f32 %v3308, %v3376
    %v3409 = vadd.f32 %v3309, %v3377
    %v3410 = vadd.f32 %v3310, %v3378
    %v3411 = vadd.f32 %v3311, %v3379
    %v3412 = vadd.f32 %v3312, %v3380
    %v3413 = vadd.f32 %v3313, %v3381
    %v3414 = vadd.f32 %v3314, %v3382
    %v3415 = vadd.f32 %v3315, %v3383
    %v3416 = vadd.f32 %v3316, %v3384
    %v3417 = vadd.f32 %v3317, %v3385
    %v3418 = vadd.f32 %v3318, %v3386
    %v3419 = vadd.f32 %v3319, %v3387
    %v3420 = vadd.f32 %v3320, %v3388
    %v3421 = vadd.f32 %v3321, %v3389
    %v3422 = vadd.f32 %v3322, %v3390
    %v3423 = vadd.f32 %v3323, %v3391
    %v3424 = vadd.f32 %v3324, %v3392
    %v3425 = vadd.f32 %v3325, %v3393
    %v3426 = vadd.f32 %v3326, %v3394
    %v3427 = vadd.f32 %v3327, %v3395
    %v3428 = vadd.f32 %v3328, %v3396
    %v3429 = vadd.f32 %v3329, %v3397
    %v3430 = vadd.f32 %v3330, %v3398
    %v3431 = vadd.f32 %v3331, %v3399
    %v3432 = vadd.f32 %v3332, %v3400
    %v3433 = vadd.f32 %v3333, %v3401
    %v3434 = vadd.f32 %v3334, %v3402
    %v3435 = vadd.f32 %v3335, %v3403
    %v3436 = vlaneseq
    %v3437 = vshrl.u32 %v3436, 7
    %v3438 = vsub.s32 3, %v3437
    %v3439 = vrot.slane %v3164, %v3438
    %v3440 = vlaneseq
    %v3441 = vshrl.u32 %v3440, 7
    %v3442 = vsub.s32 7, %v3441
    %v3443 = vrot.slane %v3164, %v3442
    %v3444 = vlaneseq
    %v3445 = vshrl.u32 %v3444, 7
    %v3446 = vsub.s32 3, %v3445
    %v3447 = vrot.slane %v3165, %v3446
    %v3448 = vlaneseq
    %v3449 = vshrl.u32 %v3448, 7
    %v3450 = vsub.s32 7, %v3449
    %v3451 = vrot.slane %v3165, %v3450
    %v3456 = vlaneseq
    %v3457 = vshrl.u32 %v3456, 7
    %v3458 = vsub.s32 3, %v3457
    %v3459 = vrot.slane %v3439, %v3458
    %v3460 = vlaneseq
    %v3461 = vshrl.u32 %v3460, 7
    %v3462 = vsub.s32 3, %v3461
    %v3463 = vrot.slane %v3443, %v3462
    %v3464 = vlaneseq
    %v3465 = vshrl.u32 %v3464, 7
    %v3466 = vsub.s32 3, %v3465
    %v3467 = vrot.slane %v3447, %v3466
    %v3468 = vlaneseq
    %v3469 = vshrl.u32 %v3468, 7
    %v3470 = vsub.s32 3, %v3469
    %v3471 = vrot.slane %v3451, %v3470
    %v3472 = vmul.f32 %v436, %v3459
    %v3473 = vmul.f32 %v436, %v3463
    %v3474 = vmul.f32 %v436, %v3467
    %v3475 = vmul.f32 %v436, %v3471
    %v3476 = vmul.f32 %v440, %v3459
    %v3477 = vmul.f32 %v440, %v3463
    %v3478 = vmul.f32 %v440, %v3467
    %v3479 = vmul.f32 %v440, %v3471
    %v3480 = vmul.f32 %v444, %v3459
    %v3481 = vmul.f32 %v444, %v3463
    %v3482 = vmul.f32 %v444, %v3467
    %v3483 = vmul.f32 %v444, %v3471
    %v3484 = vmul.f32 %v448, %v3459
    %v3485 = vmul.f32 %v448, %v3463
    %v3486 = vmul.f32 %v448, %v3467
    %v3487 = vmul.f32 %v448, %v3471
    %v3488 = vmul.f32 %v452, %v3459
    %v3489 = vmul.f32 %v452, %v3463
    %v3490 = vmul.f32 %v452, %v3467
    %v3491 = vmul.f32 %v452, %v3471
    %v3492 = vmul.f32 %v456, %v3459
    %v3493 = vmul.f32 %v456, %v3463
    %v3494 = vmul.f32 %v456, %v3467
    %v3495 = vmul.f32 %v456, %v3471
    %v3496 = vmul.f32 %v460, %v3459
    %v3497 = vmul.f32 %v460, %v3463
    %v3498 = vmul.f32 %v460, %v3467
    %v3499 = vmul.f32 %v460, %v3471
    %v3500 = vmul.f32 %v464, %v3459
    %v3501 = vmul.f32 %v464, %v3463
    %v3502 = vmul.f32 %v464, %v3467
    %v3503 = vmul.f32 %v464, %v3471
    %v3504 = vadd.f32 %v3404, %v3472
    %v3505 = vadd.f32 %v3405, %v3473
    %v3506 = vadd.f32 %v3406, %v3474
    %v3507 = vadd.f32 %v3407, %v3475
    %v3508 = vadd.f32 %v3408, %v3476
    %v3509 = vadd.f32 %v3409, %v3477
    %v3510 = vadd.f32 %v3410, %v3478
    %v3511 = vadd.f32 %v3411, %v3479
    %v3512 = vadd.f32 %v3412, %v3480
    %v3513 = vadd.f32 %v3413, %v3481
    %v3514 = vadd.f32 %v3414, %v3482
    %v3515 = vadd.f32 %v3415, %v3483
    %v3516 = vadd.f32 %v3416, %v3484
    %v3517 = vadd.f32 %v3417, %v3485
    %v3518 = vadd.f32 %v3418, %v3486
    %v3519 = vadd.f32 %v3419, %v3487
    %v3520 = vadd.f32 %v3420, %v3488
    %v3521 = vadd.f32 %v3421, %v3489
    %v3522 = vadd.f32 %v3422, %v3490
    %v3523 = vadd.f32 %v3423, %v3491
    %v3524 = vadd.f32 %v3424, %v3492
    %v3525 = vadd.f32 %v3425, %v3493
    %v3526 = vadd.f32 %v3426, %v3494
    %v3527 = vadd.f32 %v3427, %v3495
    %v3528 = vadd.f32 %v3428, %v3496
    %v3529 = vadd.f32 %v3429, %v3497
    %v3530 = vadd.f32 %v3430, %v3498
    %v3531 = vadd.f32 %v3431, %v3499
    %v3532 = vadd.f32 %v3432, %v3500
    %v3533 = vadd.f32 %v3433, %v3501
    %v3534 = vadd.f32 %v3434, %v3502
    %v3535 = vadd.f32 %v3435, %v3503
    %v3536 = vadd.f32 %v3504, %v569
    %v3537 = vadd.f32 %v3505, %v569
    %v3538 = vadd.f32 %v3506, %v569
    %v3539 = vadd.f32 %v3507, %v569
    %v3540 = vadd.f32 %v3508, %v574
    %v3541 = vadd.f32 %v3509, %v574
    %v3542 = vadd.f32 %v3510, %v574
    %v3543 = vadd.f32 %v3511, %v574
    %v3544 = vadd.f32 %v3512, %v579
    %v3545 = vadd.f32 %v3513, %v579
    %v3546 = vadd.f32 %v3514, %v579
    %v3547 = vadd.f32 %v3515, %v579
    %v3548 = vadd.f32 %v3516, %v584
    %v3549 = vadd.f32 %v3517, %v584
    %v3550 = vadd.f32 %v3518, %v584
    %v3551 = vadd.f32 %v3519, %v584
    %v3552 = vadd.f32 %v3520, %v589
    %v3553 = vadd.f32 %v3521, %v589
    %v3554 = vadd.f32 %v3522, %v589
    %v3555 = vadd.f32 %v3523, %v589
    %v3556 = vadd.f32 %v3524, %v594
    %v3557 = vadd.f32 %v3525, %v594
    %v3558 = vadd.f32 %v3526, %v594
    %v3559 = vadd.f32 %v3527, %v594
    %v3560 = vadd.f32 %v3528, %v599
    %v3561 = vadd.f32 %v3529, %v599
    %v3562 = vadd.f32 %v3530, %v599
    %v3563 = vadd.f32 %v3531, %v599
    %v3564 = vadd.f32 %v3532, %v604
    %v3565 = vadd.f32 %v3533, %v604
    %v3566 = vadd.f32 %v3534, %v604
    %v3567 = vadd.f32 %v3535, %v604
    %v3568 = vmax.f32 %v3536, 0.0
    %v3569 = vmax.f32 %v3537, 0.0
    %v3570 = vmax.f32 %v3538, 0.0
    %v3571 = vmax.f32 %v3539, 0.0
    %v3572 = vmax.f32 %v3540, 0.0
    %v3573 = vmax.f32 %v3541, 0.0
    %v3574 = vmax.f32 %v3542, 0.0
    %v3575 = vmax.f32 %v3543, 0.0
    %v3576 = vmax.f32 %v3544, 0.0
    %v3577 = vmax.f32 %v3545, 0.0
    %v3578 = vmax.f32 %v3546, 0.0
    %v3579 = vmax.f32 %v3547, 0.0
    %v3580 = vmax.f32 %v3548, 0.0
    %v3581 = vmax.f32 %v3549, 0.0
    %v3582 = vmax.f32 %v3550, 0.0
    %v3583 = vmax.f32 %v3551, 0.0
    %v3584 = vmax.f32 %v3552, 0.0
    %v3585 = vmax.f32 %v3553, 0.0
    %v3586 = vmax.f32 %v3554, 0.0
    %v3587 = vmax.f32 %v3555, 0.0
    %v3588 = vmax.f32 %v3556, 0.0
    %v3589 = vmax.f32 %v3557, 0.0
    %v3590 = vmax.f32 %v3558, 0.0
    %v3591 = vmax.f32 %v3559, 0.0
    %v3592 = vmax.f32 %v3560, 0.0
    %v3593 = vmax.f32 %v3561, 0.0
    %v3594 = vmax.f32 %v3562, 0.0
    %v3595 = vmax.f32 %v3563, 0.0
    %v3596 = vmax.f32 %v3564, 0.0
    %v3597 = vmax.f32 %v3565, 0.0
    %v3598 = vmax.f32 %v3566, 0.0
    %v3599 = vmax.f32 %v3567, 0.0
    %3600 = vmatprep.subr.mxu0 %v3569
    %3601 = vmatpush1.msra.mxu0 %v3568
    %3602 = vmatprep.subr.mxu0 %v3573
    %3603 = vmatpush1.msra.mxu0 %v3572
    %3604 = vmatprep.subr.mxu0 %v3577
    %3605 = vmatpush1.msra.mxu0 %v3576
    %3606 = vmatprep.subr.mxu0 %v3581
    %3607 = vmatpush1.msra.mxu0 %v3580
    %3608 = vmatprep.subr.mxu0 %v3585
    %3609 = vmatpush1.msra.mxu0 %v3584
    %3610 = vmatprep.subr.mxu0 %v3589
    %3611 = vmatpush1.msra.mxu0 %v3588
    %3612 = vmatprep.subr.mxu0 %v3593
    %3613 = vmatpush1.msra.mxu0 %v3592
    %3614 = vmatprep.subr.mxu0 %v3597
    %3615 = vmatpush1.msra.mxu0 %v3596
    %3616 = vmatprep.subr.mxu0 0.0
    %3617 = vmatpush1.msra.mxu0 0.0
    %3618 = vmatprep.subr.mxu0 0.0
    %3619 = vmatpush1.msra.mxu0 0.0
    %3620 = vmatprep.subr.mxu0 0.0
    %3621 = vmatpush1.msra.mxu0 0.0
    %3622 = vmatprep.subr.mxu0 0.0
    %3623 = vmatpush1.msra.mxu0 0.0
    %3624 = vmatprep.subr.mxu0 0.0
    %3625 = vmatpush1.msra.mxu0 0.0
    %3626 = vmatprep.subr.mxu0 0.0
    %3627 = vmatpush1.msra.mxu0 0.0
    %3628 = vmatprep.subr.mxu0 0.0
    %3629 = vmatpush1.msra.mxu0 0.0
    %3630 = vmatprep.subr.mxu0 0.0
    %3631 = vmatpush1.msra.mxu0 0.0
    %3632 = vmatprep.subr.mxu0 0.0
    %3633 = vmatpush1.msra.mxu0 0.0
    %3634 = vmatprep.subr.mxu0 0.0
    %3635 = vmatpush1.msra.mxu0 0.0
    %3636 = vmatprep.subr.mxu0 0.0
    %3637 = vmatpush1.msra.mxu0 0.0
    %3638 = vmatprep.subr.mxu0 0.0
    %3639 = vmatpush1.msra.mxu0 0.0
    %3640 = vmatprep.subr.mxu0 0.0
    %3641 = vmatpush1.msra.mxu0 0.0
    %3642 = vmatprep.subr.mxu0 0.0
    %3643 = vmatpush1.msra.mxu0 0.0
    %3644 = vmatprep.subr.mxu0 0.0
    %3645 = vmatpush1.msra.mxu0 0.0
    %3646 = vmatprep.subr.mxu0 0.0
    %3647 = vmatpush1.msra.mxu0 0.0
    %3648 = vmatprep.subr.mxu0 0.0
    %3649 = vmatpush1.msra.mxu0 0.0
    %3650 = vmatprep.subr.mxu0 0.0
    %3651 = vmatpush1.msra.mxu0 0.0
    %3652 = vmatprep.subr.mxu0 0.0
    %3653 = vmatpush1.msra.mxu0 0.0
    %3654 = vmatprep.subr.mxu0 0.0
    %3655 = vmatpush1.msra.mxu0 0.0
    %3656 = vmatprep.subr.mxu0 0.0
    %3657 = vmatpush1.msra.mxu0 0.0
    %3658 = vmatprep.subr.mxu0 0.0
    %3659 = vmatpush1.msra.mxu0 0.0
    %3660 = vmatprep.subr.mxu0 0.0
    %3661 = vmatpush1.msra.mxu0 0.0
    %3662 = vmatprep.subr.mxu0 0.0
    %3663 = vmatpush1.msra.mxu0 0.0
    %3664 = vmatprep.mubr.f32.mxu0 0.0
    %3665 = vmatmul.mubr.f32.gmra.mrb[0].mxu0 %v692
    %v3666 = vpop.f32.mrb[0].mxu0
    %v3667 = vadd.f32 %v673, %v3666
    %v3668 = vpop.f32.mrb[0].mxu0
    %v3669 = vadd.f32 %v673, %v3668
    %3670 = vmatprep.mubr.f32.mxu0 0.0
    %3671 = vmatmul.mubr.f32.gmra.mrb[0].mxu0 %v695
    %v3672 = vpop.f32.mrb[0].mxu0
    %v3673 = vadd.f32 %v678, %v3672
    %v3674 = vpop.f32.mrb[0].mxu0
    %v3675 = vadd.f32 %v678, %v3674
    %3676 = vmatprep.mubr.f32.mxu0 0.0
    %3677 = vmatmul.mubr.f32.gmra.mrb[0].mxu0 %v698
    %v3678 = vpop.f32.mrb[0].mxu0
    %v3679 = vadd.f32 %v683, %v3678
    %v3680 = vpop.f32.mrb[0].mxu0
    %v3681 = vadd.f32 %v683, %v3680
    %3682 = vmatprep.mubr.f32.mxu0 0.0
    %3683 = vmatmul.mubr.f32.gmra.mrb[0].mxu0 %v701
    %v3684 = vpop.f32.mrb[0].mxu0
    %v3685 = vadd.f32 %v688, %v3684
    %v3686 = vpop.f32.mrb[0].mxu0
    %v3687 = vadd.f32 %v688, %v3686
    %3688 = vdwg.mxu0
    %3689 = vmatprep.subr.mxu0 %v3571
    %3690 = vmatpush1.msra.mxu0 %v3570
    %3691 = vmatprep.subr.mxu0 %v3575
    %3692 = vmatpush1.msra.mxu0 %v3574
    %3693 = vmatprep.subr.mxu0 %v3579
    %3694 = vmatpush1.msra.mxu0 %v3578
    %3695 = vmatprep.subr.mxu0 %v3583
    %3696 = vmatpush1.msra.mxu0 %v3582
    %3697 = vmatprep.subr.mxu0 %v3587
    %3698 = vmatpush1.msra.mxu0 %v3586
    %3699 = vmatprep.subr.mxu0 %v3591
    %3700 = vmatpush1.msra.mxu0 %v3590
    %3701 = vmatprep.subr.mxu0 %v3595
    %3702 = vmatpush1.msra.mxu0 %v3594
    %3703 = vmatprep.subr.mxu0 %v3599
    %3704 = vmatpush1.msra.mxu0 %v3598
    %3705 = vmatprep.subr.mxu0 0.0
    %3706 = vmatpush1.msra.mxu0 0.0
    %3707 = vmatprep.subr.mxu0 0.0
    %3708 = vmatpush1.msra.mxu0 0.0
    %3709 = vmatprep.subr.mxu0 0.0
    %3710 = vmatpush1.msra.mxu0 0.0
    %3711 = vmatprep.subr.mxu0 0.0
    %3712 = vmatpush1.msra.mxu0 0.0
    %3713 = vmatprep.subr.mxu0 0.0
    %3714 = vmatpush1.msra.mxu0 0.0
    %3715 = vmatprep.subr.mxu0 0.0
    %3716 = vmatpush1.msra.mxu0 0.0
    %3717 = vmatprep.subr.mxu0 0.0
    %3718 = vmatpush1.msra.mxu0 0.0
    %3719 = vmatprep.subr.mxu0 0.0
    %3720 = vmatpush1.msra.mxu0 0.0
    %3721 = vmatprep.subr.mxu0 0.0
    %3722 = vmatpush1.msra.mxu0 0.0
    %3723 = vmatprep.subr.mxu0 0.0
    %3724 = vmatpush1.msra.mxu0 0.0
    %3725 = vmatprep.subr.mxu0 0.0
    %3726 = vmatpush1.msra.mxu0 0.0
    %3727 = vmatprep.subr.mxu0 0.0
    %3728 = vmatpush1.msra.mxu0 0.0
    %3729 = vmatprep.subr.mxu0 0.0
    %3730 = vmatpush1.msra.mxu0 0.0
    %3731 = vmatprep.subr.mxu0 0.0
    %3732 = vmatpush1.msra.mxu0 0.0
    %3733 = vmatprep.subr.mxu0 0.0
    %3734 = vmatpush1.msra.mxu0 0.0
    %3735 = vmatprep.subr.mxu0 0.0
    %3736 = vmatpush1.msra.mxu0 0.0
    %3737 = vmatprep.subr.mxu0 0.0
    %3738 = vmatpush1.msra.mxu0 0.0
    %3739 = vmatprep.subr.mxu0 0.0
    %3740 = vmatpush1.msra.mxu0 0.0
    %3741 = vmatprep.subr.mxu0 0.0
    %3742 = vmatpush1.msra.mxu0 0.0
    %3743 = vmatprep.subr.mxu0 0.0
    %3744 = vmatpush1.msra.mxu0 0.0
    %3745 = vmatprep.subr.mxu0 0.0
    %3746 = vmatpush1.msra.mxu0 0.0
    %3747 = vmatprep.subr.mxu0 0.0
    %3748 = vmatpush1.msra.mxu0 0.0
    %3749 = vmatprep.subr.mxu0 0.0
    %3750 = vmatpush1.msra.mxu0 0.0
    %3751 = vmatprep.subr.mxu0 0.0
    %3752 = vmatpush1.msra.mxu0 0.0
    %3753 = vmatprep.mubr.f32.mxu0 0.0
    %3754 = vmatmul.mubr.f32.gmra.mrb[0].mxu0 %v692
    %v3755 = vpop.f32.mrb[0].mxu0
    %v3756 = vadd.f32 %v673, %v3755
    %v3757 = vpop.f32.mrb[0].mxu0
    %v3758 = vadd.f32 %v673, %v3757
    %3759 = vmatprep.mubr.f32.mxu0 0.0
    %3760 = vmatmul.mubr.f32.gmra.mrb[0].mxu0 %v695
    %v3761 = vpop.f32.mrb[0].mxu0
    %v3762 = vadd.f32 %v678, %v3761
    %v3763 = vpop.f32.mrb[0].mxu0
    %v3764 = vadd.f32 %v678, %v3763
    %3765 = vmatprep.mubr.f32.mxu0 0.0
    %3766 = vmatmul.mubr.f32.gmra.mrb[0].mxu0 %v698
    %v3767 = vpop.f32.mrb[0].mxu0
    %v3768 = vadd.f32 %v683, %v3767
    %v3769 = vpop.f32.mrb[0].mxu0
    %v3770 = vadd.f32 %v683, %v3769
    %3771 = vmatprep.mubr.f32.mxu0 0.0
    %3772 = vmatmul.mubr.f32.gmra.mrb[0].mxu0 %v701
    %v3773 = vpop.f32.mrb[0].mxu0
    %v3774 = vadd.f32 %v688, %v3773
    %v3775 = vpop.f32.mrb[0].mxu0
    %v3776 = vadd.f32 %v688, %v3775
    %3777 = vdwg.mxu0
    %v3778 = vmax.f32 %v3667, 0.0
    %v3779 = vmax.f32 %v3669, 0.0
    %v3780 = vmax.f32 %v3756, 0.0
    %v3781 = vmax.f32 %v3758, 0.0
    %v3782 = vmax.f32 %v3673, 0.0
    %v3783 = vmax.f32 %v3675, 0.0
    %v3784 = vmax.f32 %v3762, 0.0
    %v3785 = vmax.f32 %v3764, 0.0
    %v3786 = vmax.f32 %v3679, 0.0
    %v3787 = vmax.f32 %v3681, 0.0
    %v3788 = vmax.f32 %v3768, 0.0
    %v3789 = vmax.f32 %v3770, 0.0
    %v3790 = vmax.f32 %v3685, 0.0
    %v3791 = vmax.f32 %v3687, 0.0
    %v3792 = vmax.f32 %v3774, 0.0
    %v3793 = vmax.f32 %v3776, 0.0
    %v3794 = vmul.f32 %v3778, %v900
    %v3795 = vmul.f32 %v3779, %v900
    %v3796 = vmul.f32 %v3780, %v900
    %v3797 = vmul.f32 %v3781, %v900
    %v3798 = vmul.f32 %v3782, %v905
    %v3799 = vmul.f32 %v3783, %v905
    %v3800 = vmul.f32 %v3784, %v905
    %v3801 = vmul.f32 %v3785, %v905
    %v3802 = vmul.f32 %v3786, %v910
    %v3803 = vmul.f32 %v3787, %v910
    %v3804 = vmul.f32 %v3788, %v910
    %v3805 = vmul.f32 %v3789, %v910
    %v3806 = vmul.f32 %v3790, %v915
    %v3807 = vmul.f32 %v3791, %v915
    %v3808 = vmul.f32 %v3792, %v915
    %v3809 = vmul.f32 %v3793, %v915
    %v3810 = vadd.f32 %v3794, %v3798
    %v3811 = vadd.f32 %v3810, %v3802
    %v3812 = vadd.f32 %v3811, %v3806
    %v3813 = vrot.slane %v3812, 4
    %v3814 = vadd.f32 %v3812, %v3813
    %v3815 = vrot.slane %v3814, 2
    %v3816 = vadd.f32 %v3814, %v3815
    %v3817 = vrot.slane %v3816, 1
    %v3818 = vadd.f32 %v3816, %v3817
    %v3819 = vadd.f32 %v3795, %v3799
    %v3820 = vadd.f32 %v3819, %v3803
    %v3821 = vadd.f32 %v3820, %v3807
    %v3822 = vrot.slane %v3821, 4
    %v3823 = vadd.f32 %v3821, %v3822
    %v3824 = vrot.slane %v3823, 2
    %v3825 = vadd.f32 %v3823, %v3824
    %v3826 = vrot.slane %v3825, 1
    %v3827 = vadd.f32 %v3825, %v3826
    %v3828 = vadd.f32 %v3796, %v3800
    %v3829 = vadd.f32 %v3828, %v3804
    %v3830 = vadd.f32 %v3829, %v3808
    %v3831 = vrot.slane %v3830, 4
    %v3832 = vadd.f32 %v3830, %v3831
    %v3833 = vrot.slane %v3832, 2
    %v3834 = vadd.f32 %v3832, %v3833
    %v3835 = vrot.slane %v3834, 1
    %v3836 = vadd.f32 %v3834, %v3835
    %v3837 = vadd.f32 %v3797, %v3801
    %v3838 = vadd.f32 %v3837, %v3805
    %v3839 = vadd.f32 %v3838, %v3809
    %v3840 = vrot.slane %v3839, 4
    %v3841 = vadd.f32 %v3839, %v3840
    %v3842 = vrot.slane %v3841, 2
    %v3843 = vadd.f32 %v3841, %v3842
    %v3844 = vrot.slane %v3843, 1
    %v3845 = vadd.f32 %v3843, %v3844
    %v3846 = vadd.f32 %v3818, %v977
    %v3847 = vadd.f32 %v3827, %v977
    %v3848 = vadd.f32 %v3836, %v977
    %v3849 = vadd.f32 %v3845, %v977
    %v3854 = vcombine.low %v3846, %v3847
    %v3855 = vcombine.low %v3848, %v3849
    %v3857 = vunpack.c.l.s4 1966171168
    %v3858 = vunpack.c.0.s8 %v3857
    %v3859 = vlaneseq
    %v3860 = vshrl.u32 %v3859, 7
    %v3861 = vsub.s32 %v3858, %v3860
    %v3862 = vrot.slane %v3854, %v3861
    %v3864 = vunpack.c.l.s4 1966171168
    %v3865 = vunpack.c.0.s8 %v3864
    %v3866 = vlaneseq
    %v3867 = vshrl.u32 %v3866, 7
    %v3868 = vsub.s32 %v3865, %v3867
    %v3869 = vrot.slane %v3855, %v3868
    %v3870 = vcombine.low %v3862, %v3869
    %v3872 = vunpack.c.l.s4 1966171168
    %v3873 = vunpack.c.0.s8 %v3872
    %v3874 = vlaneseq
    %v3875 = vshrl.u32 %v3874, 7
    %v3876 = vsub.s32 %v3873, %v3875
    %v3877 = vrot.slane %v3870, %v3876
    %3879 = vst.msk [vmem:[#allocation3 + $0x10] sm:$0xf] %vm1014, %v3877
    %v3880 = vld [vmem:[%s0 + $0x50] sm:$0xff]
    %v3881 = vld [vmem:[%s0 + $0x58] sm:$0xff]
    %v3884 = vlaneseq
    %v3885 = vshrl.u32 %v3884, 7
    %v3886 = vsub.s32 0, %v3885
    %v3887 = vrot.slane %v3880, %v3886
    %v3888 = vlaneseq
    %v3889 = vshrl.u32 %v3888, 7
    %v3890 = vsub.s32 4, %v3889
    %v3891 = vrot.slane %v3880, %v3890
    %v3892 = vlaneseq
    %v3893 = vshrl.u32 %v3892, 7
    %v3894 = vsub.s32 0, %v3893
    %v3895 = vrot.slane %v3881, %v3894
    %v3896 = vlaneseq
    %v3897 = vshrl.u32 %v3896, 7
    %v3898 = vsub.s32 4, %v3897
    %v3899 = vrot.slane %v3881, %v3898
    %v3904 = vlaneseq
    %v3905 = vshrl.u32 %v3904, 7
    %v3906 = vsub.s32 0, %v3905
    %v3907 = vrot.slane %v3887, %v3906
    %v3908 = vlaneseq
    %v3909 = vshrl.u32 %v3908, 7
    %v3910 = vsub.s32 0, %v3909
    %v3911 = vrot.slane %v3891, %v3910
    %v3912 = vlaneseq
    %v3913 = vshrl.u32 %v3912, 7
    %v3914 = vsub.s32 0, %v3913
    %v3915 = vrot.slane %v3895, %v3914
    %v3916 = vlaneseq
    %v3917 = vshrl.u32 %v3916, 7
    %v3918 = vsub.s32 0, %v3917
    %v3919 = vrot.slane %v3899, %v3918
    %v3920 = vmul.f32 %v63, %v3907
    %v3921 = vmul.f32 %v63, %v3911
    %v3922 = vmul.f32 %v63, %v3915
    %v3923 = vmul.f32 %v63, %v3919
    %v3924 = vmul.f32 %v68, %v3907
    %v3925 = vmul.f32 %v68, %v3911
    %v3926 = vmul.f32 %v68, %v3915
    %v3927 = vmul.f32 %v68, %v3919
    %v3928 = vmul.f32 %v73, %v3907
    %v3929 = vmul.f32 %v73, %v3911
    %v3930 = vmul.f32 %v73, %v3915
    %v3931 = vmul.f32 %v73, %v3919
    %v3932 = vmul.f32 %v78, %v3907
    %v3933 = vmul.f32 %v78, %v3911
    %v3934 = vmul.f32 %v78, %v3915
    %v3935 = vmul.f32 %v78, %v3919
    %v3936 = vmul.f32 %v83, %v3907
    %v3937 = vmul.f32 %v83, %v3911
    %v3938 = vmul.f32 %v83, %v3915
    %v3939 = vmul.f32 %v83, %v3919
    %v3940 = vmul.f32 %v88, %v3907
    %v3941 = vmul.f32 %v88, %v3911
    %v3942 = vmul.f32 %v88, %v3915
    %v3943 = vmul.f32 %v88, %v3919
    %v3944 = vmul.f32 %v93, %v3907
    %v3945 = vmul.f32 %v93, %v3911
    %v3946 = vmul.f32 %v93, %v3915
    %v3947 = vmul.f32 %v93, %v3919
    %v3948 = vmul.f32 %v98, %v3907
    %v3949 = vmul.f32 %v98, %v3911
    %v3950 = vmul.f32 %v98, %v3915
    %v3951 = vmul.f32 %v98, %v3919
    %v3952 = vlaneseq
    %v3953 = vshrl.u32 %v3952, 7
    %v3954 = vsub.s32 1, %v3953
    %v3955 = vrot.slane %v3880, %v3954
    %v3956 = vlaneseq
    %v3957 = vshrl.u32 %v3956, 7
    %v3958 = vsub.s32 5, %v3957
    %v3959 = vrot.slane %v3880, %v3958
    %v3960 = vlaneseq
    %v3961 = vshrl.u32 %v3960, 7
    %v3962 = vsub.s32 1, %v3961
    %v3963 = vrot.slane %v3881, %v3962
    %v3964 = vlaneseq
    %v3965 = vshrl.u32 %v3964, 7
    %v3966 = vsub.s32 5, %v3965
    %v3967 = vrot.slane %v3881, %v3966
    %v3972 = vlaneseq
    %v3973 = vshrl.u32 %v3972, 7
    %v3974 = vsub.s32 1, %v3973
    %v3975 = vrot.slane %v3955, %v3974
    %v3976 = vlaneseq
    %v3977 = vshrl.u32 %v3976, 7
    %v3978 = vsub.s32 1, %v3977
    %v3979 = vrot.slane %v3959, %v3978
    %v3980 = vlaneseq
    %v3981 = vshrl.u32 %v3980, 7
    %v3982 = vsub.s32 1, %v3981
    %v3983 = vrot.slane %v3963, %v3982
    %v3984 = vlaneseq
    %v3985 = vshrl.u32 %v3984, 7
    %v3986 = vsub.s32 1, %v3985
    %v3987 = vrot.slane %v3967, %v3986
    %v3988 = vmul.f32 %v172, %v3975
    %v3989 = vmul.f32 %v172, %v3979
    %v3990 = vmul.f32 %v172, %v3983
    %v3991 = vmul.f32 %v172, %v3987
    %v3992 = vmul.f32 %v176, %v3975
    %v3993 = vmul.f32 %v176, %v3979
    %v3994 = vmul.f32 %v176, %v3983
    %v3995 = vmul.f32 %v176, %v3987
    %v3996 = vmul.f32 %v180, %v3975
    %v3997 = vmul.f32 %v180, %v3979
    %v3998 = vmul.f32 %v180, %v3983
    %v3999 = vmul.f32 %v180, %v3987
    %v4000 = vmul.f32 %v184, %v3975
    %v4001 = vmul.f32 %v184, %v3979
    %v4002 = vmul.f32 %v184, %v3983
    %v4003 = vmul.f32 %v184, %v3987
    %v4004 = vmul.f32 %v188, %v3975
    %v4005 = vmul.f32 %v188, %v3979
    %v4006 = vmul.f32 %v188, %v3983
    %v4007 = vmul.f32 %v188, %v3987
    %v4008 = vmul.f32 %v192, %v3975
    %v4009 = vmul.f32 %v192, %v3979
    %v4010 = vmul.f32 %v192, %v3983
    %v4011 = vmul.f32 %v192, %v3987
    %v4012 = vmul.f32 %v196, %v3975
    %v4013 = vmul.f32 %v196, %v3979
    %v4014 = vmul.f32 %v196, %v3983
    %v4015 = vmul.f32 %v196, %v3987
    %v4016 = vmul.f32 %v200, %v3975
    %v4017 = vmul.f32 %v200, %v3979
    %v4018 = vmul.f32 %v200, %v3983
    %v4019 = vmul.f32 %v200, %v3987
    %v4020 = vadd.f32 %v3920, %v3988
    %v4021 = vadd.f32 %v3921, %v3989
    %v4022 = vadd.f32 %v3922, %v3990
    %v4023 = vadd.f32 %v3923, %v3991
    %v4024 = vadd.f32 %v3924, %v3992
    %v4025 = vadd.f32 %v3925, %v3993
    %v4026 = vadd.f32 %v3926, %v3994
    %v4027 = vadd.f32 %v3927, %v3995
    %v4028 = vadd.f32 %v3928, %v3996
    %v4029 = vadd.f32 %v3929, %v3997
    %v4030 = vadd.f32 %v3930, %v3998
    %v4031 = vadd.f32 %v3931, %v3999
    %v4032 = vadd.f32 %v3932, %v4000
    %v4033 = vadd.f32 %v3933, %v4001
    %v4034 = vadd.f32 %v3934, %v4002
    %v4035 = vadd.f32 %v3935, %v4003
    %v4036 = vadd.f32 %v3936, %v4004
    %v4037 = vadd.f32 %v3937, %v4005
    %v4038 = vadd.f32 %v3938, %v4006
    %v4039 = vadd.f32 %v3939, %v4007
    %v4040 = vadd.f32 %v3940, %v4008
    %v4041 = vadd.f32 %v3941, %v4009
    %v4042 = vadd.f32 %v3942, %v4010
    %v4043 = vadd.f32 %v3943, %v4011
    %v4044 = vadd.f32 %v3944, %v4012
    %v4045 = vadd.f32 %v3945, %v4013
    %v4046 = vadd.f32 %v3946, %v4014
    %v4047 = vadd.f32 %v3947, %v4015
    %v4048 = vadd.f32 %v3948, %v4016
    %v4049 = vadd.f32 %v3949, %v4017
    %v4050 = vadd.f32 %v3950, %v4018
    %v4051 = vadd.f32 %v3951, %v4019
    %v4052 = vlaneseq
    %v4053 = vshrl.u32 %v4052, 7
    %v4054 = vsub.s32 2, %v4053
    %v4055 = vrot.slane %v3880, %v4054
    %v4056 = vlaneseq
    %v4057 = vshrl.u32 %v4056, 7
    %v4058 = vsub.s32 6, %v4057
    %v4059 = vrot.slane %v3880, %v4058
    %v4060 = vlaneseq
    %v4061 = vshrl.u32 %v4060, 7
    %v4062 = vsub.s32 2, %v4061
    %v4063 = vrot.slane %v3881, %v4062
    %v4064 = vlaneseq
    %v4065 = vshrl.u32 %v4064, 7
    %v4066 = vsub.s32 6, %v4065
    %v4067 = vrot.slane %v3881, %v4066
    %v4072 = vlaneseq
    %v4073 = vshrl.u32 %v4072, 7
    %v4074 = vsub.s32 2, %v4073
    %v4075 = vrot.slane %v4055, %v4074
    %v4076 = vlaneseq
    %v4077 = vshrl.u32 %v4076, 7
    %v4078 = vsub.s32 2, %v4077
    %v4079 = vrot.slane %v4059, %v4078
    %v4080 = vlaneseq
    %v4081 = vshrl.u32 %v4080, 7
    %v4082 = vsub.s32 2, %v4081
    %v4083 = vrot.slane %v4063, %v4082
    %v4084 = vlaneseq
    %v4085 = vshrl.u32 %v4084, 7
    %v4086 = vsub.s32 2, %v4085
    %v4087 = vrot.slane %v4067, %v4086
    %v4088 = vmul.f32 %v304, %v4075
    %v4089 = vmul.f32 %v304, %v4079
    %v4090 = vmul.f32 %v304, %v4083
    %v4091 = vmul.f32 %v304, %v4087
    %v4092 = vmul.f32 %v308, %v4075
    %v4093 = vmul.f32 %v308, %v4079
    %v4094 = vmul.f32 %v308, %v4083
    %v4095 = vmul.f32 %v308, %v4087
    %v4096 = vmul.f32 %v312, %v4075
    %v4097 = vmul.f32 %v312, %v4079
    %v4098 = vmul.f32 %v312, %v4083
    %v4099 = vmul.f32 %v312, %v4087
    %v4100 = vmul.f32 %v316, %v4075
    %v4101 = vmul.f32 %v316, %v4079
    %v4102 = vmul.f32 %v316, %v4083
    %v4103 = vmul.f32 %v316, %v4087
    %v4104 = vmul.f32 %v320, %v4075
    %v4105 = vmul.f32 %v320, %v4079
    %v4106 = vmul.f32 %v320, %v4083
    %v4107 = vmul.f32 %v320, %v4087
    %v4108 = vmul.f32 %v324, %v4075
    %v4109 = vmul.f32 %v324, %v4079
    %v4110 = vmul.f32 %v324, %v4083
    %v4111 = vmul.f32 %v324, %v4087
    %v4112 = vmul.f32 %v328, %v4075
    %v4113 = vmul.f32 %v328, %v4079
    %v4114 = vmul.f32 %v328, %v4083
    %v4115 = vmul.f32 %v328, %v4087
    %v4116 = vmul.f32 %v332, %v4075
    %v4117 = vmul.f32 %v332, %v4079
    %v4118 = vmul.f32 %v332, %v4083
    %v4119 = vmul.f32 %v332, %v4087
    %v4120 = vadd.f32 %v4020, %v4088
    %v4121 = vadd.f32 %v4021, %v4089
    %v4122 = vadd.f32 %v4022, %v4090
    %v4123 = vadd.f32 %v4023, %v4091
    %v4124 = vadd.f32 %v4024, %v4092
    %v4125 = vadd.f32 %v4025, %v4093
    %v4126 = vadd.f32 %v4026, %v4094
    %v4127 = vadd.f32 %v4027, %v4095
    %v4128 = vadd.f32 %v4028, %v4096
    %v4129 = vadd.f32 %v4029, %v4097
    %v4130 = vadd.f32 %v4030, %v4098
    %v4131 = vadd.f32 %v4031, %v4099
    %v4132 = vadd.f32 %v4032, %v4100
    %v4133 = vadd.f32 %v4033, %v4101
    %v4134 = vadd.f32 %v4034, %v4102
    %v4135 = vadd.f32 %v4035, %v4103
    %v4136 = vadd.f32 %v4036, %v4104
    %v4137 = vadd.f32 %v4037, %v4105
    %v4138 = vadd.f32 %v4038, %v4106
    %v4139 = vadd.f32 %v4039, %v4107
    %v4140 = vadd.f32 %v4040, %v4108
    %v4141 = vadd.f32 %v4041, %v4109
    %v4142 = vadd.f32 %v4042, %v4110
    %v4143 = vadd.f32 %v4043, %v4111
    %v4144 = vadd.f32 %v4044, %v4112
    %v4145 = vadd.f32 %v4045, %v4113
    %v4146 = vadd.f32 %v4046, %v4114
    %v4147 = vadd.f32 %v4047, %v4115
    %v4148 = vadd.f32 %v4048, %v4116
    %v4149 = vadd.f32 %v4049, %v4117
    %v4150 = vadd.f32 %v4050, %v4118
    %v4151 = vadd.f32 %v4051, %v4119
    %v4152 = vlaneseq
    %v4153 = vshrl.u32 %v4152, 7
    %v4154 = vsub.s32 3, %v4153
    %v4155 = vrot.slane %v3880, %v4154
    %v4156 = vlaneseq
    %v4157 = vshrl.u32 %v4156, 7
    %v4158 = vsub.s32 7, %v4157
    %v4159 = vrot.slane %v3880, %v4158
    %v4160 = vlaneseq
    %v4161 = vshrl.u32 %v4160, 7
    %v4162 = vsub.s32 3, %v4161
    %v4163 = vrot.slane %v3881, %v4162
    %v4164 = vlaneseq
    %v4165 = vshrl.u32 %v4164, 7
    %v4166 = vsub.s32 7, %v4165
    %v4167 = vrot.slane %v3881, %v4166
    %v4172 = vlaneseq
    %v4173 = vshrl.u32 %v4172, 7
    %v4174 = vsub.s32 3, %v4173
    %v4175 = vrot.slane %v4155, %v4174
    %v4176 = vlaneseq
    %v4177 = vshrl.u32 %v4176, 7
    %v4178 = vsub.s32 3, %v4177
    %v4179 = vrot.slane %v4159, %v4178
    %v4180 = vlaneseq
    %v4181 = vshrl.u32 %v4180, 7
    %v4182 = vsub.s32 3, %v4181
    %v4183 = vrot.slane %v4163, %v4182
    %v4184 = vlaneseq
    %v4185 = vshrl.u32 %v4184, 7
    %v4186 = vsub.s32 3, %v4185
    %v4187 = vrot.slane %v4167, %v4186
    %v4188 = vmul.f32 %v436, %v4175
    %v4189 = vmul.f32 %v436, %v4179
    %v4190 = vmul.f32 %v436, %v4183
    %v4191 = vmul.f32 %v436, %v4187
    %v4192 = vmul.f32 %v440, %v4175
    %v4193 = vmul.f32 %v440, %v4179
    %v4194 = vmul.f32 %v440, %v4183
    %v4195 = vmul.f32 %v440, %v4187
    %v4196 = vmul.f32 %v444, %v4175
    %v4197 = vmul.f32 %v444, %v4179
    %v4198 = vmul.f32 %v444, %v4183
    %v4199 = vmul.f32 %v444, %v4187
    %v4200 = vmul.f32 %v448, %v4175
    %v4201 = vmul.f32 %v448, %v4179
    %v4202 = vmul.f32 %v448, %v4183
    %v4203 = vmul.f32 %v448, %v4187
    %v4204 = vmul.f32 %v452, %v4175
    %v4205 = vmul.f32 %v452, %v4179
    %v4206 = vmul.f32 %v452, %v4183
    %v4207 = vmul.f32 %v452, %v4187
    %v4208 = vmul.f32 %v456, %v4175
    %v4209 = vmul.f32 %v456, %v4179
    %v4210 = vmul.f32 %v456, %v4183
    %v4211 = vmul.f32 %v456, %v4187
    %v4212 = vmul.f32 %v460, %v4175
    %v4213 = vmul.f32 %v460, %v4179
    %v4214 = vmul.f32 %v460, %v4183
    %v4215 = vmul.f32 %v460, %v4187
    %v4216 = vmul.f32 %v464, %v4175
    %v4217 = vmul.f32 %v464, %v4179
    %v4218 = vmul.f32 %v464, %v4183
    %v4219 = vmul.f32 %v464, %v4187
    %v4220 = vadd.f32 %v4120, %v4188
    %v4221 = vadd.f32 %v4121, %v4189
    %v4222 = vadd.f32 %v4122, %v4190
    %v4223 = vadd.f32 %v4123, %v4191
    %v4224 = vadd.f32 %v4124, %v4192
    %v4225 = vadd.f32 %v4125, %v4193
    %v4226 = vadd.f32 %v4126, %v4194
    %v4227 = vadd.f32 %v4127, %v4195
    %v4228 = vadd.f32 %v4128, %v4196
    %v4229 = vadd.f32 %v4129, %v4197
    %v4230 = vadd.f32 %v4130, %v4198
    %v4231 = vadd.f32 %v4131, %v4199
    %v4232 = vadd.f32 %v4132, %v4200
    %v4233 = vadd.f32 %v4133, %v4201
    %v4234 = vadd.f32 %v4134, %v4202
    %v4235 = vadd.f32 %v4135, %v4203
    %v4236 = vadd.f32 %v4136, %v4204
    %v4237 = vadd.f32 %v4137, %v4205
    %v4238 = vadd.f32 %v4138, %v4206
    %v4239 = vadd.f32 %v4139, %v4207
    %v4240 = vadd.f32 %v4140, %v4208
    %v4241 = vadd.f32 %v4141, %v4209
    %v4242 = vadd.f32 %v4142, %v4210
    %v4243 = vadd.f32 %v4143, %v4211
    %v4244 = vadd.f32 %v4144, %v4212
    %v4245 = vadd.f32 %v4145, %v4213
    %v4246 = vadd.f32 %v4146, %v4214
    %v4247 = vadd.f32 %v4147, %v4215
    %v4248 = vadd.f32 %v4148, %v4216
    %v4249 = vadd.f32 %v4149, %v4217
    %v4250 = vadd.f32 %v4150, %v4218
    %v4251 = vadd.f32 %v4151, %v4219
    %v4252 = vadd.f32 %v4220, %v569
    %v4253 = vadd.f32 %v4221, %v569
    %v4254 = vadd.f32 %v4222, %v569
    %v4255 = vadd.f32 %v4223, %v569
    %v4256 = vadd.f32 %v4224, %v574
    %v4257 = vadd.f32 %v4225, %v574
    %v4258 = vadd.f32 %v4226, %v574
    %v4259 = vadd.f32 %v4227, %v574
    %v4260 = vadd.f32 %v4228, %v579
    %v4261 = vadd.f32 %v4229, %v579
    %v4262 = vadd.f32 %v4230, %v579
    %v4263 = vadd.f32 %v4231, %v579
    %v4264 = vadd.f32 %v4232, %v584
    %v4265 = vadd.f32 %v4233, %v584
    %v4266 = vadd.f32 %v4234, %v584
    %v4267 = vadd.f32 %v4235, %v584
    %v4268 = vadd.f32 %v4236, %v589
    %v4269 = vadd.f32 %v4237, %v589
    %v4270 = vadd.f32 %v4238, %v589
    %v4271 = vadd.f32 %v4239, %v589
    %v4272 = vadd.f32 %v4240, %v594
    %v4273 = vadd.f32 %v4241, %v594
    %v4274 = vadd.f32 %v4242, %v594
    %v4275 = vadd.f32 %v4243, %v594
    %v4276 = vadd.f32 %v4244, %v599
    %v4277 = vadd.f32 %v4245, %v599
    %v4278 = vadd.f32 %v4246, %v599
    %v4279 = vadd.f32 %v4247, %v599
    %v4280 = vadd.f32 %v4248, %v604
    %v4281 = vadd.f32 %v4249, %v604
    %v4282 = vadd.f32 %v4250, %v604
    %v4283 = vadd.f32 %v4251, %v604
    %v4284 = vmax.f32 %v4252, 0.0
    %v4285 = vmax.f32 %v4253, 0.0
    %v4286 = vmax.f32 %v4254, 0.0
    %v4287 = vmax.f32 %v4255, 0.0
    %v4288 = vmax.f32 %v4256, 0.0
    %v4289 = vmax.f32 %v4257, 0.0
    %v4290 = vmax.f32 %v4258, 0.0
    %v4291 = vmax.f32 %v4259, 0.0
    %v4292 = vmax.f32 %v4260, 0.0
    %v4293 = vmax.f32 %v4261, 0.0
    %v4294 = vmax.f32 %v4262, 0.0
    %v4295 = vmax.f32 %v4263, 0.0
    %v4296 = vmax.f32 %v4264, 0.0
    %v4297 = vmax.f32 %v4265, 0.0
    %v4298 = vmax.f32 %v4266, 0.0
    %v4299 = vmax.f32 %v4267, 0.0
    %v4300 = vmax.f32 %v4268, 0.0
    %v4301 = vmax.f32 %v4269, 0.0
    %v4302 = vmax.f32 %v4270, 0.0
    %v4303 = vmax.f32 %v4271, 0.0
    %v4304 = vmax.f32 %v4272, 0.0
    %v4305 = vmax.f32 %v4273, 0.0
    %v4306 = vmax.f32 %v4274, 0.0
    %v4307 = vmax.f32 %v4275, 0.0
    %v4308 = vmax.f32 %v4276, 0.0
    %v4309 = vmax.f32 %v4277, 0.0
    %v4310 = vmax.f32 %v4278, 0.0
    %v4311 = vmax.f32 %v4279, 0.0
    %v4312 = vmax.f32 %v4280, 0.0
    %v4313 = vmax.f32 %v4281, 0.0
    %v4314 = vmax.f32 %v4282, 0.0
    %v4315 = vmax.f32 %v4283, 0.0
    %4316 = vmatprep.subr.mxu0 %v4285
    %4317 = vmatpush1.msra.mxu0 %v4284
    %4318 = vmatprep.subr.mxu0 %v4289
    %4319 = vmatpush1.msra.mxu0 %v4288
    %4320 = vmatprep.subr.mxu0 %v4293
    %4321 = vmatpush1.msra.mxu0 %v4292
    %4322 = vmatprep.subr.mxu0 %v4297
    %4323 = vmatpush1.msra.mxu0 %v4296
    %4324 = vmatprep.subr.mxu0 %v4301
    %4325 = vmatpush1.msra.mxu0 %v4300
    %4326 = vmatprep.subr.mxu0 %v4305
    %4327 = vmatpush1.msra.mxu0 %v4304
    %4328 = vmatprep.subr.mxu0 %v4309
    %4329 = vmatpush1.msra.mxu0 %v4308
    %4330 = vmatprep.subr.mxu0 %v4313
    %4331 = vmatpush1.msra.mxu0 %v4312
    %4332 = vmatprep.subr.mxu0 0.0
    %4333 = vmatpush1.msra.mxu0 0.0
    %4334 = vmatprep.subr.mxu0 0.0
    %4335 = vmatpush1.msra.mxu0 0.0
    %4336 = vmatprep.subr.mxu0 0.0
    %4337 = vmatpush1.msra.mxu0 0.0
    %4338 = vmatprep.subr.mxu0 0.0
    %4339 = vmatpush1.msra.mxu0 0.0
    %4340 = vmatprep.subr.mxu0 0.0
    %4341 = vmatpush1.msra.mxu0 0.0
    %4342 = vmatprep.subr.mxu0 0.0
    %4343 = vmatpush1.msra.mxu0 0.0
    %4344 = vmatprep.subr.mxu0 0.0
    %4345 = vmatpush1.msra.mxu0 0.0
    %4346 = vmatprep.subr.mxu0 0.0
    %4347 = vmatpush1.msra.mxu0 0.0
    %4348 = vmatprep.subr.mxu0 0.0
    %4349 = vmatpush1.msra.mxu0 0.0
    %4350 = vmatprep.subr.mxu0 0.0
    %4351 = vmatpush1.msra.mxu0 0.0
    %4352 = vmatprep.subr.mxu0 0.0
    %4353 = vmatpush1.msra.mxu0 0.0
    %4354 = vmatprep.subr.mxu0 0.0
    %4355 = vmatpush1.msra.mxu0 0.0
    %4356 = vmatprep.subr.mxu0 0.0
    %4357 = vmatpush1.msra.mxu0 0.0
    %4358 = vmatprep.subr.mxu0 0.0
    %4359 = vmatpush1.msra.mxu0 0.0
    %4360 = vmatprep.subr.mxu0 0.0
    %4361 = vmatpush1.msra.mxu0 0.0
    %4362 = vmatprep.subr.mxu0 0.0
    %4363 = vmatpush1.msra.mxu0 0.0
    %4364 = vmatprep.subr.mxu0 0.0
    %4365 = vmatpush1.msra.mxu0 0.0
    %4366 = vmatprep.subr.mxu0 0.0
    %4367 = vmatpush1.msra.mxu0 0.0
    %4368 = vmatprep.subr.mxu0 0.0
    %4369 = vmatpush1.msra.mxu0 0.0
    %4370 = vmatprep.subr.mxu0 0.0
    %4371 = vmatpush1.msra.mxu0 0.0
    %4372 = vmatprep.subr.mxu0 0.0
    %4373 = vmatpush1.msra.mxu0 0.0
    %4374 = vmatprep.subr.mxu0 0.0
    %4375 = vmatpush1.msra.mxu0 0.0
    %4376 = vmatprep.subr.mxu0 0.0
    %4377 = vmatpush1.msra.mxu0 0.0
    %4378 = vmatprep.subr.mxu0 0.0
    %4379 = vmatpush1.msra.mxu0 0.0
    %4380 = vmatprep.mubr.f32.mxu0 0.0
    %4381 = vmatmul.mubr.f32.gmra.mrb[0].mxu0 %v692
    %v4382 = vpop.f32.mrb[0].mxu0
    %v4383 = vadd.f32 %v673, %v4382
    %v4384 = vpop.f32.mrb[0].mxu0
    %v4385 = vadd.f32 %v673, %v4384
    %4386 = vmatprep.mubr.f32.mxu0 0.0
    %4387 = vmatmul.mubr.f32.gmra.mrb[0].mxu0 %v695
    %v4388 = vpop.f32.mrb[0].mxu0
    %v4389 = vadd.f32 %v678, %v4388
    %v4390 = vpop.f32.mrb[0].mxu0
    %v4391 = vadd.f32 %v678, %v4390
    %4392 = vmatprep.mubr.f32.mxu0 0.0
    %4393 = vmatmul.mubr.f32.gmra.mrb[0].mxu0 %v698
    %v4394 = vpop.f32.mrb[0].mxu0
    %v4395 = vadd.f32 %v683, %v4394
    %v4396 = vpop.f32.mrb[0].mxu0
    %v4397 = vadd.f32 %v683, %v4396
    %4398 = vmatprep.mubr.f32.mxu0 0.0
    %4399 = vmatmul.mubr.f32.gmra.mrb[0].mxu0 %v701
    %v4400 = vpop.f32.mrb[0].mxu0
    %v4401 = vadd.f32 %v688, %v4400
    %v4402 = vpop.f32.mrb[0].mxu0
    %v4403 = vadd.f32 %v688, %v4402
    %4404 = vdwg.mxu0
    %4405 = vmatprep.subr.mxu0 %v4287
    %4406 = vmatpush1.msra.mxu0 %v4286
    %4407 = vmatprep.subr.mxu0 %v4291
    %4408 = vmatpush1.msra.mxu0 %v4290
    %4409 = vmatprep.subr.mxu0 %v4295
    %4410 = vmatpush1.msra.mxu0 %v4294
    %4411 = vmatprep.subr.mxu0 %v4299
    %4412 = vmatpush1.msra.mxu0 %v4298
    %4413 = vmatprep.subr.mxu0 %v4303
    %4414 = vmatpush1.msra.mxu0 %v4302
    %4415 = vmatprep.subr.mxu0 %v4307
    %4416 = vmatpush1.msra.mxu0 %v4306
    %4417 = vmatprep.subr.mxu0 %v4311
    %4418 = vmatpush1.msra.mxu0 %v4310
    %4419 = vmatprep.subr.mxu0 %v4315
    %4420 = vmatpush1.msra.mxu0 %v4314
    %4421 = vmatprep.subr.mxu0 0.0
    %4422 = vmatpush1.msra.mxu0 0.0
    %4423 = vmatprep.subr.mxu0 0.0
    %4424 = vmatpush1.msra.mxu0 0.0
    %4425 = vmatprep.subr.mxu0 0.0
    %4426 = vmatpush1.msra.mxu0 0.0
    %4427 = vmatprep.subr.mxu0 0.0
    %4428 = vmatpush1.msra.mxu0 0.0
    %4429 = vmatprep.subr.mxu0 0.0
    %4430 = vmatpush1.msra.mxu0 0.0
    %4431 = vmatprep.subr.mxu0 0.0
    %4432 = vmatpush1.msra.mxu0 0.0
    %4433 = vmatprep.subr.mxu0 0.0
    %4434 = vmatpush1.msra.mxu0 0.0
    %4435 = vmatprep.subr.mxu0 0.0
    %4436 = vmatpush1.msra.mxu0 0.0
    %4437 = vmatprep.subr.mxu0 0.0
    %4438 = vmatpush1.msra.mxu0 0.0
    %4439 = vmatprep.subr.mxu0 0.0
    %4440 = vmatpush1.msra.mxu0 0.0
    %4441 = vmatprep.subr.mxu0 0.0
    %4442 = vmatpush1.msra.mxu0 0.0
    %4443 = vmatprep.subr.mxu0 0.0
    %4444 = vmatpush1.msra.mxu0 0.0
    %4445 = vmatprep.subr.mxu0 0.0
    %4446 = vmatpush1.msra.mxu0 0.0
    %4447 = vmatprep.subr.mxu0 0.0
    %4448 = vmatpush1.msra.mxu0 0.0
    %4449 = vmatprep.subr.mxu0 0.0
    %4450 = vmatpush1.msra.mxu0 0.0
    %4451 = vmatprep.subr.mxu0 0.0
    %4452 = vmatpush1.msra.mxu0 0.0
    %4453 = vmatprep.subr.mxu0 0.0
    %4454 = vmatpush1.msra.mxu0 0.0
    %4455 = vmatprep.subr.mxu0 0.0
    %4456 = vmatpush1.msra.mxu0 0.0
    %4457 = vmatprep.subr.mxu0 0.0
    %4458 = vmatpush1.msra.mxu0 0.0
    %4459 = vmatprep.subr.mxu0 0.0
    %4460 = vmatpush1.msra.mxu0 0.0
    %4461 = vmatprep.subr.mxu0 0.0
    %4462 = vmatpush1.msra.mxu0 0.0
    %4463 = vmatprep.subr.mxu0 0.0
    %4464 = vmatpush1.msra.mxu0 0.0
    %4465 = vmatprep.subr.mxu0 0.0
    %4466 = vmatpush1.msra.mxu0 0.0
    %4467 = vmatprep.subr.mxu0 0.0
    %4468 = vmatpush1.msra.mxu0 0.0
    %4469 = vmatprep.mubr.f32.mxu0 0.0
    %4470 = vmatmul.mubr.f32.gmra.mrb[0].mxu0 %v692
    %v4471 = vpop.f32.mrb[0].mxu0
    %v4472 = vadd.f32 %v673, %v4471
    %v4473 = vpop.f32.mrb[0].mxu0
    %v4474 = vadd.f32 %v673, %v4473
    %4475 = vmatprep.mubr.f32.mxu0 0.0
    %4476 = vmatmul.mubr.f32.gmra.mrb[0].mxu0 %v695
    %v4477 = vpop.f32.mrb[0].mxu0
    %v4478 = vadd.f32 %v678, %v4477
    %v4479 = vpop.f32.mrb[0].mxu0
    %v4480 = vadd.f32 %v678, %v4479
    %4481 = vmatprep.mubr.f32.mxu0 0.0
    %4482 = vmatmul.mubr.f32.gmra.mrb[0].mxu0 %v698
    %v4483 = vpop.f32.mrb[0].mxu0
    %v4484 = vadd.f32 %v683, %v4483
    %v4485 = vpop.f32.mrb[0].mxu0
    %v4486 = vadd.f32 %v683, %v4485
    %4487 = vmatprep.mubr.f32.mxu0 0.0
    %4488 = vmatmul.mubr.f32.gmra.mrb[0].mxu0 %v701
    %v4489 = vpop.f32.mrb[0].mxu0
    %v4490 = vadd.f32 %v688, %v4489
    %v4491 = vpop.f32.mrb[0].mxu0
    %v4492 = vadd.f32 %v688, %v4491
    %4493 = vdwg.mxu0
    %v4494 = vmax.f32 %v4383, 0.0
    %v4495 = vmax.f32 %v4385, 0.0
    %v4496 = vmax.f32 %v4472, 0.0
    %v4497 = vmax.f32 %v4474, 0.0
    %v4498 = vmax.f32 %v4389, 0.0
    %v4499 = vmax.f32 %v4391, 0.0
    %v4500 = vmax.f32 %v4478, 0.0
    %v4501 = vmax.f32 %v4480, 0.0
    %v4502 = vmax.f32 %v4395, 0.0
    %v4503 = vmax.f32 %v4397, 0.0
    %v4504 = vmax.f32 %v4484, 0.0
    %v4505 = vmax.f32 %v4486, 0.0
    %v4506 = vmax.f32 %v4401, 0.0
    %v4507 = vmax.f32 %v4403, 0.0
    %v4508 = vmax.f32 %v4490, 0.0
    %v4509 = vmax.f32 %v4492, 0.0
    %v4510 = vmul.f32 %v4494, %v900
    %v4511 = vmul.f32 %v4495, %v900
    %v4512 = vmul.f32 %v4496, %v900
    %v4513 = vmul.f32 %v4497, %v900
    %v4514 = vmul.f32 %v4498, %v905
    %v4515 = vmul.f32 %v4499, %v905
    %v4516 = vmul.f32 %v4500, %v905
    %v4517 = vmul.f32 %v4501, %v905
    %v4518 = vmul.f32 %v4502, %v910
    %v4519 = vmul.f32 %v4503, %v910
    %v4520 = vmul.f32 %v4504, %v910
    %v4521 = vmul.f32 %v4505, %v910
    %v4522 = vmul.f32 %v4506, %v915
    %v4523 = vmul.f32 %v4507, %v915
    %v4524 = vmul.f32 %v4508, %v915
    %v4525 = vmul.f32 %v4509, %v915
    %v4526 = vadd.f32 %v4510, %v4514
    %v4527 = vadd.f32 %v4526, %v4518
    %v4528 = vadd.f32 %v4527, %v4522
    %v4529 = vrot.slane %v4528, 4
    %v4530 = vadd.f32 %v4528, %v4529
    %v4531 = vrot.slane %v4530, 2
    %v4532 = vadd.f32 %v4530, %v4531
    %v4533 = vrot.slane %v4532, 1
    %v4534 = vadd.f32 %v4532, %v4533
    %v4535 = vadd.f32 %v4511, %v4515
    %v4536 = vadd.f32 %v4535, %v4519
    %v4537 = vadd.f32 %v4536, %v4523
    %v4538 = vrot.slane %v4537, 4
    %v4539 = vadd.f32 %v4537, %v4538
    %v4540 = vrot.slane %v4539, 2
    %v4541 = vadd.f32 %v4539, %v4540
    %v4542 = vrot.slane %v4541, 1
    %v4543 = vadd.f32 %v4541, %v4542
    %v4544 = vadd.f32 %v4512, %v4516
    %v4545 = vadd.f32 %v4544, %v4520
    %v4546 = vadd.f32 %v4545, %v4524
    %v4547 = vrot.slane %v4546, 4
    %v4548 = vadd.f32 %v4546, %v4547
    %v4549 = vrot.slane %v4548, 2
    %v4550 = vadd.f32 %v4548, %v4549
    %v4551 = vrot.slane %v4550, 1
    %v4552 = vadd.f32 %v4550, %v4551
    %v4553 = vadd.f32 %v4513, %v4517
    %v4554 = vadd.f32 %v4553, %v4521
    %v4555 = vadd.f32 %v4554, %v4525
    %v4556 = vrot.slane %v4555, 4
    %v4557 = vadd.f32 %v4555, %v4556
    %v4558 = vrot.slane %v4557, 2
    %v4559 = vadd.f32 %v4557, %v4558
    %v4560 = vrot.slane %v4559, 1
    %v4561 = vadd.f32 %v4559, %v4560
    %v4562 = vadd.f32 %v4534, %v977
    %v4563 = vadd.f32 %v4543, %v977
    %v4564 = vadd.f32 %v4552, %v977
    %v4565 = vadd.f32 %v4561, %v977
    %v4570 = vcombine.low %v4562, %v4563
    %v4571 = vcombine.low %v4564, %v4565
    %v4573 = vunpack.c.l.s4 1966171168
    %v4574 = vunpack.c.0.s8 %v4573
    %v4575 = vlaneseq
    %v4576 = vshrl.u32 %v4575, 7
    %v4577 = vsub.s32 %v4574, %v4576
    %v4578 = vrot.slane %v4570, %v4577
    %v4580 = vunpack.c.l.s4 1966171168
    %v4581 = vunpack.c.0.s8 %v4580
    %v4582 = vlaneseq
    %v4583 = vshrl.u32 %v4582, 7
    %v4584 = vsub.s32 %v4581, %v4583
    %v4585 = vrot.slane %v4571, %v4584
    %v4586 = vcombine.low %v4578, %v4585
    %v4588 = vunpack.c.l.s4 1966171168
    %v4589 = vunpack.c.0.s8 %v4588
    %v4590 = vlaneseq
    %v4591 = vshrl.u32 %v4590, 7
    %v4592 = vsub.s32 %v4589, %v4591
    %v4593 = vrot.slane %v4586, %v4592
    %4595 = vst.msk [vmem:[#allocation3 + $0x14] sm:$0xf] %vm1014, %v4593
    %v4596 = vld [vmem:[%s0 + $0x60] sm:$0xff]
    %v4597 = vld [vmem:[%s0 + $0x68] sm:$0xff]
    %v4600 = vlaneseq
    %v4601 = vshrl.u32 %v4600, 7
    %v4602 = vsub.s32 0, %v4601
    %v4603 = vrot.slane %v4596, %v4602
    %v4604 = vlaneseq
    %v4605 = vshrl.u32 %v4604, 7
    %v4606 = vsub.s32 4, %v4605
    %v4607 = vrot.slane %v4596, %v4606
    %v4608 = vlaneseq
    %v4609 = vshrl.u32 %v4608, 7
    %v4610 = vsub.s32 0, %v4609
    %v4611 = vrot.slane %v4597, %v4610
    %v4612 = vlaneseq
    %v4613 = vshrl.u32 %v4612, 7
    %v4614 = vsub.s32 4, %v4613
    %v4615 = vrot.slane %v4597, %v4614
    %v4620 = vlaneseq
    %v4621 = vshrl.u32 %v4620, 7
    %v4622 = vsub.s32 0, %v4621
    %v4623 = vrot.slane %v4603, %v4622
    %v4624 = vlaneseq
    %v4625 = vshrl.u32 %v4624, 7
    %v4626 = vsub.s32 0, %v4625
    %v4627 = vrot.slane %v4607, %v4626
    %v4628 = vlaneseq
    %v4629 = vshrl.u32 %v4628, 7
    %v4630 = vsub.s32 0, %v4629
    %v4631 = vrot.slane %v4611, %v4630
    %v4632 = vlaneseq
    %v4633 = vshrl.u32 %v4632, 7
    %v4634 = vsub.s32 0, %v4633
    %v4635 = vrot.slane %v4615, %v4634
    %v4636 = vmul.f32 %v63, %v4623
    %v4637 = vmul.f32 %v63, %v4627
    %v4638 = vmul.f32 %v63, %v4631
    %v4639 = vmul.f32 %v63, %v4635
    %v4640 = vmul.f32 %v68, %v4623
    %v4641 = vmul.f32 %v68, %v4627
    %v4642 = vmul.f32 %v68, %v4631
    %v4643 = vmul.f32 %v68, %v4635
    %v4644 = vmul.f32 %v73, %v4623
    %v4645 = vmul.f32 %v73, %v4627
    %v4646 = vmul.f32 %v73, %v4631
    %v4647 = vmul.f32 %v73, %v4635
    %v4648 = vmul.f32 %v78, %v4623
    %v4649 = vmul.f32 %v78, %v4627
    %v4650 = vmul.f32 %v78, %v4631
    %v4651 = vmul.f32 %v78, %v4635
    %v4652 = vmul.f32 %v83, %v4623
    %v4653 = vmul.f32 %v83, %v4627
    %v4654 = vmul.f32 %v83, %v4631
    %v4655 = vmul.f32 %v83, %v4635
    %v4656 = vmul.f32 %v88, %v4623
    %v4657 = vmul.f32 %v88, %v4627
    %v4658 = vmul.f32 %v88, %v4631
    %v4659 = vmul.f32 %v88, %v4635
    %v4660 = vmul.f32 %v93, %v4623
    %v4661 = vmul.f32 %v93, %v4627
    %v4662 = vmul.f32 %v93, %v4631
    %v4663 = vmul.f32 %v93, %v4635
    %v4664 = vmul.f32 %v98, %v4623
    %v4665 = vmul.f32 %v98, %v4627
    %v4666 = vmul.f32 %v98, %v4631
    %v4667 = vmul.f32 %v98, %v4635
    %v4668 = vlaneseq
    %v4669 = vshrl.u32 %v4668, 7
    %v4670 = vsub.s32 1, %v4669
    %v4671 = vrot.slane %v4596, %v4670
    %v4672 = vlaneseq
    %v4673 = vshrl.u32 %v4672, 7
    %v4674 = vsub.s32 5, %v4673
    %v4675 = vrot.slane %v4596, %v4674
    %v4676 = vlaneseq
    %v4677 = vshrl.u32 %v4676, 7
    %v4678 = vsub.s32 1, %v4677
    %v4679 = vrot.slane %v4597, %v4678
    %v4680 = vlaneseq
    %v4681 = vshrl.u32 %v4680, 7
    %v4682 = vsub.s32 5, %v4681
    %v4683 = vrot.slane %v4597, %v4682
    %v4688 = vlaneseq
    %v4689 = vshrl.u32 %v4688, 7
    %v4690 = vsub.s32 1, %v4689
    %v4691 = vrot.slane %v4671, %v4690
    %v4692 = vlaneseq
    %v4693 = vshrl.u32 %v4692, 7
    %v4694 = vsub.s32 1, %v4693
    %v4695 = vrot.slane %v4675, %v4694
    %v4696 = vlaneseq
    %v4697 = vshrl.u32 %v4696, 7
    %v4698 = vsub.s32 1, %v4697
    %v4699 = vrot.slane %v4679, %v4698
    %v4700 = vlaneseq
    %v4701 = vshrl.u32 %v4700, 7
    %v4702 = vsub.s32 1, %v4701
    %v4703 = vrot.slane %v4683, %v4702
    %v4704 = vmul.f32 %v172, %v4691
    %v4705 = vmul.f32 %v172, %v4695
    %v4706 = vmul.f32 %v172, %v4699
    %v4707 = vmul.f32 %v172, %v4703
    %v4708 = vmul.f32 %v176, %v4691
    %v4709 = vmul.f32 %v176, %v4695
    %v4710 = vmul.f32 %v176, %v4699
    %v4711 = vmul.f32 %v176, %v4703
    %v4712 = vmul.f32 %v180, %v4691
    %v4713 = vmul.f32 %v180, %v4695
    %v4714 = vmul.f32 %v180, %v4699
    %v4715 = vmul.f32 %v180, %v4703
    %v4716 = vmul.f32 %v184, %v4691
    %v4717 = vmul.f32 %v184, %v4695
    %v4718 = vmul.f32 %v184, %v4699
    %v4719 = vmul.f32 %v184, %v4703
    %v4720 = vmul.f32 %v188, %v4691
    %v4721 = vmul.f32 %v188, %v4695
    %v4722 = vmul.f32 %v188, %v4699
    %v4723 = vmul.f32 %v188, %v4703
    %v4724 = vmul.f32 %v192, %v4691
    %v4725 = vmul.f32 %v192, %v4695
    %v4726 = vmul.f32 %v192, %v4699
    %v4727 = vmul.f32 %v192, %v4703
    %v4728 = vmul.f32 %v196, %v4691
    %v4729 = vmul.f32 %v196, %v4695
    %v4730 = vmul.f32 %v196, %v4699
    %v4731 = vmul.f32 %v196, %v4703
    %v4732 = vmul.f32 %v200, %v4691
    %v4733 = vmul.f32 %v200, %v4695
    %v4734 = vmul.f32 %v200, %v4699
    %v4735 = vmul.f32 %v200, %v4703
    %v4736 = vadd.f32 %v4636, %v4704
    %v4737 = vadd.f32 %v4637, %v4705
    %v4738 = vadd.f32 %v4638, %v4706
    %v4739 = vadd.f32 %v4639, %v4707
    %v4740 = vadd.f32 %v4640, %v4708
    %v4741 = vadd.f32 %v4641, %v4709
    %v4742 = vadd.f32 %v4642, %v4710
    %v4743 = vadd.f32 %v4643, %v4711
    %v4744 = vadd.f32 %v4644, %v4712
    %v4745 = vadd.f32 %v4645, %v4713
    %v4746 = vadd.f32 %v4646, %v4714
    %v4747 = vadd.f32 %v4647, %v4715
    %v4748 = vadd.f32 %v4648, %v4716
    %v4749 = vadd.f32 %v4649, %v4717
    %v4750 = vadd.f32 %v4650, %v4718
    %v4751 = vadd.f32 %v4651, %v4719
    %v4752 = vadd.f32 %v4652, %v4720
    %v4753 = vadd.f32 %v4653, %v4721
    %v4754 = vadd.f32 %v4654, %v4722
    %v4755 = vadd.f32 %v4655, %v4723
    %v4756 = vadd.f32 %v4656, %v4724
    %v4757 = vadd.f32 %v4657, %v4725
    %v4758 = vadd.f32 %v4658, %v4726
    %v4759 = vadd.f32 %v4659, %v4727
    %v4760 = vadd.f32 %v4660, %v4728
    %v4761 = vadd.f32 %v4661, %v4729
    %v4762 = vadd.f32 %v4662, %v4730
    %v4763 = vadd.f32 %v4663, %v4731
    %v4764 = vadd.f32 %v4664, %v4732
    %v4765 = vadd.f32 %v4665, %v4733
    %v4766 = vadd.f32 %v4666, %v4734
    %v4767 = vadd.f32 %v4667, %v4735
    %v4768 = vlaneseq
    %v4769 = vshrl.u32 %v4768, 7
    %v4770 = vsub.s32 2, %v4769
    %v4771 = vrot.slane %v4596, %v4770
    %v4772 = vlaneseq
    %v4773 = vshrl.u32 %v4772, 7
    %v4774 = vsub.s32 6, %v4773
    %v4775 = vrot.slane %v4596, %v4774
    %v4776 = vlaneseq
    %v4777 = vshrl.u32 %v4776, 7
    %v4778 = vsub.s32 2, %v4777
    %v4779 = vrot.slane %v4597, %v4778
    %v4780 = vlaneseq
    %v4781 = vshrl.u32 %v4780, 7
    %v4782 = vsub.s32 6, %v4781
    %v4783 = vrot.slane %v4597, %v4782
    %v4788 = vlaneseq
    %v4789 = vshrl.u32 %v4788, 7
    %v4790 = vsub.s32 2, %v4789
    %v4791 = vrot.slane %v4771, %v4790
    %v4792 = vlaneseq
    %v4793 = vshrl.u32 %v4792, 7
    %v4794 = vsub.s32 2, %v4793
    %v4795 = vrot.slane %v4775, %v4794
    %v4796 = vlaneseq
    %v4797 = vshrl.u32 %v4796, 7
    %v4798 = vsub.s32 2, %v4797
    %v4799 = vrot.slane %v4779, %v4798
    %v4800 = vlaneseq
    %v4801 = vshrl.u32 %v4800, 7
    %v4802 = vsub.s32 2, %v4801
    %v4803 = vrot.slane %v4783, %v4802
    %v4804 = vmul.f32 %v304, %v4791
    %v4805 = vmul.f32 %v304, %v4795
    %v4806 = vmul.f32 %v304, %v4799
    %v4807 = vmul.f32 %v304, %v4803
    %v4808 = vmul.f32 %v308, %v4791
    %v4809 = vmul.f32 %v308, %v4795
    %v4810 = vmul.f32 %v308, %v4799
    %v4811 = vmul.f32 %v308, %v4803
    %v4812 = vmul.f32 %v312, %v4791
    %v4813 = vmul.f32 %v312, %v4795
    %v4814 = vmul.f32 %v312, %v4799
    %v4815 = vmul.f32 %v312, %v4803
    %v4816 = vmul.f32 %v316, %v4791
    %v4817 = vmul.f32 %v316, %v4795
    %v4818 = vmul.f32 %v316, %v4799
    %v4819 = vmul.f32 %v316, %v4803
    %v4820 = vmul.f32 %v320, %v4791
    %v4821 = vmul.f32 %v320, %v4795
    %v4822 = vmul.f32 %v320, %v4799
    %v4823 = vmul.f32 %v320, %v4803
    %v4824 = vmul.f32 %v324, %v4791
    %v4825 = vmul.f32 %v324, %v4795
    %v4826 = vmul.f32 %v324, %v4799
    %v4827 = vmul.f32 %v324, %v4803
    %v4828 = vmul.f32 %v328, %v4791
    %v4829 = vmul.f32 %v328, %v4795
    %v4830 = vmul.f32 %v328, %v4799
    %v4831 = vmul.f32 %v328, %v4803
    %v4832 = vmul.f32 %v332, %v4791
    %v4833 = vmul.f32 %v332, %v4795
    %v4834 = vmul.f32 %v332, %v4799
    %v4835 = vmul.f32 %v332, %v4803
    %v4836 = vadd.f32 %v4736, %v4804
    %v4837 = vadd.f32 %v4737, %v4805
    %v4838 = vadd.f32 %v4738, %v4806
    %v4839 = vadd.f32 %v4739, %v4807
    %v4840 = vadd.f32 %v4740, %v4808
    %v4841 = vadd.f32 %v4741, %v4809
    %v4842 = vadd.f32 %v4742, %v4810
    %v4843 = vadd.f32 %v4743, %v4811
    %v4844 = vadd.f32 %v4744, %v4812
    %v4845 = vadd.f32 %v4745, %v4813
    %v4846 = vadd.f32 %v4746, %v4814
    %v4847 = vadd.f32 %v4747, %v4815
    %v4848 = vadd.f32 %v4748, %v4816
    %v4849 = vadd.f32 %v4749, %v4817
    %v4850 = vadd.f32 %v4750, %v4818
    %v4851 = vadd.f32 %v4751, %v4819
    %v4852 = vadd.f32 %v4752, %v4820
    %v4853 = vadd.f32 %v4753, %v4821
    %v4854 = vadd.f32 %v4754, %v4822
    %v4855 = vadd.f32 %v4755, %v4823
    %v4856 = vadd.f32 %v4756, %v4824
    %v4857 = vadd.f32 %v4757, %v4825
    %v4858 = vadd.f32 %v4758, %v4826
    %v4859 = vadd.f32 %v4759, %v4827
    %v4860 = vadd.f32 %v4760, %v4828
    %v4861 = vadd.f32 %v4761, %v4829
    %v4862 = vadd.f32 %v4762, %v4830
    %v4863 = vadd.f32 %v4763, %v4831
    %v4864 = vadd.f32 %v4764, %v4832
    %v4865 = vadd.f32 %v4765, %v4833
    %v4866 = vadd.f32 %v4766, %v4834
    %v4867 = vadd.f32 %v4767, %v4835
    %v4868 = vlaneseq
    %v4869 = vshrl.u32 %v4868, 7
    %v4870 = vsub.s32 3, %v4869
    %v4871 = vrot.slane %v4596, %v4870
    %v4872 = vlaneseq
    %v4873 = vshrl.u32 %v4872, 7
    %v4874 = vsub.s32 7, %v4873
    %v4875 = vrot.slane %v4596, %v4874
    %v4876 = vlaneseq
    %v4877 = vshrl.u32 %v4876, 7
    %v4878 = vsub.s32 3, %v4877
    %v4879 = vrot.slane %v4597, %v4878
    %v4880 = vlaneseq
    %v4881 = vshrl.u32 %v4880, 7
    %v4882 = vsub.s32 7, %v4881
    %v4883 = vrot.slane %v4597, %v4882
    %v4888 = vlaneseq
    %v4889 = vshrl.u32 %v4888, 7
    %v4890 = vsub.s32 3, %v4889
    %v4891 = vrot.slane %v4871, %v4890
    %v4892 = vlaneseq
    %v4893 = vshrl.u32 %v4892, 7
    %v4894 = vsub.s32 3, %v4893
    %v4895 = vrot.slane %v4875, %v4894
    %v4896 = vlaneseq
    %v4897 = vshrl.u32 %v4896, 7
    %v4898 = vsub.s32 3, %v4897
    %v4899 = vrot.slane %v4879, %v4898
    %v4900 = vlaneseq
    %v4901 = vshrl.u32 %v4900, 7
    %v4902 = vsub.s32 3, %v4901
    %v4903 = vrot.slane %v4883, %v4902
    %v4904 = vmul.f32 %v436, %v4891
    %v4905 = vmul.f32 %v436, %v4895
    %v4906 = vmul.f32 %v436, %v4899
    %v4907 = vmul.f32 %v436, %v4903
    %v4908 = vmul.f32 %v440, %v4891
    %v4909 = vmul.f32 %v440, %v4895
    %v4910 = vmul.f32 %v440, %v4899
    %v4911 = vmul.f32 %v440, %v4903
    %v4912 = vmul.f32 %v444, %v4891
    %v4913 = vmul.f32 %v444, %v4895
    %v4914 = vmul.f32 %v444, %v4899
    %v4915 = vmul.f32 %v444, %v4903
    %v4916 = vmul.f32 %v448, %v4891
    %v4917 = vmul.f32 %v448, %v4895
    %v4918 = vmul.f32 %v448, %v4899
    %v4919 = vmul.f32 %v448, %v4903
    %v4920 = vmul.f32 %v452, %v4891
    %v4921 = vmul.f32 %v452, %v4895
    %v4922 = vmul.f32 %v452, %v4899
    %v4923 = vmul.f32 %v452, %v4903
    %v4924 = vmul.f32 %v456, %v4891
    %v4925 = vmul.f32 %v456, %v4895
    %v4926 = vmul.f32 %v456, %v4899
    %v4927 = vmul.f32 %v456, %v4903
    %v4928 = vmul.f32 %v460, %v4891
    %v4929 = vmul.f32 %v460, %v4895
    %v4930 = vmul.f32 %v460, %v4899
    %v4931 = vmul.f32 %v460, %v4903
    %v4932 = vmul.f32 %v464, %v4891
    %v4933 = vmul.f32 %v464, %v4895
    %v4934 = vmul.f32 %v464, %v4899
    %v4935 = vmul.f32 %v464, %v4903
    %v4936 = vadd.f32 %v4836, %v4904
    %v4937 = vadd.f32 %v4837, %v4905
    %v4938 = vadd.f32 %v4838, %v4906
    %v4939 = vadd.f32 %v4839, %v4907
    %v4940 = vadd.f32 %v4840, %v4908
    %v4941 = vadd.f32 %v4841, %v4909
    %v4942 = vadd.f32 %v4842, %v4910
    %v4943 = vadd.f32 %v4843, %v4911
    %v4944 = vadd.f32 %v4844, %v4912
    %v4945 = vadd.f32 %v4845, %v4913
    %v4946 = vadd.f32 %v4846, %v4914
    %v4947 = vadd.f32 %v4847, %v4915
    %v4948 = vadd.f32 %v4848, %v4916
    %v4949 = vadd.f32 %v4849, %v4917
    %v4950 = vadd.f32 %v4850, %v4918
    %v4951 = vadd.f32 %v4851, %v4919
    %v4952 = vadd.f32 %v4852, %v4920
    %v4953 = vadd.f32 %v4853, %v4921
    %v4954 = vadd.f32 %v4854, %v4922
    %v4955 = vadd.f32 %v4855, %v4923
    %v4956 = vadd.f32 %v4856, %v4924
    %v4957 = vadd.f32 %v4857, %v4925
    %v4958 = vadd.f32 %v4858, %v4926
    %v4959 = vadd.f32 %v4859, %v4927
    %v4960 = vadd.f32 %v4860, %v4928
    %v4961 = vadd.f32 %v4861, %v4929
    %v4962 = vadd.f32 %v4862, %v4930
    %v4963 = vadd.f32 %v4863, %v4931
    %v4964 = vadd.f32 %v4864, %v4932
    %v4965 = vadd.f32 %v4865, %v4933
    %v4966 = vadd.f32 %v4866, %v4934
    %v4967 = vadd.f32 %v4867, %v4935
    %v4968 = vadd.f32 %v4936, %v569
    %v4969 = vadd.f32 %v4937, %v569
    %v4970 = vadd.f32 %v4938, %v569
    %v4971 = vadd.f32 %v4939, %v569
    %v4972 = vadd.f32 %v4940, %v574
    %v4973 = vadd.f32 %v4941, %v574
    %v4974 = vadd.f32 %v4942, %v574
    %v4975 = vadd.f32 %v4943, %v574
    %v4976 = vadd.f32 %v4944, %v579
    %v4977 = vadd.f32 %v4945, %v579
    %v4978 = vadd.f32 %v4946, %v579
    %v4979 = vadd.f32 %v4947, %v579
    %v4980 = vadd.f32 %v4948, %v584
    %v4981 = vadd.f32 %v4949, %v584
    %v4982 = vadd.f32 %v4950, %v584
    %v4983 = vadd.f32 %v4951, %v584
    %v4984 = vadd.f32 %v4952, %v589
    %v4985 = vadd.f32 %v4953, %v589
    %v4986 = vadd.f32 %v4954, %v589
    %v4987 = vadd.f32 %v4955, %v589
    %v4988 = vadd.f32 %v4956, %v594
    %v4989 = vadd.f32 %v4957, %v594
    %v4990 = vadd.f32 %v4958, %v594
    %v4991 = vadd.f32 %v4959, %v594
    %v4992 = vadd.f32 %v4960, %v599
    %v4993 = vadd.f32 %v4961, %v599
    %v4994 = vadd.f32 %v4962, %v599
    %v4995 = vadd.f32 %v4963, %v599
    %v4996 = vadd.f32 %v4964, %v604
    %v4997 = vadd.f32 %v4965, %v604
    %v4998 = vadd.f32 %v4966, %v604
    %v4999 = vadd.f32 %v4967, %v604
    %v5000 = vmax.f32 %v4968, 0.0
    %v5001 = vmax.f32 %v4969, 0.0
    %v5002 = vmax.f32 %v4970, 0.0
    %v5003 = vmax.f32 %v4971, 0.0
    %v5004 = vmax.f32 %v4972, 0.0
    %v5005 = vmax.f32 %v4973, 0.0
    %v5006 = vmax.f32 %v4974, 0.0
    %v5007 = vmax.f32 %v4975, 0.0
    %v5008 = vmax.f32 %v4976, 0.0
    %v5009 = vmax.f32 %v4977, 0.0
    %v5010 = vmax.f32 %v4978, 0.0
    %v5011 = vmax.f32 %v4979, 0.0
    %v5012 = vmax.f32 %v4980, 0.0
    %v5013 = vmax.f32 %v4981, 0.0
    %v5014 = vmax.f32 %v4982, 0.0
    %v5015 = vmax.f32 %v4983, 0.0
    %v5016 = vmax.f32 %v4984, 0.0
    %v5017 = vmax.f32 %v4985, 0.0
    %v5018 = vmax.f32 %v4986, 0.0
    %v5019 = vmax.f32 %v4987, 0.0
    %v5020 = vmax.f32 %v4988, 0.0
    %v5021 = vmax.f32 %v4989, 0.0
    %v5022 = vmax.f32 %v4990, 0.0
    %v5023 = vmax.f32 %v4991, 0.0
    %v5024 = vmax.f32 %v4992, 0.0
    %v5025 = vmax.f32 %v4993, 0.0
    %v5026 = vmax.f32 %v4994, 0.0
    %v5027 = vmax.f32 %v4995, 0.0
    %v5028 = vmax.f32 %v4996, 0.0
    %v5029 = vmax.f32 %v4997, 0.0
    %v5030 = vmax.f32 %v4998, 0.0
    %v5031 = vmax.f32 %v4999, 0.0
    %5032 = vmatprep.subr.mxu0 %v5001
    %5033 = vmatpush1.msra.mxu0 %v5000
    %5034 = vmatprep.subr.mxu0 %v5005
    %5035 = vmatpush1.msra.mxu0 %v5004
    %5036 = vmatprep.subr.mxu0 %v5009
    %5037 = vmatpush1.msra.mxu0 %v5008
    %5038 = vmatprep.subr.mxu0 %v5013
    %5039 = vmatpush1.msra.mxu0 %v5012
    %5040 = vmatprep.subr.mxu0 %v5017
    %5041 = vmatpush1.msra.mxu0 %v5016
    %5042 = vmatprep.subr.mxu0 %v5021
    %5043 = vmatpush1.msra.mxu0 %v5020
    %5044 = vmatprep.subr.mxu0 %v5025
    %5045 = vmatpush1.msra.mxu0 %v5024
    %5046 = vmatprep.subr.mxu0 %v5029
    %5047 = vmatpush1.msra.mxu0 %v5028
    %5048 = vmatprep.subr.mxu0 0.0
    %5049 = vmatpush1.msra.mxu0 0.0
    %5050 = vmatprep.subr.mxu0 0.0
    %5051 = vmatpush1.msra.mxu0 0.0
    %5052 = vmatprep.subr.mxu0 0.0
    %5053 = vmatpush1.msra.mxu0 0.0
    %5054 = vmatprep.subr.mxu0 0.0
    %5055 = vmatpush1.msra.mxu0 0.0
    %5056 = vmatprep.subr.mxu0 0.0
    %5057 = vmatpush1.msra.mxu0 0.0
    %5058 = vmatprep.subr.mxu0 0.0
    %5059 = vmatpush1.msra.mxu0 0.0
    %5060 = vmatprep.subr.mxu0 0.0
    %5061 = vmatpush1.msra.mxu0 0.0
    %5062 = vmatprep.subr.mxu0 0.0
    %5063 = vmatpush1.msra.mxu0 0.0
    %5064 = vmatprep.subr.mxu0 0.0
    %5065 = vmatpush1.msra.mxu0 0.0
    %5066 = vmatprep.subr.mxu0 0.0
    %5067 = vmatpush1.msra.mxu0 0.0
    %5068 = vmatprep.subr.mxu0 0.0
    %5069 = vmatpush1.msra.mxu0 0.0
    %5070 = vmatprep.subr.mxu0 0.0
    %5071 = vmatpush1.msra.mxu0 0.0
    %5072 = vmatprep.subr.mxu0 0.0
    %5073 = vmatpush1.msra.mxu0 0.0
    %5074 = vmatprep.subr.mxu0 0.0
    %5075 = vmatpush1.msra.mxu0 0.0
    %5076 = vmatprep.subr.mxu0 0.0
    %5077 = vmatpush1.msra.mxu0 0.0
    %5078 = vmatprep.subr.mxu0 0.0
    %5079 = vmatpush1.msra.mxu0 0.0
    %5080 = vmatprep.subr.mxu0 0.0
    %5081 = vmatpush1.msra.mxu0 0.0
    %5082 = vmatprep.subr.mxu0 0.0
    %5083 = vmatpush1.msra.mxu0 0.0
    %5084 = vmatprep.subr.mxu0 0.0
    %5085 = vmatpush1.msra.mxu0 0.0
    %5086 = vmatprep.subr.mxu0 0.0
    %5087 = vmatpush1.msra.mxu0 0.0
    %5088 = vmatprep.subr.mxu0 0.0
    %5089 = vmatpush1.msra.mxu0 0.0
    %5090 = vmatprep.subr.mxu0 0.0
    %5091 = vmatpush1.msra.mxu0 0.0
    %5092 = vmatprep.subr.mxu0 0.0
    %5093 = vmatpush1.msra.mxu0 0.0
    %5094 = vmatprep.subr.mxu0 0.0
    %5095 = vmatpush1.msra.mxu0 0.0
    %5096 = vmatprep.mubr.f32.mxu0 0.0
    %5097 = vmatmul.mubr.f32.gmra.mrb[0].mxu0 %v692
    %v5098 = vpop.f32.mrb[0].mxu0
    %v5099 = vadd.f32 %v673, %v5098
    %v5100 = vpop.f32.mrb[0].mxu0
    %v5101 = vadd.f32 %v673, %v5100
    %5102 = vmatprep.mubr.f32.mxu0 0.0
    %5103 = vmatmul.mubr.f32.gmra.mrb[0].mxu0 %v695
    %v5104 = vpop.f32.mrb[0].mxu0
    %v5105 = vadd.f32 %v678, %v5104
    %v5106 = vpop.f32.mrb[0].mxu0
    %v5107 = vadd.f32 %v678, %v5106
    %5108 = vmatprep.mubr.f32.mxu0 0.0
    %5109 = vmatmul.mubr.f32.gmra.mrb[0].mxu0 %v698
    %v5110 = vpop.f32.mrb[0].mxu0
    %v5111 = vadd.f32 %v683, %v5110
    %v5112 = vpop.f32.mrb[0].mxu0
    %v5113 = vadd.f32 %v683, %v5112
    %5114 = vmatprep.mubr.f32.mxu0 0.0
    %5115 = vmatmul.mubr.f32.gmra.mrb[0].mxu0 %v701
    %v5116 = vpop.f32.mrb[0].mxu0
    %v5117 = vadd.f32 %v688, %v5116
    %v5118 = vpop.f32.mrb[0].mxu0
    %v5119 = vadd.f32 %v688, %v5118
    %5120 = vdwg.mxu0
    %5121 = vmatprep.subr.mxu0 %v5003
    %5122 = vmatpush1.msra.mxu0 %v5002
    %5123 = vmatprep.subr.mxu0 %v5007
    %5124 = vmatpush1.msra.mxu0 %v5006
    %5125 = vmatprep.subr.mxu0 %v5011
    %5126 = vmatpush1.msra.mxu0 %v5010
    %5127 = vmatprep.subr.mxu0 %v5015
    %5128 = vmatpush1.msra.mxu0 %v5014
    %5129 = vmatprep.subr.mxu0 %v5019
    %5130 = vmatpush1.msra.mxu0 %v5018
    %5131 = vmatprep.subr.mxu0 %v5023
    %5132 = vmatpush1.msra.mxu0 %v5022
    %5133 = vmatprep.subr.mxu0 %v5027
    %5134 = vmatpush1.msra.mxu0 %v5026
    %5135 = vmatprep.subr.mxu0 %v5031
    %5136 = vmatpush1.msra.mxu0 %v5030
    %5137 = vmatprep.subr.mxu0 0.0
    %5138 = vmatpush1.msra.mxu0 0.0
    %5139 = vmatprep.subr.mxu0 0.0
    %5140 = vmatpush1.msra.mxu0 0.0
    %5141 = vmatprep.subr.mxu0 0.0
    %5142 = vmatpush1.msra.mxu0 0.0
    %5143 = vmatprep.subr.mxu0 0.0
    %5144 = vmatpush1.msra.mxu0 0.0
    %5145 = vmatprep.subr.mxu0 0.0
    %5146 = vmatpush1.msra.mxu0 0.0
    %5147 = vmatprep.subr.mxu0 0.0
    %5148 = vmatpush1.msra.mxu0 0.0
    %5149 = vmatprep.subr.mxu0 0.0
    %5150 = vmatpush1.msra.mxu0 0.0
    %5151 = vmatprep.subr.mxu0 0.0
    %5152 = vmatpush1.msra.mxu0 0.0
    %5153 = vmatprep.subr.mxu0 0.0
    %5154 = vmatpush1.msra.mxu0 0.0
    %5155 = vmatprep.subr.mxu0 0.0
    %5156 = vmatpush1.msra.mxu0 0.0
    %5157 = vmatprep.subr.mxu0 0.0
    %5158 = vmatpush1.msra.mxu0 0.0
    %5159 = vmatprep.subr.mxu0 0.0
    %5160 = vmatpush1.msra.mxu0 0.0
    %5161 = vmatprep.subr.mxu0 0.0
    %5162 = vmatpush1.msra.mxu0 0.0
    %5163 = vmatprep.subr.mxu0 0.0
    %5164 = vmatpush1.msra.mxu0 0.0
    %5165 = vmatprep.subr.mxu0 0.0
    %5166 = vmatpush1.msra.mxu0 0.0
    %5167 = vmatprep.subr.mxu0 0.0
    %5168 = vmatpush1.msra.mxu0 0.0
    %5169 = vmatprep.subr.mxu0 0.0
    %5170 = vmatpush1.msra.mxu0 0.0
    %5171 = vmatprep.subr.mxu0 0.0
    %5172 = vmatpush1.msra.mxu0 0.0
    %5173 = vmatprep.subr.mxu0 0.0
    %5174 = vmatpush1.msra.mxu0 0.0
    %5175 = vmatprep.subr.mxu0 0.0
    %5176 = vmatpush1.msra.mxu0 0.0
    %5177 = vmatprep.subr.mxu0 0.0
    %5178 = vmatpush1.msra.mxu0 0.0
    %5179 = vmatprep.subr.mxu0 0.0
    %5180 = vmatpush1.msra.mxu0 0.0
    %5181 = vmatprep.subr.mxu0 0.0
    %5182 = vmatpush1.msra.mxu0 0.0
    %5183 = vmatprep.subr.mxu0 0.0
    %5184 = vmatpush1.msra.mxu0 0.0
    %5185 = vmatprep.mubr.f32.mxu0 0.0
    %5186 = vmatmul.mubr.f32.gmra.mrb[0].mxu0 %v692
    %v5187 = vpop.f32.mrb[0].mxu0
    %v5188 = vadd.f32 %v673, %v5187
    %v5189 = vpop.f32.mrb[0].mxu0
    %v5190 = vadd.f32 %v673, %v5189
    %5191 = vmatprep.mubr.f32.mxu0 0.0
    %5192 = vmatmul.mubr.f32.gmra.mrb[0].mxu0 %v695
    %v5193 = vpop.f32.mrb[0].mxu0
    %v5194 = vadd.f32 %v678, %v5193
    %v5195 = vpop.f32.mrb[0].mxu0
    %v5196 = vadd.f32 %v678, %v5195
    %5197 = vmatprep.mubr.f32.mxu0 0.0
    %5198 = vmatmul.mubr.f32.gmra.mrb[0].mxu0 %v698
    %v5199 = vpop.f32.mrb[0].mxu0
    %v5200 = vadd.f32 %v683, %v5199
    %v5201 = vpop.f32.mrb[0].mxu0
    %v5202 = vadd.f32 %v683, %v5201
    %5203 = vmatprep.mubr.f32.mxu0 0.0
    %5204 = vmatmul.mubr.f32.gmra.mrb[0].mxu0 %v701
    %v5205 = vpop.f32.mrb[0].mxu0
    %v5206 = vadd.f32 %v688, %v5205
    %v5207 = vpop.f32.mrb[0].mxu0
    %v5208 = vadd.f32 %v688, %v5207
    %5209 = vdwg.mxu0
    %v5210 = vmax.f32 %v5099, 0.0
    %v5211 = vmax.f32 %v5101, 0.0
    %v5212 = vmax.f32 %v5188, 0.0
    %v5213 = vmax.f32 %v5190, 0.0
    %v5214 = vmax.f32 %v5105, 0.0
    %v5215 = vmax.f32 %v5107, 0.0
    %v5216 = vmax.f32 %v5194, 0.0
    %v5217 = vmax.f32 %v5196, 0.0
    %v5218 = vmax.f32 %v5111, 0.0
    %v5219 = vmax.f32 %v5113, 0.0
    %v5220 = vmax.f32 %v5200, 0.0
    %v5221 = vmax.f32 %v5202, 0.0
    %v5222 = vmax.f32 %v5117, 0.0
    %v5223 = vmax.f32 %v5119, 0.0
    %v5224 = vmax.f32 %v5206, 0.0
    %v5225 = vmax.f32 %v5208, 0.0
    %v5226 = vmul.f32 %v5210, %v900
    %v5227 = vmul.f32 %v5211, %v900
    %v5228 = vmul.f32 %v5212, %v900
    %v5229 = vmul.f32 %v5213, %v900
    %v5230 = vmul.f32 %v5214, %v905
    %v5231 = vmul.f32 %v5215, %v905
    %v5232 = vmul.f32 %v5216, %v905
    %v5233 = vmul.f32 %v5217, %v905
    %v5234 = vmul.f32 %v5218, %v910
    %v5235 = vmul.f32 %v5219, %v910
    %v5236 = vmul.f32 %v5220, %v910
    %v5237 = vmul.f32 %v5221, %v910
    %v5238 = vmul.f32 %v5222, %v915
    %v5239 = vmul.f32 %v5223, %v915
    %v5240 = vmul.f32 %v5224, %v915
    %v5241 = vmul.f32 %v5225, %v915
    %v5242 = vadd.f32 %v5226, %v5230
    %v5243 = vadd.f32 %v5242, %v5234
    %v5244 = vadd.f32 %v5243, %v5238
    %v5245 = vrot.slane %v5244, 4
    %v5246 = vadd.f32 %v5244, %v5245
    %v5247 = vrot.slane %v5246, 2
    %v5248 = vadd.f32 %v5246, %v5247
    %v5249 = vrot.slane %v5248, 1
    %v5250 = vadd.f32 %v5248, %v5249
    %v5251 = vadd.f32 %v5227, %v5231
    %v5252 = vadd.f32 %v5251, %v5235
    %v5253 = vadd.f32 %v5252, %v5239
    %v5254 = vrot.slane %v5253, 4
    %v5255 = vadd.f32 %v5253, %v5254
    %v5256 = vrot.slane %v5255, 2
    %v5257 = vadd.f32 %v5255, %v5256
    %v5258 = vrot.slane %v5257, 1
    %v5259 = vadd.f32 %v5257, %v5258
    %v5260 = vadd.f32 %v5228, %v5232
    %v5261 = vadd.f32 %v5260, %v5236
    %v5262 = vadd.f32 %v5261, %v5240
    %v5263 = vrot.slane %v5262, 4
    %v5264 = vadd.f32 %v5262, %v5263
    %v5265 = vrot.slane %v5264, 2
    %v5266 = vadd.f32 %v5264, %v5265
    %v5267 = vrot.slane %v5266, 1
    %v5268 = vadd.f32 %v5266, %v5267
    %v5269 = vadd.f32 %v5229, %v5233
    %v5270 = vadd.f32 %v5269, %v5237
    %v5271 = vadd.f32 %v5270, %v5241
    %v5272 = vrot.slane %v5271, 4
    %v5273 = vadd.f32 %v5271, %v5272
    %v5274 = vrot.slane %v5273, 2
    %v5275 = vadd.f32 %v5273, %v5274
    %v5276 = vrot.slane %v5275, 1
    %v5277 = vadd.f32 %v5275, %v5276
    %v5278 = vadd.f32 %v5250, %v977
    %v5279 = vadd.f32 %v5259, %v977
    %v5280 = vadd.f32 %v5268, %v977
    %v5281 = vadd.f32 %v5277, %v977
    %v5286 = vcombine.low %v5278, %v5279
    %v5287 = vcombine.low %v5280, %v5281
    %v5289 = vunpack.c.l.s4 1966171168
    %v5290 = vunpack.c.0.s8 %v5289
    %v5291 = vlaneseq
    %v5292 = vshrl.u32 %v5291, 7
    %v5293 = vsub.s32 %v5290, %v5292
    %v5294 = vrot.slane %v5286, %v5293
    %v5296 = vunpack.c.l.s4 1966171168
    %v5297 = vunpack.c.0.s8 %v5296
    %v5298 = vlaneseq
    %v5299 = vshrl.u32 %v5298, 7
    %v5300 = vsub.s32 %v5297, %v5299
    %v5301 = vrot.slane %v5287, %v5300
    %v5302 = vcombine.low %v5294, %v5301
    %v5304 = vunpack.c.l.s4 1966171168
    %v5305 = vunpack.c.0.s8 %v5304
    %v5306 = vlaneseq
    %v5307 = vshrl.u32 %v5306, 7
    %v5308 = vsub.s32 %v5305, %v5307
    %v5309 = vrot.slane %v5302, %v5308
    %5311 = vst.msk [vmem:[#allocation3 + $0x18] sm:$0xf] %vm1014, %v5309
    %v5312 = vld [vmem:[%s0 + $0x70] sm:$0xff]
    %v5313 = vld [vmem:[%s0 + $0x78] sm:$0xff]
    %v5316 = vlaneseq
    %v5317 = vshrl.u32 %v5316, 7
    %v5318 = vsub.s32 0, %v5317
    %v5319 = vrot.slane %v5312, %v5318
    %v5320 = vlaneseq
    %v5321 = vshrl.u32 %v5320, 7
    %v5322 = vsub.s32 4, %v5321
    %v5323 = vrot.slane %v5312, %v5322
    %v5324 = vlaneseq
    %v5325 = vshrl.u32 %v5324, 7
    %v5326 = vsub.s32 0, %v5325
    %v5327 = vrot.slane %v5313, %v5326
    %v5328 = vlaneseq
    %v5329 = vshrl.u32 %v5328, 7
    %v5330 = vsub.s32 4, %v5329
    %v5331 = vrot.slane %v5313, %v5330
    %v5336 = vlaneseq
    %v5337 = vshrl.u32 %v5336, 7
    %v5338 = vsub.s32 0, %v5337
    %v5339 = vrot.slane %v5319, %v5338
    %v5340 = vlaneseq
    %v5341 = vshrl.u32 %v5340, 7
    %v5342 = vsub.s32 0, %v5341
    %v5343 = vrot.slane %v5323, %v5342
    %v5344 = vlaneseq
    %v5345 = vshrl.u32 %v5344, 7
    %v5346 = vsub.s32 0, %v5345
    %v5347 = vrot.slane %v5327, %v5346
    %v5348 = vlaneseq
    %v5349 = vshrl.u32 %v5348, 7
    %v5350 = vsub.s32 0, %v5349
    %v5351 = vrot.slane %v5331, %v5350
    %v5352 = vmul.f32 %v63, %v5339
    %v5353 = vmul.f32 %v63, %v5343
    %v5354 = vmul.f32 %v63, %v5347
    %v5355 = vmul.f32 %v63, %v5351
    %v5356 = vmul.f32 %v68, %v5339
    %v5357 = vmul.f32 %v68, %v5343
    %v5358 = vmul.f32 %v68, %v5347
    %v5359 = vmul.f32 %v68, %v5351
    %v5360 = vmul.f32 %v73, %v5339
    %v5361 = vmul.f32 %v73, %v5343
    %v5362 = vmul.f32 %v73, %v5347
    %v5363 = vmul.f32 %v73, %v5351
    %v5364 = vmul.f32 %v78, %v5339
    %v5365 = vmul.f32 %v78, %v5343
    %v5366 = vmul.f32 %v78, %v5347
    %v5367 = vmul.f32 %v78, %v5351
    %v5368 = vmul.f32 %v83, %v5339
    %v5369 = vmul.f32 %v83, %v5343
    %v5370 = vmul.f32 %v83, %v5347
    %v5371 = vmul.f32 %v83, %v5351
    %v5372 = vmul.f32 %v88, %v5339
    %v5373 = vmul.f32 %v88, %v5343
    %v5374 = vmul.f32 %v88, %v5347
    %v5375 = vmul.f32 %v88, %v5351
    %v5376 = vmul.f32 %v93, %v5339
    %v5377 = vmul.f32 %v93, %v5343
    %v5378 = vmul.f32 %v93, %v5347
    %v5379 = vmul.f32 %v93, %v5351
    %v5380 = vmul.f32 %v98, %v5339
    %v5381 = vmul.f32 %v98, %v5343
    %v5382 = vmul.f32 %v98, %v5347
    %v5383 = vmul.f32 %v98, %v5351
    %v5384 = vlaneseq
    %v5385 = vshrl.u32 %v5384, 7
    %v5386 = vsub.s32 1, %v5385
    %v5387 = vrot.slane %v5312, %v5386
    %v5388 = vlaneseq
    %v5389 = vshrl.u32 %v5388, 7
    %v5390 = vsub.s32 5, %v5389
    %v5391 = vrot.slane %v5312, %v5390
    %v5392 = vlaneseq
    %v5393 = vshrl.u32 %v5392, 7
    %v5394 = vsub.s32 1, %v5393
    %v5395 = vrot.slane %v5313, %v5394
    %v5396 = vlaneseq
    %v5397 = vshrl.u32 %v5396, 7
    %v5398 = vsub.s32 5, %v5397
    %v5399 = vrot.slane %v5313, %v5398
    %v5404 = vlaneseq
    %v5405 = vshrl.u32 %v5404, 7
    %v5406 = vsub.s32 1, %v5405
    %v5407 = vrot.slane %v5387, %v5406
    %v5408 = vlaneseq
    %v5409 = vshrl.u32 %v5408, 7
    %v5410 = vsub.s32 1, %v5409
    %v5411 = vrot.slane %v5391, %v5410
    %v5412 = vlaneseq
    %v5413 = vshrl.u32 %v5412, 7
    %v5414 = vsub.s32 1, %v5413
    %v5415 = vrot.slane %v5395, %v5414
    %v5416 = vlaneseq
    %v5417 = vshrl.u32 %v5416, 7
    %v5418 = vsub.s32 1, %v5417
    %v5419 = vrot.slane %v5399, %v5418
    %v5420 = vmul.f32 %v172, %v5407
    %v5421 = vmul.f32 %v172, %v5411
    %v5422 = vmul.f32 %v172, %v5415
    %v5423 = vmul.f32 %v172, %v5419
    %v5424 = vmul.f32 %v176, %v5407
    %v5425 = vmul.f32 %v176, %v5411
    %v5426 = vmul.f32 %v176, %v5415
    %v5427 = vmul.f32 %v176, %v5419
    %v5428 = vmul.f32 %v180, %v5407
    %v5429 = vmul.f32 %v180, %v5411
    %v5430 = vmul.f32 %v180, %v5415
    %v5431 = vmul.f32 %v180, %v5419
    %v5432 = vmul.f32 %v184, %v5407
    %v5433 = vmul.f32 %v184, %v5411
    %v5434 = vmul.f32 %v184, %v5415
    %v5435 = vmul.f32 %v184, %v5419
    %v5436 = vmul.f32 %v188, %v5407
    %v5437 = vmul.f32 %v188, %v5411
    %v5438 = vmul.f32 %v188, %v5415
    %v5439 = vmul.f32 %v188, %v5419
    %v5440 = vmul.f32 %v192, %v5407
    %v5441 = vmul.f32 %v192, %v5411
    %v5442 = vmul.f32 %v192, %v5415
    %v5443 = vmul.f32 %v192, %v5419
    %v5444 = vmul.f32 %v196, %v5407
    %v5445 = vmul.f32 %v196, %v5411
    %v5446 = vmul.f32 %v196, %v5415
    %v5447 = vmul.f32 %v196, %v5419
    %v5448 = vmul.f32 %v200, %v5407
    %v5449 = vmul.f32 %v200, %v5411
    %v5450 = vmul.f32 %v200, %v5415
    %v5451 = vmul.f32 %v200, %v5419
    %v5452 = vadd.f32 %v5352, %v5420
    %v5453 = vadd.f32 %v5353, %v5421
    %v5454 = vadd.f32 %v5354, %v5422
    %v5455 = vadd.f32 %v5355, %v5423
    %v5456 = vadd.f32 %v5356, %v5424
    %v5457 = vadd.f32 %v5357, %v5425
    %v5458 = vadd.f32 %v5358, %v5426
    %v5459 = vadd.f32 %v5359, %v5427
    %v5460 = vadd.f32 %v5360, %v5428
    %v5461 = vadd.f32 %v5361, %v5429
    %v5462 = vadd.f32 %v5362, %v5430
    %v5463 = vadd.f32 %v5363, %v5431
    %v5464 = vadd.f32 %v5364, %v5432
    %v5465 = vadd.f32 %v5365, %v5433
    %v5466 = vadd.f32 %v5366, %v5434
    %v5467 = vadd.f32 %v5367, %v5435
    %v5468 = vadd.f32 %v5368, %v5436
    %v5469 = vadd.f32 %v5369, %v5437
    %v5470 = vadd.f32 %v5370, %v5438
    %v5471 = vadd.f32 %v5371, %v5439
    %v5472 = vadd.f32 %v5372, %v5440
    %v5473 = vadd.f32 %v5373, %v5441
    %v5474 = vadd.f32 %v5374, %v5442
    %v5475 = vadd.f32 %v5375, %v5443
    %v5476 = vadd.f32 %v5376, %v5444
    %v5477 = vadd.f32 %v5377, %v5445
    %v5478 = vadd.f32 %v5378, %v5446
    %v5479 = vadd.f32 %v5379, %v5447
    %v5480 = vadd.f32 %v5380, %v5448
    %v5481 = vadd.f32 %v5381, %v5449
    %v5482 = vadd.f32 %v5382, %v5450
    %v5483 = vadd.f32 %v5383, %v5451
    %v5484 = vlaneseq
    %v5485 = vshrl.u32 %v5484, 7
    %v5486 = vsub.s32 2, %v5485
    %v5487 = vrot.slane %v5312, %v5486
    %v5488 = vlaneseq
    %v5489 = vshrl.u32 %v5488, 7
    %v5490 = vsub.s32 6, %v5489
    %v5491 = vrot.slane %v5312, %v5490
    %v5492 = vlaneseq
    %v5493 = vshrl.u32 %v5492, 7
    %v5494 = vsub.s32 2, %v5493
    %v5495 = vrot.slane %v5313, %v5494
    %v5496 = vlaneseq
    %v5497 = vshrl.u32 %v5496, 7
    %v5498 = vsub.s32 6, %v5497
    %v5499 = vrot.slane %v5313, %v5498
    %v5504 = vlaneseq
    %v5505 = vshrl.u32 %v5504, 7
    %v5506 = vsub.s32 2, %v5505
    %v5507 = vrot.slane %v5487, %v5506
    %v5508 = vlaneseq
    %v5509 = vshrl.u32 %v5508, 7
    %v5510 = vsub.s32 2, %v5509
    %v5511 = vrot.slane %v5491, %v5510
    %v5512 = vlaneseq
    %v5513 = vshrl.u32 %v5512, 7
    %v5514 = vsub.s32 2, %v5513
    %v5515 = vrot.slane %v5495, %v5514
    %v5516 = vlaneseq
    %v5517 = vshrl.u32 %v5516, 7
    %v5518 = vsub.s32 2, %v5517
    %v5519 = vrot.slane %v5499, %v5518
    %v5520 = vmul.f32 %v304, %v5507
    %v5521 = vmul.f32 %v304, %v5511
    %v5522 = vmul.f32 %v304, %v5515
    %v5523 = vmul.f32 %v304, %v5519
    %v5524 = vmul.f32 %v308, %v5507
    %v5525 = vmul.f32 %v308, %v5511
    %v5526 = vmul.f32 %v308, %v5515
    %v5527 = vmul.f32 %v308, %v5519
    %v5528 = vmul.f32 %v312, %v5507
    %v5529 = vmul.f32 %v312, %v5511
    %v5530 = vmul.f32 %v312, %v5515
    %v5531 = vmul.f32 %v312, %v5519
    %v5532 = vmul.f32 %v316, %v5507
    %v5533 = vmul.f32 %v316, %v5511
    %v5534 = vmul.f32 %v316, %v5515
    %v5535 = vmul.f32 %v316, %v5519
    %v5536 = vmul.f32 %v320, %v5507
    %v5537 = vmul.f32 %v320, %v5511
    %v5538 = vmul.f32 %v320, %v5515
    %v5539 = vmul.f32 %v320, %v5519
    %v5540 = vmul.f32 %v324, %v5507
    %v5541 = vmul.f32 %v324, %v5511
    %v5542 = vmul.f32 %v324, %v5515
    %v5543 = vmul.f32 %v324, %v5519
    %v5544 = vmul.f32 %v328, %v5507
    %v5545 = vmul.f32 %v328, %v5511
    %v5546 = vmul.f32 %v328, %v5515
    %v5547 = vmul.f32 %v328, %v5519
    %v5548 = vmul.f32 %v332, %v5507
    %v5549 = vmul.f32 %v332, %v5511
    %v5550 = vmul.f32 %v332, %v5515
    %v5551 = vmul.f32 %v332, %v5519
    %v5552 = vadd.f32 %v5452, %v5520
    %v5553 = vadd.f32 %v5453, %v5521
    %v5554 = vadd.f32 %v5454, %v5522
    %v5555 = vadd.f32 %v5455, %v5523
    %v5556 = vadd.f32 %v5456, %v5524
    %v5557 = vadd.f32 %v5457, %v5525
    %v5558 = vadd.f32 %v5458, %v5526
    %v5559 = vadd.f32 %v5459, %v5527
    %v5560 = vadd.f32 %v5460, %v5528
    %v5561 = vadd.f32 %v5461, %v5529
    %v5562 = vadd.f32 %v5462, %v5530
    %v5563 = vadd.f32 %v5463, %v5531
    %v5564 = vadd.f32 %v5464, %v5532
    %v5565 = vadd.f32 %v5465, %v5533
    %v5566 = vadd.f32 %v5466, %v5534
    %v5567 = vadd.f32 %v5467, %v5535
    %v5568 = vadd.f32 %v5468, %v5536
    %v5569 = vadd.f32 %v5469, %v5537
    %v5570 = vadd.f32 %v5470, %v5538
    %v5571 = vadd.f32 %v5471, %v5539
    %v5572 = vadd.f32 %v5472, %v5540
    %v5573 = vadd.f32 %v5473, %v5541
    %v5574 = vadd.f32 %v5474, %v5542
    %v5575 = vadd.f32 %v5475, %v5543
    %v5576 = vadd.f32 %v5476, %v5544
    %v5577 = vadd.f32 %v5477, %v5545
    %v5578 = vadd.f32 %v5478, %v5546
    %v5579 = vadd.f32 %v5479, %v5547
    %v5580 = vadd.f32 %v5480, %v5548
    %v5581 = vadd.f32 %v5481, %v5549
    %v5582 = vadd.f32 %v5482, %v5550
    %v5583 = vadd.f32 %v5483, %v5551
    %v5584 = vlaneseq
    %v5585 = vshrl.u32 %v5584, 7
    %v5586 = vsub.s32 3, %v5585
    %v5587 = vrot.slane %v5312, %v5586
    %v5588 = vlaneseq
    %v5589 = vshrl.u32 %v5588, 7
    %v5590 = vsub.s32 7, %v5589
    %v5591 = vrot.slane %v5312, %v5590
    %v5592 = vlaneseq
    %v5593 = vshrl.u32 %v5592, 7
    %v5594 = vsub.s32 3, %v5593
    %v5595 = vrot.slane %v5313, %v5594
    %v5596 = vlaneseq
    %v5597 = vshrl.u32 %v5596, 7
    %v5598 = vsub.s32 7, %v5597
    %v5599 = vrot.slane %v5313, %v5598
    %v5604 = vlaneseq
    %v5605 = vshrl.u32 %v5604, 7
    %v5606 = vsub.s32 3, %v5605
    %v5607 = vrot.slane %v5587, %v5606
    %v5608 = vlaneseq
    %v5609 = vshrl.u32 %v5608, 7
    %v5610 = vsub.s32 3, %v5609
    %v5611 = vrot.slane %v5591, %v5610
    %v5612 = vlaneseq
    %v5613 = vshrl.u32 %v5612, 7
    %v5614 = vsub.s32 3, %v5613
    %v5615 = vrot.slane %v5595, %v5614
    %v5616 = vlaneseq
    %v5617 = vshrl.u32 %v5616, 7
    %v5618 = vsub.s32 3, %v5617
    %v5619 = vrot.slane %v5599, %v5618
    %v5620 = vmul.f32 %v436, %v5607
    %v5621 = vmul.f32 %v436, %v5611
    %v5622 = vmul.f32 %v436, %v5615
    %v5623 = vmul.f32 %v436, %v5619
    %v5624 = vmul.f32 %v440, %v5607
    %v5625 = vmul.f32 %v440, %v5611
    %v5626 = vmul.f32 %v440, %v5615
    %v5627 = vmul.f32 %v440, %v5619
    %v5628 = vmul.f32 %v444, %v5607
    %v5629 = vmul.f32 %v444, %v5611
    %v5630 = vmul.f32 %v444, %v5615
    %v5631 = vmul.f32 %v444, %v5619
    %v5632 = vmul.f32 %v448, %v5607
    %v5633 = vmul.f32 %v448, %v5611
    %v5634 = vmul.f32 %v448, %v5615
    %v5635 = vmul.f32 %v448, %v5619
    %v5636 = vmul.f32 %v452, %v5607
    %v5637 = vmul.f32 %v452, %v5611
    %v5638 = vmul.f32 %v452, %v5615
    %v5639 = vmul.f32 %v452, %v5619
    %v5640 = vmul.f32 %v456, %v5607
    %v5641 = vmul.f32 %v456, %v5611
    %v5642 = vmul.f32 %v456, %v5615
    %v5643 = vmul.f32 %v456, %v5619
    %v5644 = vmul.f32 %v460, %v5607
    %v5645 = vmul.f32 %v460, %v5611
    %v5646 = vmul.f32 %v460, %v5615
    %v5647 = vmul.f32 %v460, %v5619
    %v5648 = vmul.f32 %v464, %v5607
    %v5649 = vmul.f32 %v464, %v5611
    %v5650 = vmul.f32 %v464, %v5615
    %v5651 = vmul.f32 %v464, %v5619
    %v5652 = vadd.f32 %v5552, %v5620
    %v5653 = vadd.f32 %v5553, %v5621
    %v5654 = vadd.f32 %v5554, %v5622
    %v5655 = vadd.f32 %v5555, %v5623
    %v5656 = vadd.f32 %v5556, %v5624
    %v5657 = vadd.f32 %v5557, %v5625
    %v5658 = vadd.f32 %v5558, %v5626
    %v5659 = vadd.f32 %v5559, %v5627
    %v5660 = vadd.f32 %v5560, %v5628
    %v5661 = vadd.f32 %v5561, %v5629
    %v5662 = vadd.f32 %v5562, %v5630
    %v5663 = vadd.f32 %v5563, %v5631
    %v5664 = vadd.f32 %v5564, %v5632
    %v5665 = vadd.f32 %v5565, %v5633
    %v5666 = vadd.f32 %v5566, %v5634
    %v5667 = vadd.f32 %v5567, %v5635
    %v5668 = vadd.f32 %v5568, %v5636
    %v5669 = vadd.f32 %v5569, %v5637
    %v5670 = vadd.f32 %v5570, %v5638
    %v5671 = vadd.f32 %v5571, %v5639
    %v5672 = vadd.f32 %v5572, %v5640
    %v5673 = vadd.f32 %v5573, %v5641
    %v5674 = vadd.f32 %v5574, %v5642
    %v5675 = vadd.f32 %v5575, %v5643
    %v5676 = vadd.f32 %v5576, %v5644
    %v5677 = vadd.f32 %v5577, %v5645
    %v5678 = vadd.f32 %v5578, %v5646
    %v5679 = vadd.f32 %v5579, %v5647
    %v5680 = vadd.f32 %v5580, %v5648
    %v5681 = vadd.f32 %v5581, %v5649
    %v5682 = vadd.f32 %v5582, %v5650
    %v5683 = vadd.f32 %v5583, %v5651
    %v5684 = vadd.f32 %v5652, %v569
    %v5685 = vadd.f32 %v5653, %v569
    %v5686 = vadd.f32 %v5654, %v569
    %v5687 = vadd.f32 %v5655, %v569
    %v5688 = vadd.f32 %v5656, %v574
    %v5689 = vadd.f32 %v5657, %v574
    %v5690 = vadd.f32 %v5658, %v574
    %v5691 = vadd.f32 %v5659, %v574
    %v5692 = vadd.f32 %v5660, %v579
    %v5693 = vadd.f32 %v5661, %v579
    %v5694 = vadd.f32 %v5662, %v579
    %v5695 = vadd.f32 %v5663, %v579
    %v5696 = vadd.f32 %v5664, %v584
    %v5697 = vadd.f32 %v5665, %v584
    %v5698 = vadd.f32 %v5666, %v584
    %v5699 = vadd.f32 %v5667, %v584
    %v5700 = vadd.f32 %v5668, %v589
    %v5701 = vadd.f32 %v5669, %v589
    %v5702 = vadd.f32 %v5670, %v589
    %v5703 = vadd.f32 %v5671, %v589
    %v5704 = vadd.f32 %v5672, %v594
    %v5705 = vadd.f32 %v5673, %v594
    %v5706 = vadd.f32 %v5674, %v594
    %v5707 = vadd.f32 %v5675, %v594
    %v5708 = vadd.f32 %v5676, %v599
    %v5709 = vadd.f32 %v5677, %v599
    %v5710 = vadd.f32 %v5678, %v599
    %v5711 = vadd.f32 %v5679, %v599
    %v5712 = vadd.f32 %v5680, %v604
    %v5713 = vadd.f32 %v5681, %v604
    %v5714 = vadd.f32 %v5682, %v604
    %v5715 = vadd.f32 %v5683, %v604
    %v5716 = vmax.f32 %v5684, 0.0
    %v5717 = vmax.f32 %v5685, 0.0
    %v5718 = vmax.f32 %v5686, 0.0
    %v5719 = vmax.f32 %v5687, 0.0
    %v5720 = vmax.f32 %v5688, 0.0
    %v5721 = vmax.f32 %v5689, 0.0
    %v5722 = vmax.f32 %v5690, 0.0
    %v5723 = vmax.f32 %v5691, 0.0
    %v5724 = vmax.f32 %v5692, 0.0
    %v5725 = vmax.f32 %v5693, 0.0
    %v5726 = vmax.f32 %v5694, 0.0
    %v5727 = vmax.f32 %v5695, 0.0
    %v5728 = vmax.f32 %v5696, 0.0
    %v5729 = vmax.f32 %v5697, 0.0
    %v5730 = vmax.f32 %v5698, 0.0
    %v5731 = vmax.f32 %v5699, 0.0
    %v5732 = vmax.f32 %v5700, 0.0
    %v5733 = vmax.f32 %v5701, 0.0
    %v5734 = vmax.f32 %v5702, 0.0
    %v5735 = vmax.f32 %v5703, 0.0
    %v5736 = vmax.f32 %v5704, 0.0
    %v5737 = vmax.f32 %v5705, 0.0
    %v5738 = vmax.f32 %v5706, 0.0
    %v5739 = vmax.f32 %v5707, 0.0
    %v5740 = vmax.f32 %v5708, 0.0
    %v5741 = vmax.f32 %v5709, 0.0
    %v5742 = vmax.f32 %v5710, 0.0
    %v5743 = vmax.f32 %v5711, 0.0
    %v5744 = vmax.f32 %v5712, 0.0
    %v5745 = vmax.f32 %v5713, 0.0
    %v5746 = vmax.f32 %v5714, 0.0
    %v5747 = vmax.f32 %v5715, 0.0
    %5748 = vmatprep.subr.mxu0 %v5717
    %5749 = vmatpush1.msra.mxu0 %v5716
    %5750 = vmatprep.subr.mxu0 %v5721
    %5751 = vmatpush1.msra.mxu0 %v5720
    %5752 = vmatprep.subr.mxu0 %v5725
    %5753 = vmatpush1.msra.mxu0 %v5724
    %5754 = vmatprep.subr.mxu0 %v5729
    %5755 = vmatpush1.msra.mxu0 %v5728
    %5756 = vmatprep.subr.mxu0 %v5733
    %5757 = vmatpush1.msra.mxu0 %v5732
    %5758 = vmatprep.subr.mxu0 %v5737
    %5759 = vmatpush1.msra.mxu0 %v5736
    %5760 = vmatprep.subr.mxu0 %v5741
    %5761 = vmatpush1.msra.mxu0 %v5740
    %5762 = vmatprep.subr.mxu0 %v5745
    %5763 = vmatpush1.msra.mxu0 %v5744
    %5764 = vmatprep.subr.mxu0 0.0
    %5765 = vmatpush1.msra.mxu0 0.0
    %5766 = vmatprep.subr.mxu0 0.0
    %5767 = vmatpush1.msra.mxu0 0.0
    %5768 = vmatprep.subr.mxu0 0.0
    %5769 = vmatpush1.msra.mxu0 0.0
    %5770 = vmatprep.subr.mxu0 0.0
    %5771 = vmatpush1.msra.mxu0 0.0
    %5772 = vmatprep.subr.mxu0 0.0
    %5773 = vmatpush1.msra.mxu0 0.0
    %5774 = vmatprep.subr.mxu0 0.0
    %5775 = vmatpush1.msra.mxu0 0.0
    %5776 = vmatprep.subr.mxu0 0.0
    %5777 = vmatpush1.msra.mxu0 0.0
    %5778 = vmatprep.subr.mxu0 0.0
    %5779 = vmatpush1.msra.mxu0 0.0
    %5780 = vmatprep.subr.mxu0 0.0
    %5781 = vmatpush1.msra.mxu0 0.0
    %5782 = vmatprep.subr.mxu0 0.0
    %5783 = vmatpush1.msra.mxu0 0.0
    %5784 = vmatprep.subr.mxu0 0.0
    %5785 = vmatpush1.msra.mxu0 0.0
    %5786 = vmatprep.subr.mxu0 0.0
    %5787 = vmatpush1.msra.mxu0 0.0
    %5788 = vmatprep.subr.mxu0 0.0
    %5789 = vmatpush1.msra.mxu0 0.0
    %5790 = vmatprep.subr.mxu0 0.0
    %5791 = vmatpush1.msra.mxu0 0.0
    %5792 = vmatprep.subr.mxu0 0.0
    %5793 = vmatpush1.msra.mxu0 0.0
    %5794 = vmatprep.subr.mxu0 0.0
    %5795 = vmatpush1.msra.mxu0 0.0
    %5796 = vmatprep.subr.mxu0 0.0
    %5797 = vmatpush1.msra.mxu0 0.0
    %5798 = vmatprep.subr.mxu0 0.0
    %5799 = vmatpush1.msra.mxu0 0.0
    %5800 = vmatprep.subr.mxu0 0.0
    %5801 = vmatpush1.msra.mxu0 0.0
    %5802 = vmatprep.subr.mxu0 0.0
    %5803 = vmatpush1.msra.mxu0 0.0
    %5804 = vmatprep.subr.mxu0 0.0
    %5805 = vmatpush1.msra.mxu0 0.0
    %5806 = vmatprep.subr.mxu0 0.0
    %5807 = vmatpush1.msra.mxu0 0.0
    %5808 = vmatprep.subr.mxu0 0.0
    %5809 = vmatpush1.msra.mxu0 0.0
    %5810 = vmatprep.subr.mxu0 0.0
    %5811 = vmatpush1.msra.mxu0 0.0
    %5812 = vmatprep.mubr.f32.mxu0 0.0
    %5813 = vmatmul.mubr.f32.gmra.mrb[0].mxu0 %v692
    %v5814 = vpop.f32.mrb[0].mxu0
    %v5815 = vadd.f32 %v673, %v5814
    %v5816 = vpop.f32.mrb[0].mxu0
    %v5817 = vadd.f32 %v673, %v5816
    %5818 = vmatprep.mubr.f32.mxu0 0.0
    %5819 = vmatmul.mubr.f32.gmra.mrb[0].mxu0 %v695
    %v5820 = vpop.f32.mrb[0].mxu0
    %v5821 = vadd.f32 %v678, %v5820
    %v5822 = vpop.f32.mrb[0].mxu0
    %v5823 = vadd.f32 %v678, %v5822
    %5824 = vmatprep.mubr.f32.mxu0 0.0
    %5825 = vmatmul.mubr.f32.gmra.mrb[0].mxu0 %v698
    %v5826 = vpop.f32.mrb[0].mxu0
    %v5827 = vadd.f32 %v683, %v5826
    %v5828 = vpop.f32.mrb[0].mxu0
    %v5829 = vadd.f32 %v683, %v5828
    %5830 = vmatprep.mubr.f32.mxu0 0.0
    %5831 = vmatmul.mubr.f32.gmra.mrb[0].mxu0 %v701
    %v5832 = vpop.f32.mrb[0].mxu0
    %v5833 = vadd.f32 %v688, %v5832
    %v5834 = vpop.f32.mrb[0].mxu0
    %v5835 = vadd.f32 %v688, %v5834
    %5836 = vdwg.mxu0
    %5837 = vmatprep.subr.mxu0 %v5719
    %5838 = vmatpush1.msra.mxu0 %v5718
    %5839 = vmatprep.subr.mxu0 %v5723
    %5840 = vmatpush1.msra.mxu0 %v5722
    %5841 = vmatprep.subr.mxu0 %v5727
    %5842 = vmatpush1.msra.mxu0 %v5726
    %5843 = vmatprep.subr.mxu0 %v5731
    %5844 = vmatpush1.msra.mxu0 %v5730
    %5845 = vmatprep.subr.mxu0 %v5735
    %5846 = vmatpush1.msra.mxu0 %v5734
    %5847 = vmatprep.subr.mxu0 %v5739
    %5848 = vmatpush1.msra.mxu0 %v5738
    %5849 = vmatprep.subr.mxu0 %v5743
    %5850 = vmatpush1.msra.mxu0 %v5742
    %5851 = vmatprep.subr.mxu0 %v5747
    %5852 = vmatpush1.msra.mxu0 %v5746
    %5853 = vmatprep.subr.mxu0 0.0
    %5854 = vmatpush1.msra.mxu0 0.0
    %5855 = vmatprep.subr.mxu0 0.0
    %5856 = vmatpush1.msra.mxu0 0.0
    %5857 = vmatprep.subr.mxu0 0.0
    %5858 = vmatpush1.msra.mxu0 0.0
    %5859 = vmatprep.subr.mxu0 0.0
    %5860 = vmatpush1.msra.mxu0 0.0
    %5861 = vmatprep.subr.mxu0 0.0
    %5862 = vmatpush1.msra.mxu0 0.0
    %5863 = vmatprep.subr.mxu0 0.0
    %5864 = vmatpush1.msra.mxu0 0.0
    %5865 = vmatprep.subr.mxu0 0.0
    %5866 = vmatpush1.msra.mxu0 0.0
    %5867 = vmatprep.subr.mxu0 0.0
    %5868 = vmatpush1.msra.mxu0 0.0
    %5869 = vmatprep.subr.mxu0 0.0
    %5870 = vmatpush1.msra.mxu0 0.0
    %5871 = vmatprep.subr.mxu0 0.0
    %5872 = vmatpush1.msra.mxu0 0.0
    %5873 = vmatprep.subr.mxu0 0.0
    %5874 = vmatpush1.msra.mxu0 0.0
    %5875 = vmatprep.subr.mxu0 0.0
    %5876 = vmatpush1.msra.mxu0 0.0
    %5877 = vmatprep.subr.mxu0 0.0
    %5878 = vmatpush1.msra.mxu0 0.0
    %5879 = vmatprep.subr.mxu0 0.0
    %5880 = vmatpush1.msra.mxu0 0.0
    %5881 = vmatprep.subr.mxu0 0.0
    %5882 = vmatpush1.msra.mxu0 0.0
    %5883 = vmatprep.subr.mxu0 0.0
    %5884 = vmatpush1.msra.mxu0 0.0
    %5885 = vmatprep.subr.mxu0 0.0
    %5886 = vmatpush1.msra.mxu0 0.0
    %5887 = vmatprep.subr.mxu0 0.0
    %5888 = vmatpush1.msra.mxu0 0.0
    %5889 = vmatprep.subr.mxu0 0.0
    %5890 = vmatpush1.msra.mxu0 0.0
    %5891 = vmatprep.subr.mxu0 0.0
    %5892 = vmatpush1.msra.mxu0 0.0
    %5893 = vmatprep.subr.mxu0 0.0
    %5894 = vmatpush1.msra.mxu0 0.0
    %5895 = vmatprep.subr.mxu0 0.0
    %5896 = vmatpush1.msra.mxu0 0.0
    %5897 = vmatprep.subr.mxu0 0.0
    %5898 = vmatpush1.msra.mxu0 0.0
    %5899 = vmatprep.subr.mxu0 0.0
    %5900 = vmatpush1.msra.mxu0 0.0
    %5901 = vmatprep.mubr.f32.mxu0 0.0
    %5902 = vmatmul.mubr.f32.gmra.mrb[0].mxu0 %v692
    %v5903 = vpop.f32.mrb[0].mxu0
    %v5904 = vadd.f32 %v673, %v5903
    %v5905 = vpop.f32.mrb[0].mxu0
    %v5906 = vadd.f32 %v673, %v5905
    %5907 = vmatprep.mubr.f32.mxu0 0.0
    %5908 = vmatmul.mubr.f32.gmra.mrb[0].mxu0 %v695
    %v5909 = vpop.f32.mrb[0].mxu0
    %v5910 = vadd.f32 %v678, %v5909
    %v5911 = vpop.f32.mrb[0].mxu0
    %v5912 = vadd.f32 %v678, %v5911
    %5913 = vmatprep.mubr.f32.mxu0 0.0
    %5914 = vmatmul.mubr.f32.gmra.mrb[0].mxu0 %v698
    %v5915 = vpop.f32.mrb[0].mxu0
    %v5916 = vadd.f32 %v683, %v5915
    %v5917 = vpop.f32.mrb[0].mxu0
    %v5918 = vadd.f32 %v683, %v5917
    %5919 = vmatprep.mubr.f32.mxu0 0.0
    %5920 = vmatmul.mubr.f32.gmra.mrb[0].mxu0 %v701
    %v5921 = vpop.f32.mrb[0].mxu0
    %v5922 = vadd.f32 %v688, %v5921
    %v5923 = vpop.f32.mrb[0].mxu0
    %v5924 = vadd.f32 %v688, %v5923
    %5925 = vdwg.mxu0
    %v5926 = vmax.f32 %v5815, 0.0
    %v5927 = vmax.f32 %v5817, 0.0
    %v5928 = vmax.f32 %v5904, 0.0
    %v5929 = vmax.f32 %v5906, 0.0
    %v5930 = vmax.f32 %v5821, 0.0
    %v5931 = vmax.f32 %v5823, 0.0
    %v5932 = vmax.f32 %v5910, 0.0
    %v5933 = vmax.f32 %v5912, 0.0
    %v5934 = vmax.f32 %v5827, 0.0
    %v5935 = vmax.f32 %v5829, 0.0
    %v5936 = vmax.f32 %v5916, 0.0
    %v5937 = vmax.f32 %v5918, 0.0
    %v5938 = vmax.f32 %v5833, 0.0
    %v5939 = vmax.f32 %v5835, 0.0
    %v5940 = vmax.f32 %v5922, 0.0
    %v5941 = vmax.f32 %v5924, 0.0
    %v5942 = vmul.f32 %v5926, %v900
    %v5943 = vmul.f32 %v5927, %v900
    %v5944 = vmul.f32 %v5928, %v900
    %v5945 = vmul.f32 %v5929, %v900
    %v5946 = vmul.f32 %v5930, %v905
    %v5947 = vmul.f32 %v5931, %v905
    %v5948 = vmul.f32 %v5932, %v905
    %v5949 = vmul.f32 %v5933, %v905
    %v5950 = vmul.f32 %v5934, %v910
    %v5951 = vmul.f32 %v5935, %v910
    %v5952 = vmul.f32 %v5936, %v910
    %v5953 = vmul.f32 %v5937, %v910
    %v5954 = vmul.f32 %v5938, %v915
    %v5955 = vmul.f32 %v5939, %v915
    %v5956 = vmul.f32 %v5940, %v915
    %v5957 = vmul.f32 %v5941, %v915
    %v5958 = vadd.f32 %v5942, %v5946
    %v5959 = vadd.f32 %v5958, %v5950
    %v5960 = vadd.f32 %v5959, %v5954
    %v5961 = vrot.slane %v5960, 4
    %v5962 = vadd.f32 %v5960, %v5961
    %v5963 = vrot.slane %v5962, 2
    %v5964 = vadd.f32 %v5962, %v5963
    %v5965 = vrot.slane %v5964, 1
    %v5966 = vadd.f32 %v5964, %v5965
    %v5967 = vadd.f32 %v5943, %v5947
    %v5968 = vadd.f32 %v5967, %v5951
    %v5969 = vadd.f32 %v5968, %v5955
    %v5970 = vrot.slane %v5969, 4
    %v5971 = vadd.f32 %v5969, %v5970
    %v5972 = vrot.slane %v5971, 2
    %v5973 = vadd.f32 %v5971, %v5972
    %v5974 = vrot.slane %v5973, 1
    %v5975 = vadd.f32 %v5973, %v5974
    %v5976 = vadd.f32 %v5944, %v5948
    %v5977 = vadd.f32 %v5976, %v5952
    %v5978 = vadd.f32 %v5977, %v5956
    %v5979 = vrot.slane %v5978, 4
    %v5980 = vadd.f32 %v5978, %v5979
    %v5981 = vrot.slane %v5980, 2
    %v5982 = vadd.f32 %v5980, %v5981
    %v5983 = vrot.slane %v5982, 1
    %v5984 = vadd.f32 %v5982, %v5983
    %v5985 = vadd.f32 %v5945, %v5949
    %v5986 = vadd.f32 %v5985, %v5953
    %v5987 = vadd.f32 %v5986, %v5957
    %v5988 = vrot.slane %v5987, 4
    %v5989 = vadd.f32 %v5987, %v5988
    %v5990 = vrot.slane %v5989, 2
    %v5991 = vadd.f32 %v5989, %v5990
    %v5992 = vrot.slane %v5991, 1
    %v5993 = vadd.f32 %v5991, %v5992
    %v5994 = vadd.f32 %v5966, %v977
    %v5995 = vadd.f32 %v5975, %v977
    %v5996 = vadd.f32 %v5984, %v977
    %v5997 = vadd.f32 %v5993, %v977
    %v6002 = vcombine.low %v5994, %v5995
    %v6003 = vcombine.low %v5996, %v5997
    %v6005 = vunpack.c.l.s4 1966171168
    %v6006 = vunpack.c.0.s8 %v6005
    %v6007 = vlaneseq
    %v6008 = vshrl.u32 %v6007, 7
    %v6009 = vsub.s32 %v6006, %v6008
    %v6010 = vrot.slane %v6002, %v6009
    %v6012 = vunpack.c.l.s4 1966171168
    %v6013 = vunpack.c.0.s8 %v6012
    %v6014 = vlaneseq
    %v6015 = vshrl.u32 %v6014, 7
    %v6016 = vsub.s32 %v6013, %v6015
    %v6017 = vrot.slane %v6003, %v6016
    %v6018 = vcombine.low %v6010, %v6017
    %v6020 = vunpack.c.l.s4 1966171168
    %v6021 = vunpack.c.0.s8 %v6020
    %v6022 = vlaneseq
    %v6023 = vshrl.u32 %v6022, 7
    %v6024 = vsub.s32 %v6021, %v6023
    %v6025 = vrot.slane %v6018, %v6024
    %6027 = vst.msk [vmem:[#allocation3 + $0x1c] sm:$0xf] %vm1014, %v6025
    // Predicated region
    $region30: #{tpu_custom_call.1} parent=1 // pred_check
      _
    $region31: #{tpu_custom_call.1} parent=1 // pred_check_branch
      %6029 = sbr.rel (0) target = $region33
    $region32: #{tpu_custom_call.1} parent=1 // pred_region
      %s6031 = ssub.s32 512, 512
      %6032 = vsyncadd [#allocation4], %s6031
      %s6034 = sshll.u32 [#allocation3], 4
      %s6035 = int_to_ptr.vmem [resolvable:$true] %s6034
      %6037 = dma.vmem_to_hbm [thread:$0]  %s6035, 512, %s7, [#allocation4]
    $region33: #{tpu_custom_call.1} parent=1 // pred_fallthru
      _
    // Predicated region
    $region34: #{tpu_custom_call.1} parent=1 // pred_check
      _
    $region35: #{tpu_custom_call.1} parent=1 // pred_check_branch
      %6039 = sbr.rel (0) target = $region37
    $region36: #{tpu_custom_call.1} parent=1 // pred_region
      %6040 = dma.done [#allocation4], 512
    $region37: #{tpu_custom_call.1} parent=1 // pred_fallthru
      _
    %6041 = vsyncpa [#allocation4], 1

</llo_original>
